<compile_context>
chip_gen: v7x
topology: tpu7x:2x2x1
jax: 0.10.0
libtpu: 0.0.40
codegen_flags: <defaults>
</compile_context>

<pallas_src>
import jax
import jax.numpy as jnp
from jax.experimental import pallas as pl
from jax.experimental.pallas import tpu as pltpu


_LANE = 128


def _rup(n, m=_LANE):
    return m * pl.cdiv(n, m)


def _elu(x):
    # ELU(alpha=1): x if x > 0 else exp(x) - 1.  Forward-only, so the exp of
    # the discarded positive branch may overflow to inf -- the select throws
    # it away.  (Re-add a jnp.minimum(x, 0) clamp if differentiating through.)
    return jnp.where(x > 0, x, jnp.exp(x) - 1.0)


def mlp_encode_kernel(
    x_ref,
    wp1_ref, bp1_ref,
    wp2_ref, bp2_ref,
    wp3_ref, bp3_ref,
    wa1x_ref, wa1l_ref, ba1_ref,
    wa2_ref, ba2_ref,
    wa3_ref, ba3_ref,
    out_ref,
):
    bf16 = jnp.bfloat16
    f32 = jnp.float32
    ep = bp1_ref.dtype  # epilogue compute dtype: bf16 on v6e/v7x, f32 on v5e

    def layer(a, w_ref, b_ref, act=True):
        # bf16 x bf16 MXU matmul, f32 accumulation; bias add + ELU in `ep`.
        y = jnp.dot(a.astype(bf16), w_ref[...], preferred_element_type=f32)
        y = y.astype(ep) + b_ref[...]
        return _elu(y) if act else y

    # Single f32 HBM read of the full observation; cast in-register.
    x = x_ref[...].astype(bf16)                       # (TB, base+priv)

    # ---- prop_encoder: priv -> 256 -> 128 -> 8 (padded to 128), ELU everywhere.
    # The priv slice is selected by zero rows baked into wp1.
    h = layer(x, wp1_ref, bp1_ref)
    h = layer(h, wp2_ref, bp2_ref)
    lat = layer(h, wp3_ref, bp3_ref)                  # (TB, 128); cols >= 8 are 0

    # ---- action_mlp on concat([obs, prop_latent]); concat + obs slice folded
    # into a split matmul (zero rows over priv baked into wa1x).
    a = (jnp.dot(x, wa1x_ref[...], preferred_element_type=f32)
         + jnp.dot(lat.astype(bf16), wa1l_ref[...], preferred_element_type=f32))
    a = _elu(a.astype(ep) + ba1_ref[...])
    a = layer(a, wa2_ref, ba2_ref)
    out = layer(a, wa3_ref, ba3_ref, act=False)       # (TB, out_pad)
    # TODO(synk): output_activation_fn is None in this configuration; apply here if set.
    out_ref[...] = out.astype(out_ref.dtype)          # bf16 lane-dense writeback


_WEIGHT_NAMES = ["wp1", "bp1", "wp2", "bp2", "wp3", "bp3",
                 "wa1x", "wa1_lat", "ba1", "wa2", "ba2", "wa3", "ba3"]


def mlp_encode_forward(x, kparams, meta, output_size, *, tb=None):
    """Run the fused kernel. kparams/meta come from pack_params."""
    batch, x_dim = x.shape
    assert x_dim == meta["x_dim"], "x width must be base_obs_dim + priv_dim"
    out_p = meta["out_pad"]

    if tb is None:
        # At least 2 grid steps (v7x megacore sharding), otherwise the biggest
        # tile up to 2048 rows (mem-bound tile sweep: 512+ ~ 85% of roofline).
        tb = min(2048, _rup(pl.cdiv(batch, 2), 8))
    tb = max(8, 8 * (tb // 8))

    padded_batch = tb * pl.cdiv(batch, tb)
    if padded_batch != batch:
        x = jnp.pad(x, ((0, padded_batch - batch), (0, 0)))

    weights = [kparams[n] for n in _WEIGHT_NAMES]

    grid = (padded_batch // tb,)
    in_specs = (
        [pl.BlockSpec((tb, x_dim), lambda i: (i, 0))]
        # Weights/biases: full-array blocks with constant index_map -> stay
        # VMEM-resident across the whole grid (never re-DMA'd).
        + [pl.BlockSpec(w.shape, lambda i: (0, 0)) for w in weights]
    )
    out_specs = pl.BlockSpec((tb, out_p), lambda i: (i, 0))

    # Advisory cost estimate from true (unpadded) per-row work.
    flops = meta["flops_per_row"] * batch
    trans = meta["transcendentals_per_row"] * batch
    bytes_accessed = (x.size * x.dtype.itemsize
                      + sum(w.size * w.dtype.itemsize for w in weights)
                      + padded_batch * out_p * 2)

    out = pl.pallas_call(
        mlp_encode_kernel,
        out_shape=jax.ShapeDtypeStruct((padded_batch, out_p), jnp.bfloat16),
        grid=grid,
        in_specs=in_specs,
        out_specs=out_specs,
        compiler_params=pltpu.CompilerParams(
            dimension_semantics=("parallel",)),
        cost_estimate=pl.CostEstimate(
            flops=int(flops),
            transcendentals=int(trans),
            bytes_accessed=int(bytes_accessed)),
    )(x, *weights)

    # bf16 writeback; upcast + slice the real output columns in the wrapper.
    return out[:batch, :output_size].astype(jnp.float32)


def epilogue_dtype_for_device():
    """bf16 bias-add/ELU epilogue on v6e/v7x (bf16 VPU/EUP); f32 elsewhere."""
    try:
        kind = jax.devices()[0].device_kind.lower()
    except Exception:
        return jnp.float32
    if any(tag in kind for tag in ("v6", "v7", "7x")):
        return jnp.bfloat16
    return jnp.float32


def make_params(key, base_obs_dim, priv_dim, shape, output_size):
    """Deterministic synthetic f32 parameters (shapes match the PyTorch module,
    with Linear weights stored transposed as (in, out); the action_mlp first
    layer's weight is split by input rows into wa1_obs / wa1_lat)."""
    prop_latent_dim = 8
    dims = [
        ("wp1", (priv_dim, 256)), ("bp1", (1, 256)),
        ("wp2", (256, 128)),      ("bp2", (1, 128)),
        ("wp3", (128, prop_latent_dim)), ("bp3", (1, prop_latent_dim)),
        ("wa1_obs", (base_obs_dim, shape[0])),
        ("wa1_lat", (prop_latent_dim, shape[0])),
        ("ba1", (1, shape[0])),
        ("wa2", (shape[0], shape[1])), ("ba2", (1, shape[1])),
        ("wa3", (shape[1], output_size)), ("ba3", (1, output_size)),
    ]
    params = {}
    keys = jax.random.split(key, len(dims))
    for k, (name, shp) in zip(keys, dims):
        params[name] = jax.random.normal(k, shp, jnp.float32) * 0.1
    return params


def pack_params(params, epilogue_dtype=jnp.float32):
    """Fold the obs/priv split + concat into zero-row-padded first-layer
    weights, zero-pad lane-narrow dims to multiples of 128, cast matmul
    weights to bf16 and biases to the epilogue dtype."""
    bf16 = jnp.bfloat16
    ep = epilogue_dtype

    base = params["wa1_obs"].shape[0]
    priv = params["wp1"].shape[0]
    x_dim = base + priv
    lat = params["wp3"].shape[1]
    h0 = params["wa2"].shape[0]
    h1 = params["wa2"].shape[1]
    out = params["wa3"].shape[1]
    lat_p, h0_p, h1_p, out_p = _rup(lat), _rup(h0), _rup(h1), _rup(out)

    def pad2(a, rows, cols):
        return jnp.pad(a, ((0, rows - a.shape[0]), (0, cols - a.shape[1])))

    # Zero rows over the obs columns -> x @ wp1_x == priv @ wp1.
    wp1_x = jnp.zeros((x_dim, 256), jnp.float32).at[base:, :].set(params["wp1"])
    # Zero rows over the priv columns -> x @ wa1_x == obs @ wa1_obs.
    wa1_x = jnp.zeros((x_dim, h0_p), jnp.float32).at[:base, :h0].set(params["wa1_obs"])

    p = {
        "wp1": wp1_x.astype(bf16),
        "bp1": params["bp1"].astype(ep),
        "wp2": params["wp2"].astype(bf16),
        "bp2": params["bp2"].astype(ep),
        "wp3": pad2(params["wp3"], params["wp3"].shape[0], lat_p).astype(bf16),
        "bp3": pad2(params["bp3"], 1, lat_p).astype(ep),
        "wa1x": wa1_x.astype(bf16),
        "wa1_lat": pad2(params["wa1_lat"], lat_p, h0_p).astype(bf16),
        "ba1": pad2(params["ba1"], 1, h0_p).astype(ep),
        "wa2": pad2(params["wa2"], h0_p, h1_p).astype(bf16),
        "ba2": pad2(params["ba2"], 1, h1_p).astype(ep),
        "wa3": pad2(params["wa3"], h1_p, out_p).astype(bf16),
        "ba3": pad2(params["ba3"], 1, out_p).astype(ep),
    }
    meta = {
        "x_dim": x_dim,
        "out_pad": out_p,
        # True (unpadded) per-row work for the advisory cost estimate.
        "flops_per_row": 2 * (priv * 256 + 256 * 128 + 128 * lat
                              + base * h0 + lat * h0 + h0 * h1 + h1 * out),
        "transcendentals_per_row": 256 + 128 + lat + h0 + h1,
    }
    return p, meta


def reference_forward(x, params, base_obs_dim, epilogue_dtype=jnp.float32):
    """Pure-JAX reference replicating the PyTorch semantics (geom_dim=0) with
    the same bf16-operand / f32-accumulation matmul policy and the same
    epilogue dtype as the kernel."""
    bf16 = jnp.bfloat16
    ep = epilogue_dtype

    def layer(a, w, b, act=True):
        y = jnp.dot(a.astype(bf16), w.astype(bf16),
                    preferred_element_type=jnp.float32)
        y = y.astype(ep) + b.astype(ep)
        return _elu(y) if act else y

    obs = x[:, :base_obs_dim]
    priv = x[:, base_obs_dim:]
    h = layer(priv, params["wp1"], params["bp1"])
    h = layer(h, params["wp2"], params["bp2"])
    lat = layer(h, params["wp3"], params["bp3"])
    a1 = (jnp.dot(obs.astype(bf16), params["wa1_obs"].astype(bf16),
                  preferred_element_type=jnp.float32)
          + jnp.dot(lat.astype(bf16), params["wa1_lat"].astype(bf16),
                    preferred_element_type=jnp.float32))
    a = _elu(a1.astype(ep) + params["ba1"].astype(ep))
    a = layer(a, params["wa2"], params["ba2"])
    out = layer(a, params["wa3"], params["ba3"], act=False)
    return out.astype(jnp.float32)


if __name__ == "__main__":
    # Small synthetic configuration consistent with the module's constructor
    # (geom_dim=0, n_futures=0, ELU activation, no output activation).
    base_obs_dim = 32
    priv_dim = 64
    hidden_shape = [64, 32]   # action_mlp hidden sizes ("shape" arg)
    output_size = 12
    batch = 1000              # not a tile multiple -> exercises batch padding;
                              # auto tb -> 504-row tiles, 2 "parallel" grid steps

    key = jax.random.PRNGKey(0)
    kx, kp = jax.random.split(key)
    x = jax.random.normal(kx, (batch, base_obs_dim + priv_dim), jnp.float32)
    params = make_params(kp, base_obs_dim, priv_dim, hidden_shape, output_size)

    ep_dtype = epilogue_dtype_for_device()
    kparams, meta = pack_params(params, epilogue_dtype=ep_dtype)

    out = mlp_encode_forward(x, kparams, meta, output_size)
    out = jax.block_until_ready(out)

    ref = reference_forward(x, params, base_obs_dim, epilogue_dtype=ep_dtype)
    assert out.shape == (batch, output_size)
    assert jnp.allclose(out, ref, atol=2e-2, rtol=2e-2), "mismatch vs reference"
    print("KERNEL_OK")
</pallas_src>

<mosaic_0001>
module attributes {stable_mosaic.version = 11 : i64} {
  func.func @mlp_encode_kernel(%arg0: i32, %arg1: memref<504x96xf32, #tpu.memory_space<vmem>>, %arg2: memref<96x256xbf16, #tpu.memory_space<vmem>>, %arg3: memref<1x256xf32, #tpu.memory_space<vmem>>, %arg4: memref<256x128xbf16, #tpu.memory_space<vmem>>, %arg5: memref<1x128xf32, #tpu.memory_space<vmem>>, %arg6: memref<128x128xbf16, #tpu.memory_space<vmem>>, %arg7: memref<1x128xf32, #tpu.memory_space<vmem>>, %arg8: memref<96x128xbf16, #tpu.memory_space<vmem>>, %arg9: memref<128x128xbf16, #tpu.memory_space<vmem>>, %arg10: memref<1x128xf32, #tpu.memory_space<vmem>>, %arg11: memref<128x128xbf16, #tpu.memory_space<vmem>>, %arg12: memref<1x128xf32, #tpu.memory_space<vmem>>, %arg13: memref<128x128xbf16, #tpu.memory_space<vmem>>, %arg14: memref<1x128xf32, #tpu.memory_space<vmem>>, %arg15: memref<504x128xbf16, #tpu.memory_space<vmem>>) attributes {dimension_semantics = [#tpu.dimension_semantics<parallel>], iteration_bounds = array<i64: 2>, scalar_prefetch = 0 : i64, scratch_operands = 0 : i64, tpu.core_type = #tpu.core_type<tc>, window_params = [{transform_indices = @transform_0, window_bounds = array<i64: 504, 96>}, {pipeline_mode = #tpu.pipeline_mode<synchronous>, transform_indices = @transform_1, window_bounds = array<i64: 96, 256>}, {pipeline_mode = #tpu.pipeline_mode<synchronous>, transform_indices = @transform_2, window_bounds = array<i64: 1, 256>}, {pipeline_mode = #tpu.pipeline_mode<synchronous>, transform_indices = @transform_3, window_bounds = array<i64: 256, 128>}, {pipeline_mode = #tpu.pipeline_mode<synchronous>, transform_indices = @transform_4, window_bounds = array<i64: 1, 128>}, {pipeline_mode = #tpu.pipeline_mode<synchronous>, transform_indices = @transform_5, window_bounds = array<i64: 128, 128>}, {pipeline_mode = #tpu.pipeline_mode<synchronous>, transform_indices = @transform_6, window_bounds = array<i64: 1, 128>}, {pipeline_mode = #tpu.pipeline_mode<synchronous>, transform_indices = @transform_7, window_bounds = array<i64: 96, 128>}, {pipeline_mode = #tpu.pipeline_mode<synchronous>, transform_indices = @transform_8, window_bounds = array<i64: 128, 128>}, {pipeline_mode = #tpu.pipeline_mode<synchronous>, transform_indices = @transform_9, window_bounds = array<i64: 1, 128>}, {pipeline_mode = #tpu.pipeline_mode<synchronous>, transform_indices = @transform_10, window_bounds = array<i64: 128, 128>}, {pipeline_mode = #tpu.pipeline_mode<synchronous>, transform_indices = @transform_11, window_bounds = array<i64: 1, 128>}, {pipeline_mode = #tpu.pipeline_mode<synchronous>, transform_indices = @transform_12, window_bounds = array<i64: 128, 128>}, {pipeline_mode = #tpu.pipeline_mode<synchronous>, transform_indices = @transform_13, window_bounds = array<i64: 1, 128>}, {transform_indices = @transform_14, window_bounds = array<i64: 504, 128>}]} {
    %c0 = arith.constant 0 : index
    %c0_0 = arith.constant 0 : index
    %0 = vector.load %arg1[%c0, %c0_0] : memref<504x96xf32, #tpu.memory_space<vmem>>, vector<504x96xf32>
    %1 = arith.truncf %0 : vector<504x96xf32> to vector<504x96xbf16>
    %c0_1 = arith.constant 0 : index
    %c0_2 = arith.constant 0 : index
    %2 = vector.load %arg2[%c0_1, %c0_2] : memref<96x256xbf16, #tpu.memory_space<vmem>>, vector<96x256xbf16>
    %cst = arith.constant dense<0.000000e+00> : vector<504x256xf32>
    %3 = tpu.matmul %1, %2, %cst {dimension_numbers = #tpu.dot_dimension_numbers<[1], [0], [0], [1], [0, 0, 1, 1], [], []>} : vector<504x96xbf16>, vector<96x256xbf16>, vector<504x256xf32> -> vector<504x256xf32>
    %c0_3 = arith.constant 0 : index
    %c0_4 = arith.constant 0 : index
    %4 = vector.load %arg3[%c0_3, %c0_4] : memref<1x256xf32, #tpu.memory_space<vmem>>, vector<1x256xf32>
    %5 = vector.broadcast %4 : vector<1x256xf32> to vector<504x256xf32>
    %6 = arith.addf %3, %5 : vector<504x256xf32>
    %cst_5 = arith.constant 0.000000e+00 : f32
    %7 = vector.broadcast %cst_5 : f32 to vector<504x256xf32>
    %8 = arith.cmpf ogt, %6, %7 : vector<504x256xf32>
    %9 = math.exp %6 : vector<504x256xf32>
    %cst_6 = arith.constant 1.000000e+00 : f32
    %10 = vector.broadcast %cst_6 : f32 to vector<504x256xf32>
    %11 = arith.subf %9, %10 : vector<504x256xf32>
    %12 = arith.select %8, %6, %11 : vector<504x256xi1>, vector<504x256xf32>
    %13 = arith.truncf %12 : vector<504x256xf32> to vector<504x256xbf16>
    %c0_7 = arith.constant 0 : index
    %c0_8 = arith.constant 0 : index
    %14 = vector.load %arg4[%c0_7, %c0_8] : memref<256x128xbf16, #tpu.memory_space<vmem>>, vector<256x128xbf16>
    %cst_9 = arith.constant dense<0.000000e+00> : vector<504x128xf32>
    %15 = tpu.matmul %13, %14, %cst_9 {dimension_numbers = #tpu.dot_dimension_numbers<[1], [0], [0], [1], [0, 0, 1, 1], [], []>} : vector<504x256xbf16>, vector<256x128xbf16>, vector<504x128xf32> -> vector<504x128xf32>
    %c0_10 = arith.constant 0 : index
    %c0_11 = arith.constant 0 : index
    %16 = vector.load %arg5[%c0_10, %c0_11] : memref<1x128xf32, #tpu.memory_space<vmem>>, vector<1x128xf32>
    %17 = vector.broadcast %16 : vector<1x128xf32> to vector<504x128xf32>
    %18 = arith.addf %15, %17 : vector<504x128xf32>
    %cst_12 = arith.constant 0.000000e+00 : f32
    %19 = vector.broadcast %cst_12 : f32 to vector<504x128xf32>
    %20 = arith.cmpf ogt, %18, %19 : vector<504x128xf32>
    %21 = math.exp %18 : vector<504x128xf32>
    %cst_13 = arith.constant 1.000000e+00 : f32
    %22 = vector.broadcast %cst_13 : f32 to vector<504x128xf32>
    %23 = arith.subf %21, %22 : vector<504x128xf32>
    %24 = arith.select %20, %18, %23 : vector<504x128xi1>, vector<504x128xf32>
    %25 = arith.truncf %24 : vector<504x128xf32> to vector<504x128xbf16>
    %c0_14 = arith.constant 0 : index
    %c0_15 = arith.constant 0 : index
    %26 = vector.load %arg6[%c0_14, %c0_15] : memref<128x128xbf16, #tpu.memory_space<vmem>>, vector<128x128xbf16>
    %cst_16 = arith.constant dense<0.000000e+00> : vector<504x128xf32>
    %27 = tpu.matmul %25, %26, %cst_16 {dimension_numbers = #tpu.dot_dimension_numbers<[1], [0], [0], [1], [0, 0, 1, 1], [], []>} : vector<504x128xbf16>, vector<128x128xbf16>, vector<504x128xf32> -> vector<504x128xf32>
    %c0_17 = arith.constant 0 : index
    %c0_18 = arith.constant 0 : index
    %28 = vector.load %arg7[%c0_17, %c0_18] : memref<1x128xf32, #tpu.memory_space<vmem>>, vector<1x128xf32>
    %29 = vector.broadcast %28 : vector<1x128xf32> to vector<504x128xf32>
    %30 = arith.addf %27, %29 : vector<504x128xf32>
    %cst_19 = arith.constant 0.000000e+00 : f32
    %31 = vector.broadcast %cst_19 : f32 to vector<504x128xf32>
    %32 = arith.cmpf ogt, %30, %31 : vector<504x128xf32>
    %33 = math.exp %30 : vector<504x128xf32>
    %cst_20 = arith.constant 1.000000e+00 : f32
    %34 = vector.broadcast %cst_20 : f32 to vector<504x128xf32>
    %35 = arith.subf %33, %34 : vector<504x128xf32>
    %36 = arith.select %32, %30, %35 : vector<504x128xi1>, vector<504x128xf32>
    %c0_21 = arith.constant 0 : index
    %c0_22 = arith.constant 0 : index
    %37 = vector.load %arg8[%c0_21, %c0_22] : memref<96x128xbf16, #tpu.memory_space<vmem>>, vector<96x128xbf16>
    %cst_23 = arith.constant dense<0.000000e+00> : vector<504x128xf32>
    %38 = tpu.matmul %1, %37, %cst_23 {dimension_numbers = #tpu.dot_dimension_numbers<[1], [0], [0], [1], [0, 0, 1, 1], [], []>} : vector<504x96xbf16>, vector<96x128xbf16>, vector<504x128xf32> -> vector<504x128xf32>
    %39 = arith.truncf %36 : vector<504x128xf32> to vector<504x128xbf16>
    %c0_24 = arith.constant 0 : index
    %c0_25 = arith.constant 0 : index
    %40 = vector.load %arg9[%c0_24, %c0_25] : memref<128x128xbf16, #tpu.memory_space<vmem>>, vector<128x128xbf16>
    %cst_26 = arith.constant dense<0.000000e+00> : vector<504x128xf32>
    %41 = tpu.matmul %39, %40, %cst_26 {dimension_numbers = #tpu.dot_dimension_numbers<[1], [0], [0], [1], [0, 0, 1, 1], [], []>} : vector<504x128xbf16>, vector<128x128xbf16>, vector<504x128xf32> -> vector<504x128xf32>
    %42 = arith.addf %38, %41 : vector<504x128xf32>
    %c0_27 = arith.constant 0 : index
    %c0_28 = arith.constant 0 : index
    %43 = vector.load %arg10[%c0_27, %c0_28] : memref<1x128xf32, #tpu.memory_space<vmem>>, vector<1x128xf32>
    %44 = vector.broadcast %43 : vector<1x128xf32> to vector<504x128xf32>
    %45 = arith.addf %42, %44 : vector<504x128xf32>
    %cst_29 = arith.constant 0.000000e+00 : f32
    %46 = vector.broadcast %cst_29 : f32 to vector<504x128xf32>
    %47 = arith.cmpf ogt, %45, %46 : vector<504x128xf32>
    %48 = math.exp %45 : vector<504x128xf32>
    %cst_30 = arith.constant 1.000000e+00 : f32
    %49 = vector.broadcast %cst_30 : f32 to vector<504x128xf32>
    %50 = arith.subf %48, %49 : vector<504x128xf32>
    %51 = arith.select %47, %45, %50 : vector<504x128xi1>, vector<504x128xf32>
    %52 = arith.truncf %51 : vector<504x128xf32> to vector<504x128xbf16>
    %c0_31 = arith.constant 0 : index
    %c0_32 = arith.constant 0 : index
    %53 = vector.load %arg11[%c0_31, %c0_32] : memref<128x128xbf16, #tpu.memory_space<vmem>>, vector<128x128xbf16>
    %cst_33 = arith.constant dense<0.000000e+00> : vector<504x128xf32>
    %54 = tpu.matmul %52, %53, %cst_33 {dimension_numbers = #tpu.dot_dimension_numbers<[1], [0], [0], [1], [0, 0, 1, 1], [], []>} : vector<504x128xbf16>, vector<128x128xbf16>, vector<504x128xf32> -> vector<504x128xf32>
    %c0_34 = arith.constant 0 : index
    %c0_35 = arith.constant 0 : index
    %55 = vector.load %arg12[%c0_34, %c0_35] : memref<1x128xf32, #tpu.memory_space<vmem>>, vector<1x128xf32>
    %56 = vector.broadcast %55 : vector<1x128xf32> to vector<504x128xf32>
    %57 = arith.addf %54, %56 : vector<504x128xf32>
    %cst_36 = arith.constant 0.000000e+00 : f32
    %58 = vector.broadcast %cst_36 : f32 to vector<504x128xf32>
    %59 = arith.cmpf ogt, %57, %58 : vector<504x128xf32>
    %60 = math.exp %57 : vector<504x128xf32>
    %cst_37 = arith.constant 1.000000e+00 : f32
    %61 = vector.broadcast %cst_37 : f32 to vector<504x128xf32>
    %62 = arith.subf %60, %61 : vector<504x128xf32>
    %63 = arith.select %59, %57, %62 : vector<504x128xi1>, vector<504x128xf32>
    %64 = arith.truncf %63 : vector<504x128xf32> to vector<504x128xbf16>
    %c0_38 = arith.constant 0 : index
    %c0_39 = arith.constant 0 : index
    %65 = vector.load %arg13[%c0_38, %c0_39] : memref<128x128xbf16, #tpu.memory_space<vmem>>, vector<128x128xbf16>
    %cst_40 = arith.constant dense<0.000000e+00> : vector<504x128xf32>
    %66 = tpu.matmul %64, %65, %cst_40 {dimension_numbers = #tpu.dot_dimension_numbers<[1], [0], [0], [1], [0, 0, 1, 1], [], []>} : vector<504x128xbf16>, vector<128x128xbf16>, vector<504x128xf32> -> vector<504x128xf32>
    %c0_41 = arith.constant 0 : index
    %c0_42 = arith.constant 0 : index
    %67 = vector.load %arg14[%c0_41, %c0_42] : memref<1x128xf32, #tpu.memory_space<vmem>>, vector<1x128xf32>
    %68 = vector.broadcast %67 : vector<1x128xf32> to vector<504x128xf32>
    %69 = arith.addf %66, %68 : vector<504x128xf32>
    %70 = arith.truncf %69 : vector<504x128xf32> to vector<504x128xbf16>
    %c0_43 = arith.constant 0 : index
    %c0_44 = arith.constant 0 : index
    %71 = vector.load %arg15[%c0_43, %c0_44] : memref<504x128xbf16, #tpu.memory_space<vmem>>, vector<504x128xbf16>
    tpu.vector_store %arg15[%c0_43, %c0_44], %70 {strides = array<i32>} : memref<504x128xbf16, #tpu.memory_space<vmem>>, vector<504x128xbf16>,
    return
  }
  func.func @transform_0(%arg0: i32) -> (i32, i32) {
    %c0_i32 = arith.constant 0 : i32
    %c0_i32_0 = arith.constant 0 : i32
    return %arg0, %c0_i32 : i32, i32
  }
  func.func @transform_1(%arg0: i32) -> (i32, i32) {
    %c0_i32 = arith.constant 0 : i32
    %c0_i32_0 = arith.constant 0 : i32
    %c0_i32_1 = arith.constant 0 : i32
    return %c0_i32, %c0_i32_0 : i32, i32
  }
  func.func @transform_2(%arg0: i32) -> (i32, i32) {
    %c0_i32 = arith.constant 0 : i32
    %c0_i32_0 = arith.constant 0 : i32
    %c0_i32_1 = arith.constant 0 : i32
    return %c0_i32, %c0_i32_0 : i32, i32
  }
  func.func @transform_3(%arg0: i32) -> (i32, i32) {
    %c0_i32 = arith.constant 0 : i32
    %c0_i32_0 = arith.constant 0 : i32
    %c0_i32_1 = arith.constant 0 : i32
    return %c0_i32, %c0_i32_0 : i32, i32
  }
  func.func @transform_4(%arg0: i32) -> (i32, i32) {
    %c0_i32 = arith.constant 0 : i32
    %c0_i32_0 = arith.constant 0 : i32
    %c0_i32_1 = arith.constant 0 : i32
    return %c0_i32, %c0_i32_0 : i32, i32
  }
  func.func @transform_5(%arg0: i32) -> (i32, i32) {
    %c0_i32 = arith.constant 0 : i32
    %c0_i32_0 = arith.constant 0 : i32
    %c0_i32_1 = arith.constant 0 : i32
    return %c0_i32, %c0_i32_0 : i32, i32
  }
  func.func @transform_6(%arg0: i32) -> (i32, i32) {
    %c0_i32 = arith.constant 0 : i32
    %c0_i32_0 = arith.constant 0 : i32
    %c0_i32_1 = arith.constant 0 : i32
    return %c0_i32, %c0_i32_0 : i32, i32
  }
  func.func @transform_7(%arg0: i32) -> (i32, i32) {
    %c0_i32 = arith.constant 0 : i32
    %c0_i32_0 = arith.constant 0 : i32
    %c0_i32_1 = arith.constant 0 : i32
    return %c0_i32, %c0_i32_0 : i32, i32
  }
  func.func @transform_8(%arg0: i32) -> (i32, i32) {
    %c0_i32 = arith.constant 0 : i32
    %c0_i32_0 = arith.constant 0 : i32
    %c0_i32_1 = arith.constant 0 : i32
    return %c0_i32, %c0_i32_0 : i32, i32
  }
  func.func @transform_9(%arg0: i32) -> (i32, i32) {
    %c0_i32 = arith.constant 0 : i32
    %c0_i32_0 = arith.constant 0 : i32
    %c0_i32_1 = arith.constant 0 : i32
    return %c0_i32, %c0_i32_0 : i32, i32
  }
  func.func @transform_10(%arg0: i32) -> (i32, i32) {
    %c0_i32 = arith.constant 0 : i32
    %c0_i32_0 = arith.constant 0 : i32
    %c0_i32_1 = arith.constant 0 : i32
    return %c0_i32, %c0_i32_0 : i32, i32
  }
  func.func @transform_11(%arg0: i32) -> (i32, i32) {
    %c0_i32 = arith.constant 0 : i32
    %c0_i32_0 = arith.constant 0 : i32
    %c0_i32_1 = arith.constant 0 : i32
    return %c0_i32, %c0_i32_0 : i32, i32
  }
  func.func @transform_12(%arg0: i32) -> (i32, i32) {
    %c0_i32 = arith.constant 0 : i32
    %c0_i32_0 = arith.constant 0 : i32
    %c0_i32_1 = arith.constant 0 : i32
    return %c0_i32, %c0_i32_0 : i32, i32
  }
  func.func @transform_13(%arg0: i32) -> (i32, i32) {
    %c0_i32 = arith.constant 0 : i32
    %c0_i32_0 = arith.constant 0 : i32
    %c0_i32_1 = arith.constant 0 : i32
    return %c0_i32, %c0_i32_0 : i32, i32
  }
  func.func @transform_14(%arg0: i32) -> (i32, i32) {
    %c0_i32 = arith.constant 0 : i32
    %c0_i32_0 = arith.constant 0 : i32
    return %arg0, %c0_i32 : i32, i32
  }
}

</mosaic_0001>

<llo_original>
// kernel: tpu_custom_call.1
$region0: #{tpu_custom_call.1}
  #allocation0 [shape = 'u32[]', space=smem, size = 0x4, offset = 0x4, fixed_abs, tag = 'smem constant byte address 0x4 - core index']
  #allocation1 [shape = 'u32[144,128]{1,0:T(1,128)}', space=vmem, size = 0x12000, scoped, tag = 'internal scratch']
  %s0 = inlined_call_operand.vmem [shape: f32[1008,96], index: 0, kind: input, shape index: {}]
  %s1 = inlined_call_operand.vmem [shape: bf16[96,256], index: 1, kind: input, shape index: {}]
  %s2 = inlined_call_operand.vmem [shape: f32[1,256], index: 2, kind: input, shape index: {}]
  %s3 = inlined_call_operand.vmem [shape: bf16[256,128], index: 3, kind: input, shape index: {}]
  %s4 = inlined_call_operand.vmem [shape: f32[1,128], index: 4, kind: input, shape index: {}]
  %s5 = inlined_call_operand.vmem [shape: bf16[128,128], index: 5, kind: input, shape index: {}]
  %s6 = inlined_call_operand.vmem [shape: f32[1,128], index: 6, kind: input, shape index: {}]
  %s7 = inlined_call_operand.vmem [shape: bf16[96,128], index: 7, kind: input, shape index: {}]
  %s8 = inlined_call_operand.vmem [shape: bf16[128,128], index: 8, kind: input, shape index: {}]
  %s9 = inlined_call_operand.vmem [shape: f32[1,128], index: 9, kind: input, shape index: {}]
  %s10 = inlined_call_operand.vmem [shape: bf16[128,128], index: 10, kind: input, shape index: {}]
  %s11 = inlined_call_operand.vmem [shape: f32[1,128], index: 11, kind: input, shape index: {}]
  %s12 = inlined_call_operand.vmem [shape: bf16[128,128], index: 12, kind: input, shape index: {}]
  %s13 = inlined_call_operand.vmem [shape: f32[1,128], index: 13, kind: input, shape index: {}]
  %s14 = inlined_call_operand.hbm [shape: bf16[1008,128], index: 14, kind: output, shape index: {}]
  %s15 = sld [smem:[#allocation0]]
  $region89: #{tpu_custom_call.1} parent=0
    _
  %s17 = ssub.s32 1, %s15
  %s18 = scalar_select 0, %s17, %s15
  $region1: #{tpu_custom_call.1} parent=0
    #allocation2 [shape = 'u8[258048]{0}', space=vmem, size = 0x3f000, scoped, tag = 'output window, operand 0']
    #allocation3 [shape = 's32[2]{0}', space=sflag, size = 0x8, scoped, tag = 'scoped memory for tpu_custom_call.1']
    %19 = vsyncpa [#allocation3], 0
    %s20 = scalar_lea.sflag [#allocation3], 1
    %21 = vsyncpa %s20, 0
    loop: start=0, step=1, limit=4
    $region2: #{tpu_custom_call.1} parent=1 // loop_pre_header
      _
    $region3: #{tpu_custom_call.1} parent=1 // loop_header
      %s23 = sphi 0, %s27
      %p24 = scmp.ge.s32.totalorder %s23, 4
      %s33 = sphi 0, %s35
      %s36 = sphi 0, %s33
      %s37 = sphi 0, %s36
      %s53 = sphi 0, %s37
      %s57 = sphi 0, %s57
      %s59 = sphi 0, %s57
      %s60 = sphi 0, %s59
      %s74 = sphi 0, %s60
      %s78 = sphi 0, %s78
      %s80 = sphi 0, %s78
      %s81 = sphi 0, %s80
      %s95 = sphi 0, %s81
      %s99 = sphi 0, %s99
      %s101 = sphi 0, %s99
      %s102 = sphi 0, %s101
      %s116 = sphi 0, %s102
      %s120 = sphi 0, %s120
      %s122 = sphi 0, %s120
      %s123 = sphi 0, %s122
      %s137 = sphi 0, %s123
      %s141 = sphi 0, %s141
      %s143 = sphi 0, %s141
      %s144 = sphi 0, %s143
      %s158 = sphi 0, %s144
      %s162 = sphi 0, %s162
      %s164 = sphi 0, %s162
      %s165 = sphi 0, %s164
      %s179 = sphi 0, %s165
      %s183 = sphi 0, %s183
      %s185 = sphi 0, %s183
      %s186 = sphi 0, %s185
      %s200 = sphi 0, %s186
      %s204 = sphi 0, %s204
      %s206 = sphi 0, %s204
      %s207 = sphi 0, %s206
      %s221 = sphi 0, %s207
      %s225 = sphi 0, %s225
      %s227 = sphi 0, %s225
      %s228 = sphi 0, %s227
      %s242 = sphi 0, %s228
      %s246 = sphi 0, %s246
      %s248 = sphi 0, %s246
      %s249 = sphi 0, %s248
      %s263 = sphi 0, %s249
      %s267 = sphi 0, %s267
      %s269 = sphi 0, %s267
      %s270 = sphi 0, %s269
      %s284 = sphi 0, %s270
      %s288 = sphi 0, %s288
      %s290 = sphi 0, %s288
      %s291 = sphi 0, %s290
      %s305 = sphi 0, %s291
      %s309 = sphi 0, %s309
      %s311 = sphi 0, %s309
      %s312 = sphi 0, %s311
      %s326 = sphi 0, %s312
      %s332 = sphi 0, %s334
      %s335 = sphi 0, %s332
      %s336 = sphi 0, %s335
      %s352 = sphi 0, %s336
    $region4: #{tpu_custom_call.1} parent=1 // loop_header_branch
      %26 = sbr.rel (%p24) target = $region8
    $region5: #{tpu_custom_call.1} parent=1 // loop_body
      %s28 = ssub.s32 %s23, 1
      %s29 = ssub.s32 %s23, 2
      %s30 = sadd.s32 %s23, 1
      %s31 = ssub.s32 %s23, %s30
      %p32 = scmp.eq.s32.totalorder %s31, 0
      %s34 = sadd.s32 %s33, 1
      %s35 = scalar_select %p32, %s33, %s34
      %p38 = pneg %p32
      %p39 = scmp.eq.s32.totalorder %s23, 1
      %p40 = por %p38, %p39
      %p41 = scmp.ne.s32.totalorder %s33, %s36
      %p42 = scmp.eq.s32.totalorder %s23, 0
      %p43 = por %p41, %p42
      %p44 = scmp.ne.s32.totalorder %s33, %s36
      %p45 = scmp.eq.s32.totalorder %s28, 1
      %p46 = por %p44, %p45
      %p47 = scmp.ne.s32.totalorder %s36, %s37
      %p48 = scmp.eq.s32.totalorder %s28, 0
      %p49 = por %p47, %p48
      %p50 = scmp.ne.s32.totalorder %s36, %s37
      %p51 = scmp.eq.s32.totalorder %s29, 1
      %p52 = por %p50, %p51
      %p54 = scmp.ne.s32.totalorder %s37, %s53
      %p55 = scmp.eq.s32.totalorder %s29, 0
      %p56 = por %p54, %p55
      %s58 = sadd.s32 %s57, 1
      %p61 = scmp.eq.s32.totalorder %s23, 1
      %p62 = scmp.ne.s32.totalorder %s57, %s59
      %p63 = scmp.eq.s32.totalorder %s23, 0
      %p64 = por %p62, %p63
      %p65 = scmp.ne.s32.totalorder %s57, %s59
      %p66 = scmp.eq.s32.totalorder %s28, 1
      %p67 = por %p65, %p66
      %p68 = scmp.ne.s32.totalorder %s59, %s60
      %p69 = scmp.eq.s32.totalorder %s28, 0
      %p70 = por %p68, %p69
      %p71 = scmp.ne.s32.totalorder %s59, %s60
      %p72 = scmp.eq.s32.totalorder %s29, 1
      %p73 = por %p71, %p72
      %p75 = scmp.ne.s32.totalorder %s60, %s74
      %p76 = scmp.eq.s32.totalorder %s29, 0
      %p77 = por %p75, %p76
      %s79 = sadd.s32 %s78, 1
      %p82 = scmp.eq.s32.totalorder %s23, 1
      %p83 = scmp.ne.s32.totalorder %s78, %s80
      %p84 = scmp.eq.s32.totalorder %s23, 0
      %p85 = por %p83, %p84
      %p86 = scmp.ne.s32.totalorder %s78, %s80
      %p87 = scmp.eq.s32.totalorder %s28, 1
      %p88 = por %p86, %p87
      %p89 = scmp.ne.s32.totalorder %s80, %s81
      %p90 = scmp.eq.s32.totalorder %s28, 0
      %p91 = por %p89, %p90
      %p92 = scmp.ne.s32.totalorder %s80, %s81
      %p93 = scmp.eq.s32.totalorder %s29, 1
      %p94 = por %p92, %p93
      %p96 = scmp.ne.s32.totalorder %s81, %s95
      %p97 = scmp.eq.s32.totalorder %s29, 0
      %p98 = por %p96, %p97
      %s100 = sadd.s32 %s99, 1
      %p103 = scmp.eq.s32.totalorder %s23, 1
      %p104 = scmp.ne.s32.totalorder %s99, %s101
      %p105 = scmp.eq.s32.totalorder %s23, 0
      %p106 = por %p104, %p105
      %p107 = scmp.ne.s32.totalorder %s99, %s101
      %p108 = scmp.eq.s32.totalorder %s28, 1
      %p109 = por %p107, %p108
      %p110 = scmp.ne.s32.totalorder %s101, %s102
      %p111 = scmp.eq.s32.totalorder %s28, 0
      %p112 = por %p110, %p111
      %p113 = scmp.ne.s32.totalorder %s101, %s102
      %p114 = scmp.eq.s32.totalorder %s29, 1
      %p115 = por %p113, %p114
      %p117 = scmp.ne.s32.totalorder %s102, %s116
      %p118 = scmp.eq.s32.totalorder %s29, 0
      %p119 = por %p117, %p118
      %s121 = sadd.s32 %s120, 1
      %p124 = scmp.eq.s32.totalorder %s23, 1
      %p125 = scmp.ne.s32.totalorder %s120, %s122
      %p126 = scmp.eq.s32.totalorder %s23, 0
      %p127 = por %p125, %p126
      %p128 = scmp.ne.s32.totalorder %s120, %s122
      %p129 = scmp.eq.s32.totalorder %s28, 1
      %p130 = por %p128, %p129
      %p131 = scmp.ne.s32.totalorder %s122, %s123
      %p132 = scmp.eq.s32.totalorder %s28, 0
      %p133 = por %p131, %p132
      %p134 = scmp.ne.s32.totalorder %s122, %s123
      %p135 = scmp.eq.s32.totalorder %s29, 1
      %p136 = por %p134, %p135
      %p138 = scmp.ne.s32.totalorder %s123, %s137
      %p139 = scmp.eq.s32.totalorder %s29, 0
      %p140 = por %p138, %p139
      %s142 = sadd.s32 %s141, 1
      %p145 = scmp.eq.s32.totalorder %s23, 1
      %p146 = scmp.ne.s32.totalorder %s141, %s143
      %p147 = scmp.eq.s32.totalorder %s23, 0
      %p148 = por %p146, %p147
      %p149 = scmp.ne.s32.totalorder %s141, %s143
      %p150 = scmp.eq.s32.totalorder %s28, 1
      %p151 = por %p149, %p150
      %p152 = scmp.ne.s32.totalorder %s143, %s144
      %p153 = scmp.eq.s32.totalorder %s28, 0
      %p154 = por %p152, %p153
      %p155 = scmp.ne.s32.totalorder %s143, %s144
      %p156 = scmp.eq.s32.totalorder %s29, 1
      %p157 = por %p155, %p156
      %p159 = scmp.ne.s32.totalorder %s144, %s158
      %p160 = scmp.eq.s32.totalorder %s29, 0
      %p161 = por %p159, %p160
      %s163 = sadd.s32 %s162, 1
      %p166 = scmp.eq.s32.totalorder %s23, 1
      %p167 = scmp.ne.s32.totalorder %s162, %s164
      %p168 = scmp.eq.s32.totalorder %s23, 0
      %p169 = por %p167, %p168
      %p170 = scmp.ne.s32.totalorder %s162, %s164
      %p171 = scmp.eq.s32.totalorder %s28, 1
      %p172 = por %p170, %p171
      %p173 = scmp.ne.s32.totalorder %s164, %s165
      %p174 = scmp.eq.s32.totalorder %s28, 0
      %p175 = por %p173, %p174
      %p176 = scmp.ne.s32.totalorder %s164, %s165
      %p177 = scmp.eq.s32.totalorder %s29, 1
      %p178 = por %p176, %p177
      %p180 = scmp.ne.s32.totalorder %s165, %s179
      %p181 = scmp.eq.s32.totalorder %s29, 0
      %p182 = por %p180, %p181
      %s184 = sadd.s32 %s183, 1
      %p187 = scmp.eq.s32.totalorder %s23, 1
      %p188 = scmp.ne.s32.totalorder %s183, %s185
      %p189 = scmp.eq.s32.totalorder %s23, 0
      %p190 = por %p188, %p189
      %p191 = scmp.ne.s32.totalorder %s183, %s185
      %p192 = scmp.eq.s32.totalorder %s28, 1
      %p193 = por %p191, %p192
      %p194 = scmp.ne.s32.totalorder %s185, %s186
      %p195 = scmp.eq.s32.totalorder %s28, 0
      %p196 = por %p194, %p195
      %p197 = scmp.ne.s32.totalorder %s185, %s186
      %p198 = scmp.eq.s32.totalorder %s29, 1
      %p199 = por %p197, %p198
      %p201 = scmp.ne.s32.totalorder %s186, %s200
      %p202 = scmp.eq.s32.totalorder %s29, 0
      %p203 = por %p201, %p202
      %s205 = sadd.s32 %s204, 1
      %p208 = scmp.eq.s32.totalorder %s23, 1
      %p209 = scmp.ne.s32.totalorder %s204, %s206
      %p210 = scmp.eq.s32.totalorder %s23, 0
      %p211 = por %p209, %p210
      %p212 = scmp.ne.s32.totalorder %s204, %s206
      %p213 = scmp.eq.s32.totalorder %s28, 1
      %p214 = por %p212, %p213
      %p215 = scmp.ne.s32.totalorder %s206, %s207
      %p216 = scmp.eq.s32.totalorder %s28, 0
      %p217 = por %p215, %p216
      %p218 = scmp.ne.s32.totalorder %s206, %s207
      %p219 = scmp.eq.s32.totalorder %s29, 1
      %p220 = por %p218, %p219
      %p222 = scmp.ne.s32.totalorder %s207, %s221
      %p223 = scmp.eq.s32.totalorder %s29, 0
      %p224 = por %p222, %p223
      %s226 = sadd.s32 %s225, 1
      %p229 = scmp.eq.s32.totalorder %s23, 1
      %p230 = scmp.ne.s32.totalorder %s225, %s227
      %p231 = scmp.eq.s32.totalorder %s23, 0
      %p232 = por %p230, %p231
      %p233 = scmp.ne.s32.totalorder %s225, %s227
      %p234 = scmp.eq.s32.totalorder %s28, 1
      %p235 = por %p233, %p234
      %p236 = scmp.ne.s32.totalorder %s227, %s228
      %p237 = scmp.eq.s32.totalorder %s28, 0
      %p238 = por %p236, %p237
      %p239 = scmp.ne.s32.totalorder %s227, %s228
      %p240 = scmp.eq.s32.totalorder %s29, 1
      %p241 = por %p239, %p240
      %p243 = scmp.ne.s32.totalorder %s228, %s242
      %p244 = scmp.eq.s32.totalorder %s29, 0
      %p245 = por %p243, %p244
      %s247 = sadd.s32 %s246, 1
      %p250 = scmp.eq.s32.totalorder %s23, 1
      %p251 = scmp.ne.s32.totalorder %s246, %s248
      %p252 = scmp.eq.s32.totalorder %s23, 0
      %p253 = por %p251, %p252
      %p254 = scmp.ne.s32.totalorder %s246, %s248
      %p255 = scmp.eq.s32.totalorder %s28, 1
      %p256 = por %p254, %p255
      %p257 = scmp.ne.s32.totalorder %s248, %s249
      %p258 = scmp.eq.s32.totalorder %s28, 0
      %p259 = por %p257, %p258
      %p260 = scmp.ne.s32.totalorder %s248, %s249
      %p261 = scmp.eq.s32.totalorder %s29, 1
      %p262 = por %p260, %p261
      %p264 = scmp.ne.s32.totalorder %s249, %s263
      %p265 = scmp.eq.s32.totalorder %s29, 0
      %p266 = por %p264, %p265
      %s268 = sadd.s32 %s267, 1
      %p271 = scmp.eq.s32.totalorder %s23, 1
      %p272 = scmp.ne.s32.totalorder %s267, %s269
      %p273 = scmp.eq.s32.totalorder %s23, 0
      %p274 = por %p272, %p273
      %p275 = scmp.ne.s32.totalorder %s267, %s269
      %p276 = scmp.eq.s32.totalorder %s28, 1
      %p277 = por %p275, %p276
      %p278 = scmp.ne.s32.totalorder %s269, %s270
      %p279 = scmp.eq.s32.totalorder %s28, 0
      %p280 = por %p278, %p279
      %p281 = scmp.ne.s32.totalorder %s269, %s270
      %p282 = scmp.eq.s32.totalorder %s29, 1
      %p283 = por %p281, %p282
      %p285 = scmp.ne.s32.totalorder %s270, %s284
      %p286 = scmp.eq.s32.totalorder %s29, 0
      %p287 = por %p285, %p286
      %s289 = sadd.s32 %s288, 1
      %p292 = scmp.eq.s32.totalorder %s23, 1
      %p293 = scmp.ne.s32.totalorder %s288, %s290
      %p294 = scmp.eq.s32.totalorder %s23, 0
      %p295 = por %p293, %p294
      %p296 = scmp.ne.s32.totalorder %s288, %s290
      %p297 = scmp.eq.s32.totalorder %s28, 1
      %p298 = por %p296, %p297
      %p299 = scmp.ne.s32.totalorder %s290, %s291
      %p300 = scmp.eq.s32.totalorder %s28, 0
      %p301 = por %p299, %p300
      %p302 = scmp.ne.s32.totalorder %s290, %s291
      %p303 = scmp.eq.s32.totalorder %s29, 1
      %p304 = por %p302, %p303
      %p306 = scmp.ne.s32.totalorder %s291, %s305
      %p307 = scmp.eq.s32.totalorder %s29, 0
      %p308 = por %p306, %p307
      %s310 = sadd.s32 %s309, 1
      %p313 = scmp.eq.s32.totalorder %s23, 1
      %p314 = scmp.ne.s32.totalorder %s309, %s311
      %p315 = scmp.eq.s32.totalorder %s23, 0
      %p316 = por %p314, %p315
      %p317 = scmp.ne.s32.totalorder %s309, %s311
      %p318 = scmp.eq.s32.totalorder %s28, 1
      %p319 = por %p317, %p318
      %p320 = scmp.ne.s32.totalorder %s311, %s312
      %p321 = scmp.eq.s32.totalorder %s28, 0
      %p322 = por %p320, %p321
      %p323 = scmp.ne.s32.totalorder %s311, %s312
      %p324 = scmp.eq.s32.totalorder %s29, 1
      %p325 = por %p323, %p324
      %p327 = scmp.ne.s32.totalorder %s312, %s326
      %p328 = scmp.eq.s32.totalorder %s29, 0
      %p329 = por %p327, %p328
      %s330 = ssub.s32 %s23, %s30
      %p331 = scmp.eq.s32.totalorder %s330, 0
      %s333 = sadd.s32 %s332, 1
      %s334 = scalar_select %p331, %s332, %s333
      %p337 = pneg %p331
      %p338 = scmp.eq.s32.totalorder %s23, 1
      %p339 = por %p337, %p338
      %p340 = scmp.ne.s32.totalorder %s332, %s335
      %p341 = scmp.eq.s32.totalorder %s23, 0
      %p342 = por %p340, %p341
      %p343 = scmp.ne.s32.totalorder %s332, %s335
      %p344 = scmp.eq.s32.totalorder %s28, 1
      %p345 = por %p343, %p344
      %p346 = scmp.ne.s32.totalorder %s335, %s336
      %p347 = scmp.eq.s32.totalorder %s28, 0
      %p348 = por %p346, %p347
      %p349 = scmp.ne.s32.totalorder %s335, %s336
      %p350 = scmp.eq.s32.totalorder %s29, 1
      %p351 = por %p349, %p350
      %p353 = scmp.ne.s32.totalorder %s336, %s352
      %p354 = scmp.eq.s32.totalorder %s29, 0
      %p355 = por %p353, %p354
      %p356 = scmp.le.s32.totalorder 1, %s23
      %p357 = scmp.lt.s32.totalorder %s23, 3
      %p358 = pnand %p356, %p357
      %p359 = pneg %p358
      // Predicated region
      $region9: #{tpu_custom_call.1} parent=5 // pred_check
        _
      $region10: #{tpu_custom_call.1} parent=5 // pred_check_branch
        %361 = sbr.rel (%p358) target = $region12
      $region11: #{tpu_custom_call.1} parent=5 // pred_region
        %s362 = ssub.s32 %s23, 1
        // Predicated region
        $region13: #{tpu_custom_call.1} parent=11 // pred_check
          %p363 = pneg %p70
        $region14: #{tpu_custom_call.1} parent=11 // pred_check_branch
          %365 = sbr.rel (%p363) target = $region16
        $region15: #{tpu_custom_call.1} parent=11 // pred_region
          _
        $region16: #{tpu_custom_call.1} parent=11 // pred_fallthru
          _
        // Predicated region
        $region17: #{tpu_custom_call.1} parent=11 // pred_check
          %p366 = pneg %p91
        $region18: #{tpu_custom_call.1} parent=11 // pred_check_branch
          %368 = sbr.rel (%p366) target = $region20
        $region19: #{tpu_custom_call.1} parent=11 // pred_region
          _
        $region20: #{tpu_custom_call.1} parent=11 // pred_fallthru
          _
        // Predicated region
        $region21: #{tpu_custom_call.1} parent=11 // pred_check
          %p369 = pneg %p112
        $region22: #{tpu_custom_call.1} parent=11 // pred_check_branch
          %371 = sbr.rel (%p369) target = $region24
        $region23: #{tpu_custom_call.1} parent=11 // pred_region
          _
        $region24: #{tpu_custom_call.1} parent=11 // pred_fallthru
          _
        // Predicated region
        $region25: #{tpu_custom_call.1} parent=11 // pred_check
          %p372 = pneg %p133
        $region26: #{tpu_custom_call.1} parent=11 // pred_check_branch
          %374 = sbr.rel (%p372) target = $region28
        $region27: #{tpu_custom_call.1} parent=11 // pred_region
          _
        $region28: #{tpu_custom_call.1} parent=11 // pred_fallthru
          _
        // Predicated region
        $region29: #{tpu_custom_call.1} parent=11 // pred_check
          %p375 = pneg %p154
        $region30: #{tpu_custom_call.1} parent=11 // pred_check_branch
          %377 = sbr.rel (%p375) target = $region32
        $region31: #{tpu_custom_call.1} parent=11 // pred_region
          _
        $region32: #{tpu_custom_call.1} parent=11 // pred_fallthru
          _
        // Predicated region
        $region33: #{tpu_custom_call.1} parent=11 // pred_check
          %p378 = pneg %p175
        $region34: #{tpu_custom_call.1} parent=11 // pred_check_branch
          %380 = sbr.rel (%p378) target = $region36
        $region35: #{tpu_custom_call.1} parent=11 // pred_region
          _
        $region36: #{tpu_custom_call.1} parent=11 // pred_fallthru
          _
        // Predicated region
        $region37: #{tpu_custom_call.1} parent=11 // pred_check
          %p381 = pneg %p196
        $region38: #{tpu_custom_call.1} parent=11 // pred_check_branch
          %383 = sbr.rel (%p381) target = $region40
        $region39: #{tpu_custom_call.1} parent=11 // pred_region
          _
        $region40: #{tpu_custom_call.1} parent=11 // pred_fallthru
          _
        // Predicated region
        $region41: #{tpu_custom_call.1} parent=11 // pred_check
          %p384 = pneg %p217
        $region42: #{tpu_custom_call.1} parent=11 // pred_check_branch
          %386 = sbr.rel (%p384) target = $region44
        $region43: #{tpu_custom_call.1} parent=11 // pred_region
          _
        $region44: #{tpu_custom_call.1} parent=11 // pred_fallthru
          _
        // Predicated region
        $region45: #{tpu_custom_call.1} parent=11 // pred_check
          %p387 = pneg %p238
        $region46: #{tpu_custom_call.1} parent=11 // pred_check_branch
          %389 = sbr.rel (%p387) target = $region48
        $region47: #{tpu_custom_call.1} parent=11 // pred_region
          _
        $region48: #{tpu_custom_call.1} parent=11 // pred_fallthru
          _
        // Predicated region
        $region49: #{tpu_custom_call.1} parent=11 // pred_check
          %p390 = pneg %p259
        $region50: #{tpu_custom_call.1} parent=11 // pred_check_branch
          %392 = sbr.rel (%p390) target = $region52
        $region51: #{tpu_custom_call.1} parent=11 // pred_region
          _
        $region52: #{tpu_custom_call.1} parent=11 // pred_fallthru
          _
        // Predicated region
        $region53: #{tpu_custom_call.1} parent=11 // pred_check
          %p393 = pneg %p280
        $region54: #{tpu_custom_call.1} parent=11 // pred_check_branch
          %395 = sbr.rel (%p393) target = $region56
        $region55: #{tpu_custom_call.1} parent=11 // pred_region
          _
        $region56: #{tpu_custom_call.1} parent=11 // pred_fallthru
          _
        // Predicated region
        $region57: #{tpu_custom_call.1} parent=11 // pred_check
          %p396 = pneg %p301
        $region58: #{tpu_custom_call.1} parent=11 // pred_check_branch
          %398 = sbr.rel (%p396) target = $region60
        $region59: #{tpu_custom_call.1} parent=11 // pred_region
          _
        $region60: #{tpu_custom_call.1} parent=11 // pred_fallthru
          _
        // Predicated region
        $region61: #{tpu_custom_call.1} parent=11 // pred_check
          %p399 = pneg %p322
        $region62: #{tpu_custom_call.1} parent=11 // pred_check_branch
          %401 = sbr.rel (%p399) target = $region64
        $region63: #{tpu_custom_call.1} parent=11 // pred_region
          _
        $region64: #{tpu_custom_call.1} parent=11 // pred_fallthru
          _
      $region12: #{tpu_custom_call.1} parent=5 // pred_fallthru
        _
      %p402 = scmp.lt.s32.totalorder %s23, 2
      // Predicated region
      $region65: #{tpu_custom_call.1} parent=5 // pred_check
        %p403 = pneg %p402
      $region66: #{tpu_custom_call.1} parent=5 // pred_check_branch
        %405 = sbr.rel (%p403) target = $region68
      $region67: #{tpu_custom_call.1} parent=5 // pred_region
        // Predicated region
        $region69: #{tpu_custom_call.1} parent=67 // pred_check
          %p406 = pneg %p43
        $region70: #{tpu_custom_call.1} parent=67 // pred_check_branch
          %408 = sbr.rel (%p406) target = $region72
        $region71: #{tpu_custom_call.1} parent=67 // pred_region
          %s409 = smul.u32 63, %s23
          %p410 = scmp.lt.s32.totalorder %s409, 125
          %s411 = scalar_select %p410, %s409, 125
          %s412 = smul.addr %s411, 8
          %s413 = scalar_lea.vmem %s0, %s412
          %s414 = smul.u32 63, %s23
        $region72: #{tpu_custom_call.1} parent=67 // pred_fallthru
          _
      $region68: #{tpu_custom_call.1} parent=5 // pred_fallthru
        _
      %p415 = scmp.le.s32.totalorder 1, %s23
      %p416 = scmp.lt.s32.totalorder %s23, 3
      %p417 = pnand %p415, %p416
      %p418 = pneg %p417
      // Predicated region
      $region73: #{tpu_custom_call.1} parent=5 // pred_check
        _
      $region74: #{tpu_custom_call.1} parent=5 // pred_check_branch
        %420 = sbr.rel (%p417) target = $region76
      $region75: #{tpu_custom_call.1} parent=5 // pred_region
        %s421 = ssub.s32 %s23, 1
        %s422 = smul.u32 63, %s28
        %p423 = scmp.lt.s32.totalorder %s422, 125
        %s424 = scalar_select %p423, %s422, 125
        %s425 = smul.addr %s424, 8
        %s426 = scalar_lea.vmem %s0, %s425
        %p427 = pneg %p49
        %p428 = pneg %p46
        %p429 = pneg %p70
        %p430 = pneg %p67
        %p431 = pneg %p91
        %p432 = pneg %p88
        %p433 = pneg %p112
        %p434 = pneg %p109
        %p435 = pneg %p133
        %p436 = pneg %p130
        %p437 = pneg %p154
        %p438 = pneg %p151
        %p439 = pneg %p175
        %p440 = pneg %p172
        %p441 = pneg %p196
        %p442 = pneg %p193
        %p443 = pneg %p217
        %p444 = pneg %p214
        %p445 = pneg %p238
        %p446 = pneg %p235
        %p447 = pneg %p259
        %p448 = pneg %p256
        %p449 = pneg %p280
        %p450 = pneg %p277
        %p451 = pneg %p301
        %p452 = pneg %p298
        %p453 = pneg %p322
        %p454 = pneg %p319
        %p455 = pneg %p348
        %p456 = pneg %p345
        %s457 = sand.u32 %s335, 1
        %s458 = scalar_lea.sflag [#allocation3], %s457
        %s459 = sand.u32 %s335, 1
        %s460 = smul.addr %s459, 252
        %s461 = scalar_lea.vmem [#allocation2], %s460
        %s462 = smul.u32 63, %s28
        %p463 = scmp.lt.s32.totalorder %s462, 125
        %s464 = scalar_select %p463, %s462, 125
        %s465 = smul.addr %s464, 8
        %s466 = scalar_lea.vmem %s0, %s465
        %s467 = smul.u32 63, %s28
        %s468 = smul.u32 63, %s28
        %v470 = vld [vmem:[%s466] sm:$0xff]
        %v471 = vld [vmem:[%s466 + $0x8] sm:$0xff]
        %v472 = vld [vmem:[%s466 + $0x10] sm:$0xff]
        %v473 = vld [vmem:[%s466 + $0x18] sm:$0xff]
        %v474 = vld [vmem:[%s466 + $0x20] sm:$0xff]
        %v475 = vld [vmem:[%s466 + $0x28] sm:$0xff]
        %v476 = vld [vmem:[%s466 + $0x30] sm:$0xff]
        %v477 = vld [vmem:[%s466 + $0x38] sm:$0xff]
        %v478 = vld [vmem:[%s466 + $0x40] sm:$0xff]
        %v479 = vld [vmem:[%s466 + $0x48] sm:$0xff]
        %v480 = vld [vmem:[%s466 + $0x50] sm:$0xff]
        %v481 = vld [vmem:[%s466 + $0x58] sm:$0xff]
        %v482 = vld [vmem:[%s466 + $0x60] sm:$0xff]
        %v483 = vld [vmem:[%s466 + $0x68] sm:$0xff]
        %v484 = vld [vmem:[%s466 + $0x70] sm:$0xff]
        %v485 = vld [vmem:[%s466 + $0x78] sm:$0xff]
        %v486 = vld [vmem:[%s466 + $0x80] sm:$0xff]
        %v487 = vld [vmem:[%s466 + $0x88] sm:$0xff]
        %v488 = vld [vmem:[%s466 + $0x90] sm:$0xff]
        %v489 = vld [vmem:[%s466 + $0x98] sm:$0xff]
        %v490 = vld [vmem:[%s466 + $0xa0] sm:$0xff]
        %v491 = vld [vmem:[%s466 + $0xa8] sm:$0xff]
        %v492 = vld [vmem:[%s466 + $0xb0] sm:$0xff]
        %v493 = vld [vmem:[%s466 + $0xb8] sm:$0xff]
        %v494 = vld [vmem:[%s466 + $0xc0] sm:$0xff]
        %v495 = vld [vmem:[%s466 + $0xc8] sm:$0xff]
        %v496 = vld [vmem:[%s466 + $0xd0] sm:$0xff]
        %v497 = vld [vmem:[%s466 + $0xd8] sm:$0xff]
        %v498 = vld [vmem:[%s466 + $0xe0] sm:$0xff]
        %v499 = vld [vmem:[%s466 + $0xe8] sm:$0xff]
        %v500 = vld [vmem:[%s466 + $0xf0] sm:$0xff]
        %v501 = vld [vmem:[%s466 + $0xf8] sm:$0xff]
        %v502 = vld [vmem:[%s466 + $0x100] sm:$0xff]
        %v503 = vld [vmem:[%s466 + $0x108] sm:$0xff]
        %v504 = vld [vmem:[%s466 + $0x110] sm:$0xff]
        %v505 = vld [vmem:[%s466 + $0x118] sm:$0xff]
        %v506 = vld [vmem:[%s466 + $0x120] sm:$0xff]
        %v507 = vld [vmem:[%s466 + $0x128] sm:$0xff]
        %v508 = vld [vmem:[%s466 + $0x130] sm:$0xff]
        %v509 = vld [vmem:[%s466 + $0x138] sm:$0xff]
        %v510 = vld [vmem:[%s466 + $0x140] sm:$0xff]
        %v511 = vld [vmem:[%s466 + $0x148] sm:$0xff]
        %v512 = vld [vmem:[%s466 + $0x150] sm:$0xff]
        %v513 = vld [vmem:[%s466 + $0x158] sm:$0xff]
        %v514 = vld [vmem:[%s466 + $0x160] sm:$0xff]
        %v515 = vld [vmem:[%s466 + $0x168] sm:$0xff]
        %v516 = vld [vmem:[%s466 + $0x170] sm:$0xff]
        %v517 = vld [vmem:[%s466 + $0x178] sm:$0xff]
        %v518 = vld [vmem:[%s466 + $0x180] sm:$0xff]
        %v519 = vld [vmem:[%s466 + $0x188] sm:$0xff]
        %v520 = vld [vmem:[%s466 + $0x190] sm:$0xff]
        %v521 = vld [vmem:[%s466 + $0x198] sm:$0xff]
        %v522 = vld [vmem:[%s466 + $0x1a0] sm:$0xff]
        %v523 = vld [vmem:[%s466 + $0x1a8] sm:$0xff]
        %v524 = vld [vmem:[%s466 + $0x1b0] sm:$0xff]
        %v525 = vld [vmem:[%s466 + $0x1b8] sm:$0xff]
        %v526 = vld [vmem:[%s466 + $0x1c0] sm:$0xff]
        %v527 = vld [vmem:[%s466 + $0x1c8] sm:$0xff]
        %v528 = vld [vmem:[%s466 + $0x1d0] sm:$0xff]
        %v529 = vld [vmem:[%s466 + $0x1d8] sm:$0xff]
        %v530 = vld [vmem:[%s466 + $0x1e0] sm:$0xff]
        %v531 = vld [vmem:[%s466 + $0x1e8] sm:$0xff]
        %v532 = vld [vmem:[%s466 + $0x1f0] sm:$0xff]
        %v533 = vpack.c.bf16 %v471, %v470
        %v534 = vpack.c.bf16 %v473, %v472
        %v535 = vpack.c.bf16 %v475, %v474
        %v536 = vpack.c.bf16 %v477, %v476
        %v537 = vpack.c.bf16 %v479, %v478
        %v538 = vpack.c.bf16 %v481, %v480
        %v539 = vpack.c.bf16 %v483, %v482
        %v540 = vpack.c.bf16 %v485, %v484
        %v541 = vpack.c.bf16 %v487, %v486
        %v542 = vpack.c.bf16 %v489, %v488
        %v543 = vpack.c.bf16 %v491, %v490
        %v544 = vpack.c.bf16 %v493, %v492
        %v545 = vpack.c.bf16 %v495, %v494
        %v546 = vpack.c.bf16 %v497, %v496
        %v547 = vpack.c.bf16 %v499, %v498
        %v548 = vpack.c.bf16 %v501, %v500
        %v549 = vpack.c.bf16 %v503, %v502
        %v550 = vpack.c.bf16 %v505, %v504
        %v551 = vpack.c.bf16 %v507, %v506
        %v552 = vpack.c.bf16 %v509, %v508
        %v553 = vpack.c.bf16 %v511, %v510
        %v554 = vpack.c.bf16 %v513, %v512
        %v555 = vpack.c.bf16 %v515, %v514
        %v556 = vpack.c.bf16 %v517, %v516
        %v557 = vpack.c.bf16 %v519, %v518
        %v558 = vpack.c.bf16 %v521, %v520
        %v559 = vpack.c.bf16 %v523, %v522
        %v560 = vpack.c.bf16 %v525, %v524
        %v561 = vpack.c.bf16 %v527, %v526
        %v562 = vpack.c.bf16 %v529, %v528
        %v563 = vpack.c.bf16 %v531, %v530
        %v564 = vpack.c.bf16 %v532, %v532
        %v565 = vld [vmem:[%s1] sm:$0xff]
        %v566 = vld [vmem:[%s1 + $0x8] sm:$0xff]
        %v567 = vld [vmem:[%s1 + $0x10] sm:$0xff]
        %v568 = vld [vmem:[%s1 + $0x18] sm:$0xff]
        %v569 = vld [vmem:[%s1 + $0x20] sm:$0xff]
        %v570 = vld [vmem:[%s1 + $0x28] sm:$0xff]
        %v571 = vld [vmem:[%s1 + $0x30] sm:$0xff]
        %v572 = vld [vmem:[%s1 + $0x38] sm:$0xff]
        %v573 = vld [vmem:[%s1 + $0x40] sm:$0xff]
        %v574 = vld [vmem:[%s1 + $0x48] sm:$0xff]
        %v575 = vld [vmem:[%s1 + $0x50] sm:$0xff]
        %v576 = vld [vmem:[%s1 + $0x58] sm:$0xff]
        %v577 = vld [vmem:[%s2] sm:$0x3]
        %v579 = vlaneseq
        %v580 = vshrl.u32 %v579, 7
        %v581 = vsub.s32 0, %v580
        %v582 = vrot.slane %v577, %v581
        %v583 = vlaneseq
        %v584 = vshrl.u32 %v583, 7
        %v585 = vsub.s32 1, %v584
        %v586 = vrot.slane %v577, %v585
        %v601 = vunpack.c.l.b16 %v565
        %v602 = vunpack.c.h.b16 %v565
        %v603 = vunpack.c.l.b16 %v566
        %v604 = vunpack.c.h.b16 %v566
        %v605 = vunpack.c.l.b16 %v567
        %v606 = vunpack.c.h.b16 %v567
        %v607 = vunpack.c.l.b16 %v568
        %v608 = vunpack.c.h.b16 %v568
        %v609 = vunpack.c.l.b16 %v569
        %v610 = vunpack.c.h.b16 %v569
        %v611 = vunpack.c.l.b16 %v570
        %v612 = vunpack.c.h.b16 %v570
        %v613 = vunpack.c.l.b16 %v571
        %v614 = vunpack.c.h.b16 %v571
        %v615 = vunpack.c.l.b16 %v572
        %v616 = vunpack.c.h.b16 %v572
        %v617 = vunpack.c.l.b16 %v573
        %v618 = vunpack.c.h.b16 %v573
        %v619 = vunpack.c.l.b16 %v574
        %v620 = vunpack.c.h.b16 %v574
        %v621 = vunpack.c.l.b16 %v575
        %v622 = vunpack.c.h.b16 %v575
        %v623 = vunpack.c.l.b16 %v576
        %v624 = vunpack.c.h.b16 %v576
        %v625 = vpack.c.b16 %v603, %v601
        %v626 = vpack.c.b16 %v604, %v602
        %v627 = vpack.c.b16 %v607, %v605
        %v628 = vpack.c.b16 %v608, %v606
        %v629 = vpack.c.b16 %v611, %v609
        %v630 = vpack.c.b16 %v612, %v610
        %v631 = vpack.c.b16 %v615, %v613
        %v632 = vpack.c.b16 %v616, %v614
        %v633 = vpack.c.b16 %v619, %v617
        %v634 = vpack.c.b16 %v620, %v618
        %v635 = vpack.c.b16 %v623, %v621
        %v636 = vpack.c.b16 %v624, %v622
        %vm649 = vcmask 785408
        %v651 = vsel %vm649, %v533, 0
        %v654 = vsel %vm649, %v534, 0
        %v657 = vsel %vm649, %v535, 0
        %v660 = vsel %vm649, %v536, 0
        %v663 = vsel %vm649, %v537, 0
        %v666 = vsel %vm649, %v538, 0
        %v669 = vsel %vm649, %v539, 0
        %v672 = vsel %vm649, %v540, 0
        %v675 = vsel %vm649, %v541, 0
        %v678 = vsel %vm649, %v542, 0
        %v681 = vsel %vm649, %v543, 0
        %v684 = vsel %vm649, %v544, 0
        %v687 = vsel %vm649, %v545, 0
        %v690 = vsel %vm649, %v546, 0
        %v693 = vsel %vm649, %v547, 0
        %v696 = vsel %vm649, %v548, 0
        %v699 = vsel %vm649, %v549, 0
        %v702 = vsel %vm649, %v550, 0
        %v705 = vsel %vm649, %v551, 0
        %v708 = vsel %vm649, %v552, 0
        %v711 = vsel %vm649, %v553, 0
        %v714 = vsel %vm649, %v554, 0
        %v717 = vsel %vm649, %v555, 0
        %v720 = vsel %vm649, %v556, 0
        %v723 = vsel %vm649, %v557, 0
        %v726 = vsel %vm649, %v558, 0
        %v729 = vsel %vm649, %v559, 0
        %v732 = vsel %vm649, %v560, 0
        %v735 = vsel %vm649, %v561, 0
        %v738 = vsel %vm649, %v562, 0
        %v741 = vsel %vm649, %v563, 0
        %v744 = vsel %vm649, %v564, 0
        %746 = vmatprep.subr.bf16.mxu0 %v626
        %747 = vmatpush1.bf16.msra.mxu0 %v625
        %748 = vmatprep.subr.bf16.mxu0 %v628
        %749 = vmatpush1.bf16.msra.mxu0 %v627
        %750 = vmatprep.subr.bf16.mxu0 %v630
        %751 = vmatpush1.bf16.msra.mxu0 %v629
        %752 = vmatprep.subr.bf16.mxu0 %v632
        %753 = vmatpush1.bf16.msra.mxu0 %v631
        %754 = vmatprep.subr.bf16.mxu0 %v634
        %755 = vmatpush1.bf16.msra.mxu0 %v633
        %756 = vmatprep.subr.bf16.mxu0 %v636
        %757 = vmatpush1.bf16.msra.mxu0 %v635
        %758 = vmatprep.subr.bf16.mxu0 0
        %759 = vmatpush1.bf16.msra.mxu0 0
        %760 = vmatprep.subr.bf16.mxu0 0
        %761 = vmatpush1.bf16.msra.mxu0 0
        %762 = vmatprep.subr.bf16.mxu0 0
        %763 = vmatpush1.bf16.msra.mxu0 0
        %764 = vmatprep.subr.bf16.mxu0 0
        %765 = vmatpush1.bf16.msra.mxu0 0
        %766 = vmatprep.subr.bf16.mxu0 0
        %767 = vmatpush1.bf16.msra.mxu0 0
        %768 = vmatprep.subr.bf16.mxu0 0
        %769 = vmatpush1.bf16.msra.mxu0 0
        %770 = vmatprep.subr.bf16.mxu0 0
        %771 = vmatpush1.bf16.msra.mxu0 0
        %772 = vmatprep.subr.bf16.mxu0 0
        %773 = vmatpush1.bf16.msra.mxu0 0
        %774 = vmatprep.subr.bf16.mxu0 0
        %775 = vmatpush1.bf16.msra.mxu0 0
        %776 = vmatprep.subr.bf16.mxu0 0
        %777 = vmatpush1.bf16.msra.mxu0 0
        %778 = vmatprep.mubr.bf16.mxu0 0
        %779 = vmatmul.mubr.bf16.gmra.mrb[0].mxu0 %v651
        %v780 = vpop.f32.mrb[0].mxu0
        %v781 = vadd.f32 %v582, %v780
        %v782 = vpop.f32.mrb[0].mxu0
        %v783 = vadd.f32 %v586, %v782
        %v784 = vpop.f32.mrb[0].mxu0
        %v785 = vadd.f32 %v582, %v784
        %v786 = vpop.f32.mrb[0].mxu0
        %v787 = vadd.f32 %v586, %v786
        %788 = vmatprep.mubr.bf16.mxu0 0
        %789 = vmatmul.mubr.bf16.gmra.mrb[0].mxu0 %v654
        %v790 = vpop.f32.mrb[0].mxu0
        %v791 = vadd.f32 %v582, %v790
        %v792 = vpop.f32.mrb[0].mxu0
        %v793 = vadd.f32 %v586, %v792
        %v794 = vpop.f32.mrb[0].mxu0
        %v795 = vadd.f32 %v582, %v794
        %v796 = vpop.f32.mrb[0].mxu0
        %v797 = vadd.f32 %v586, %v796
        %798 = vmatprep.mubr.bf16.mxu0 0
        %799 = vmatmul.mubr.bf16.gmra.mrb[0].mxu0 %v657
        %v800 = vpop.f32.mrb[0].mxu0
        %v801 = vadd.f32 %v582, %v800
        %v802 = vpop.f32.mrb[0].mxu0
        %v803 = vadd.f32 %v586, %v802
        %v804 = vpop.f32.mrb[0].mxu0
        %v805 = vadd.f32 %v582, %v804
        %v806 = vpop.f32.mrb[0].mxu0
        %v807 = vadd.f32 %v586, %v806
        %808 = vmatprep.mubr.bf16.mxu0 0
        %809 = vmatmul.mubr.bf16.gmra.mrb[0].mxu0 %v660
        %v810 = vpop.f32.mrb[0].mxu0
        %v811 = vadd.f32 %v582, %v810
        %v812 = vpop.f32.mrb[0].mxu0
        %v813 = vadd.f32 %v586, %v812
        %v814 = vpop.f32.mrb[0].mxu0
        %v815 = vadd.f32 %v582, %v814
        %v816 = vpop.f32.mrb[0].mxu0
        %v817 = vadd.f32 %v586, %v816
        %818 = vmatprep.mubr.bf16.mxu0 0
        %819 = vmatmul.mubr.bf16.gmra.mrb[0].mxu0 %v663
        %v820 = vpop.f32.mrb[0].mxu0
        %v821 = vadd.f32 %v582, %v820
        %v822 = vpop.f32.mrb[0].mxu0
        %v823 = vadd.f32 %v586, %v822
        %v824 = vpop.f32.mrb[0].mxu0
        %v825 = vadd.f32 %v582, %v824
        %v826 = vpop.f32.mrb[0].mxu0
        %v827 = vadd.f32 %v586, %v826
        %828 = vmatprep.mubr.bf16.mxu0 0
        %829 = vmatmul.mubr.bf16.gmra.mrb[0].mxu0 %v666
        %v830 = vpop.f32.mrb[0].mxu0
        %v831 = vadd.f32 %v582, %v830
        %v832 = vpop.f32.mrb[0].mxu0
        %v833 = vadd.f32 %v586, %v832
        %v834 = vpop.f32.mrb[0].mxu0
        %v835 = vadd.f32 %v582, %v834
        %v836 = vpop.f32.mrb[0].mxu0
        %v837 = vadd.f32 %v586, %v836
        %838 = vmatprep.mubr.bf16.mxu0 0
        %839 = vmatmul.mubr.bf16.gmra.mrb[0].mxu0 %v669
        %v840 = vpop.f32.mrb[0].mxu0
        %v841 = vadd.f32 %v582, %v840
        %v842 = vpop.f32.mrb[0].mxu0
        %v843 = vadd.f32 %v586, %v842
        %v844 = vpop.f32.mrb[0].mxu0
        %v845 = vadd.f32 %v582, %v844
        %v846 = vpop.f32.mrb[0].mxu0
        %v847 = vadd.f32 %v586, %v846
        %848 = vmatprep.mubr.bf16.mxu0 0
        %849 = vmatmul.mubr.bf16.gmra.mrb[0].mxu0 %v672
        %v850 = vpop.f32.mrb[0].mxu0
        %v851 = vadd.f32 %v582, %v850
        %v852 = vpop.f32.mrb[0].mxu0
        %v853 = vadd.f32 %v586, %v852
        %v854 = vpop.f32.mrb[0].mxu0
        %v855 = vadd.f32 %v582, %v854
        %v856 = vpop.f32.mrb[0].mxu0
        %v857 = vadd.f32 %v586, %v856
        %858 = vmatprep.mubr.bf16.mxu0 0
        %859 = vmatmul.mubr.bf16.gmra.mrb[0].mxu0 %v675
        %v860 = vpop.f32.mrb[0].mxu0
        %v861 = vadd.f32 %v582, %v860
        %v862 = vpop.f32.mrb[0].mxu0
        %v863 = vadd.f32 %v586, %v862
        %v864 = vpop.f32.mrb[0].mxu0
        %v865 = vadd.f32 %v582, %v864
        %v866 = vpop.f32.mrb[0].mxu0
        %v867 = vadd.f32 %v586, %v866
        %868 = vmatprep.mubr.bf16.mxu0 0
        %869 = vmatmul.mubr.bf16.gmra.mrb[0].mxu0 %v678
        %v870 = vpop.f32.mrb[0].mxu0
        %v871 = vadd.f32 %v582, %v870
        %v872 = vpop.f32.mrb[0].mxu0
        %v873 = vadd.f32 %v586, %v872
        %v874 = vpop.f32.mrb[0].mxu0
        %v875 = vadd.f32 %v582, %v874
        %v876 = vpop.f32.mrb[0].mxu0
        %v877 = vadd.f32 %v586, %v876
        %878 = vmatprep.mubr.bf16.mxu0 0
        %879 = vmatmul.mubr.bf16.gmra.mrb[0].mxu0 %v681
        %v880 = vpop.f32.mrb[0].mxu0
        %v881 = vadd.f32 %v582, %v880
        %v882 = vpop.f32.mrb[0].mxu0
        %v883 = vadd.f32 %v586, %v882
        %v884 = vpop.f32.mrb[0].mxu0
        %v885 = vadd.f32 %v582, %v884
        %v886 = vpop.f32.mrb[0].mxu0
        %v887 = vadd.f32 %v586, %v886
        %888 = vmatprep.mubr.bf16.mxu0 0
        %889 = vmatmul.mubr.bf16.gmra.mrb[0].mxu0 %v684
        %v890 = vpop.f32.mrb[0].mxu0
        %v891 = vadd.f32 %v582, %v890
        %v892 = vpop.f32.mrb[0].mxu0
        %v893 = vadd.f32 %v586, %v892
        %v894 = vpop.f32.mrb[0].mxu0
        %v895 = vadd.f32 %v582, %v894
        %v896 = vpop.f32.mrb[0].mxu0
        %v897 = vadd.f32 %v586, %v896
        %898 = vmatprep.mubr.bf16.mxu0 0
        %899 = vmatmul.mubr.bf16.gmra.mrb[0].mxu0 %v687
        %v900 = vpop.f32.mrb[0].mxu0
        %v901 = vadd.f32 %v582, %v900
        %v902 = vpop.f32.mrb[0].mxu0
        %v903 = vadd.f32 %v586, %v902
        %v904 = vpop.f32.mrb[0].mxu0
        %v905 = vadd.f32 %v582, %v904
        %v906 = vpop.f32.mrb[0].mxu0
        %v907 = vadd.f32 %v586, %v906
        %908 = vmatprep.mubr.bf16.mxu0 0
        %909 = vmatmul.mubr.bf16.gmra.mrb[0].mxu0 %v690
        %v910 = vpop.f32.mrb[0].mxu0
        %v911 = vadd.f32 %v582, %v910
        %v912 = vpop.f32.mrb[0].mxu0
        %v913 = vadd.f32 %v586, %v912
        %v914 = vpop.f32.mrb[0].mxu0
        %v915 = vadd.f32 %v582, %v914
        %v916 = vpop.f32.mrb[0].mxu0
        %v917 = vadd.f32 %v586, %v916
        %918 = vmatprep.mubr.bf16.mxu0 0
        %919 = vmatmul.mubr.bf16.gmra.mrb[0].mxu0 %v693
        %v920 = vpop.f32.mrb[0].mxu0
        %v921 = vadd.f32 %v582, %v920
        %v922 = vpop.f32.mrb[0].mxu0
        %v923 = vadd.f32 %v586, %v922
        %v924 = vpop.f32.mrb[0].mxu0
        %v925 = vadd.f32 %v582, %v924
        %v926 = vpop.f32.mrb[0].mxu0
        %v927 = vadd.f32 %v586, %v926
        %928 = vmatprep.mubr.bf16.mxu0 0
        %929 = vmatmul.mubr.bf16.gmra.mrb[0].mxu0 %v696
        %v930 = vpop.f32.mrb[0].mxu0
        %v931 = vadd.f32 %v582, %v930
        %v932 = vpop.f32.mrb[0].mxu0
        %v933 = vadd.f32 %v586, %v932
        %v934 = vpop.f32.mrb[0].mxu0
        %v935 = vadd.f32 %v582, %v934
        %v936 = vpop.f32.mrb[0].mxu0
        %v937 = vadd.f32 %v586, %v936
        %938 = vmatprep.mubr.bf16.mxu0 0
        %939 = vmatmul.mubr.bf16.gmra.mrb[0].mxu0 %v699
        %v940 = vpop.f32.mrb[0].mxu0
        %v941 = vadd.f32 %v582, %v940
        %v942 = vpop.f32.mrb[0].mxu0
        %v943 = vadd.f32 %v586, %v942
        %v944 = vpop.f32.mrb[0].mxu0
        %v945 = vadd.f32 %v582, %v944
        %v946 = vpop.f32.mrb[0].mxu0
        %v947 = vadd.f32 %v586, %v946
        %948 = vmatprep.mubr.bf16.mxu0 0
        %949 = vmatmul.mubr.bf16.gmra.mrb[0].mxu0 %v702
        %v950 = vpop.f32.mrb[0].mxu0
        %v951 = vadd.f32 %v582, %v950
        %v952 = vpop.f32.mrb[0].mxu0
        %v953 = vadd.f32 %v586, %v952
        %v954 = vpop.f32.mrb[0].mxu0
        %v955 = vadd.f32 %v582, %v954
        %v956 = vpop.f32.mrb[0].mxu0
        %v957 = vadd.f32 %v586, %v956
        %958 = vmatprep.mubr.bf16.mxu0 0
        %959 = vmatmul.mubr.bf16.gmra.mrb[0].mxu0 %v705
        %v960 = vpop.f32.mrb[0].mxu0
        %v961 = vadd.f32 %v582, %v960
        %v962 = vpop.f32.mrb[0].mxu0
        %v963 = vadd.f32 %v586, %v962
        %v964 = vpop.f32.mrb[0].mxu0
        %v965 = vadd.f32 %v582, %v964
        %v966 = vpop.f32.mrb[0].mxu0
        %v967 = vadd.f32 %v586, %v966
        %968 = vmatprep.mubr.bf16.mxu0 0
        %969 = vmatmul.mubr.bf16.gmra.mrb[0].mxu0 %v708
        %v970 = vpop.f32.mrb[0].mxu0
        %v971 = vadd.f32 %v582, %v970
        %v972 = vpop.f32.mrb[0].mxu0
        %v973 = vadd.f32 %v586, %v972
        %v974 = vpop.f32.mrb[0].mxu0
        %v975 = vadd.f32 %v582, %v974
        %v976 = vpop.f32.mrb[0].mxu0
        %v977 = vadd.f32 %v586, %v976
        %978 = vmatprep.mubr.bf16.mxu0 0
        %979 = vmatmul.mubr.bf16.gmra.mrb[0].mxu0 %v711
        %v980 = vpop.f32.mrb[0].mxu0
        %v981 = vadd.f32 %v582, %v980
        %v982 = vpop.f32.mrb[0].mxu0
        %v983 = vadd.f32 %v586, %v982
        %v984 = vpop.f32.mrb[0].mxu0
        %v985 = vadd.f32 %v582, %v984
        %v986 = vpop.f32.mrb[0].mxu0
        %v987 = vadd.f32 %v586, %v986
        %988 = vmatprep.mubr.bf16.mxu0 0
        %989 = vmatmul.mubr.bf16.gmra.mrb[0].mxu0 %v714
        %v990 = vpop.f32.mrb[0].mxu0
        %v991 = vadd.f32 %v582, %v990
        %v992 = vpop.f32.mrb[0].mxu0
        %v993 = vadd.f32 %v586, %v992
        %v994 = vpop.f32.mrb[0].mxu0
        %v995 = vadd.f32 %v582, %v994
        %v996 = vpop.f32.mrb[0].mxu0
        %v997 = vadd.f32 %v586, %v996
        %998 = vmatprep.mubr.bf16.mxu0 0
        %999 = vmatmul.mubr.bf16.gmra.mrb[0].mxu0 %v717
        %v1000 = vpop.f32.mrb[0].mxu0
        %v1001 = vadd.f32 %v582, %v1000
        %v1002 = vpop.f32.mrb[0].mxu0
        %v1003 = vadd.f32 %v586, %v1002
        %v1004 = vpop.f32.mrb[0].mxu0
        %v1005 = vadd.f32 %v582, %v1004
        %v1006 = vpop.f32.mrb[0].mxu0
        %v1007 = vadd.f32 %v586, %v1006
        %1008 = vmatprep.mubr.bf16.mxu0 0
        %1009 = vmatmul.mubr.bf16.gmra.mrb[0].mxu0 %v720
        %v1010 = vpop.f32.mrb[0].mxu0
        %v1011 = vadd.f32 %v582, %v1010
        %v1012 = vpop.f32.mrb[0].mxu0
        %v1013 = vadd.f32 %v586, %v1012
        %v1014 = vpop.f32.mrb[0].mxu0
        %v1015 = vadd.f32 %v582, %v1014
        %v1016 = vpop.f32.mrb[0].mxu0
        %v1017 = vadd.f32 %v586, %v1016
        %1018 = vmatprep.mubr.bf16.mxu0 0
        %1019 = vmatmul.mubr.bf16.gmra.mrb[0].mxu0 %v723
        %v1020 = vpop.f32.mrb[0].mxu0
        %v1021 = vadd.f32 %v582, %v1020
        %v1022 = vpop.f32.mrb[0].mxu0
        %v1023 = vadd.f32 %v586, %v1022
        %v1024 = vpop.f32.mrb[0].mxu0
        %v1025 = vadd.f32 %v582, %v1024
        %v1026 = vpop.f32.mrb[0].mxu0
        %v1027 = vadd.f32 %v586, %v1026
        %1028 = vmatprep.mubr.bf16.mxu0 0
        %1029 = vmatmul.mubr.bf16.gmra.mrb[0].mxu0 %v726
        %v1030 = vpop.f32.mrb[0].mxu0
        %v1031 = vadd.f32 %v582, %v1030
        %v1032 = vpop.f32.mrb[0].mxu0
        %v1033 = vadd.f32 %v586, %v1032
        %v1034 = vpop.f32.mrb[0].mxu0
        %v1035 = vadd.f32 %v582, %v1034
        %v1036 = vpop.f32.mrb[0].mxu0
        %v1037 = vadd.f32 %v586, %v1036
        %1038 = vmatprep.mubr.bf16.mxu0 0
        %1039 = vmatmul.mubr.bf16.gmra.mrb[0].mxu0 %v729
        %v1040 = vpop.f32.mrb[0].mxu0
        %v1041 = vadd.f32 %v582, %v1040
        %v1042 = vpop.f32.mrb[0].mxu0
        %v1043 = vadd.f32 %v586, %v1042
        %v1044 = vpop.f32.mrb[0].mxu0
        %v1045 = vadd.f32 %v582, %v1044
        %v1046 = vpop.f32.mrb[0].mxu0
        %v1047 = vadd.f32 %v586, %v1046
        %1048 = vmatprep.mubr.bf16.mxu0 0
        %1049 = vmatmul.mubr.bf16.gmra.mrb[0].mxu0 %v732
        %v1050 = vpop.f32.mrb[0].mxu0
        %v1051 = vadd.f32 %v582, %v1050
        %v1052 = vpop.f32.mrb[0].mxu0
        %v1053 = vadd.f32 %v586, %v1052
        %v1054 = vpop.f32.mrb[0].mxu0
        %v1055 = vadd.f32 %v582, %v1054
        %v1056 = vpop.f32.mrb[0].mxu0
        %v1057 = vadd.f32 %v586, %v1056
        %1058 = vmatprep.mubr.bf16.mxu0 0
        %1059 = vmatmul.mubr.bf16.gmra.mrb[0].mxu0 %v735
        %v1060 = vpop.f32.mrb[0].mxu0
        %v1061 = vadd.f32 %v582, %v1060
        %v1062 = vpop.f32.mrb[0].mxu0
        %v1063 = vadd.f32 %v586, %v1062
        %v1064 = vpop.f32.mrb[0].mxu0
        %v1065 = vadd.f32 %v582, %v1064
        %v1066 = vpop.f32.mrb[0].mxu0
        %v1067 = vadd.f32 %v586, %v1066
        %1068 = vmatprep.mubr.bf16.mxu0 0
        %1069 = vmatmul.mubr.bf16.gmra.mrb[0].mxu0 %v738
        %v1070 = vpop.f32.mrb[0].mxu0
        %v1071 = vadd.f32 %v582, %v1070
        %v1072 = vpop.f32.mrb[0].mxu0
        %v1073 = vadd.f32 %v586, %v1072
        %v1074 = vpop.f32.mrb[0].mxu0
        %v1075 = vadd.f32 %v582, %v1074
        %v1076 = vpop.f32.mrb[0].mxu0
        %v1077 = vadd.f32 %v586, %v1076
        %1078 = vmatprep.mubr.bf16.mxu0 0
        %1079 = vmatmul.mubr.bf16.gmra.mrb[0].mxu0 %v741
        %v1080 = vpop.f32.mrb[0].mxu0
        %v1081 = vadd.f32 %v582, %v1080
        %v1082 = vpop.f32.mrb[0].mxu0
        %v1083 = vadd.f32 %v586, %v1082
        %v1084 = vpop.f32.mrb[0].mxu0
        %v1085 = vadd.f32 %v582, %v1084
        %v1086 = vpop.f32.mrb[0].mxu0
        %v1087 = vadd.f32 %v586, %v1086
        %1088 = vmatprep.mubr.bf16.mxu0 0
        %1089 = vmatmul.mubr.bf16.gmra.mrb[0].mxu0 %v744
        %v1090 = vpop.f32.mrb[0].mxu0
        %v1091 = vadd.f32 %v582, %v1090
        %v1092 = vpop.f32.mrb[0].mxu0
        %v1093 = vadd.f32 %v586, %v1092
        %v1094 = vpop.f32.mrb[0].mxu0
        %v1095 = vpop.f32.mrb[0].mxu0
        %1096 = vdwg.mxu0
        %vm1097 = vcmp.gt.f32.partialorder %v781, 0.0
        %vm1098 = vcmp.gt.f32.partialorder %v783, 0.0
        %vm1099 = vcmp.gt.f32.partialorder %v785, 0.0
        %vm1100 = vcmp.gt.f32.partialorder %v787, 0.0
        %vm1101 = vcmp.gt.f32.partialorder %v791, 0.0
        %vm1102 = vcmp.gt.f32.partialorder %v793, 0.0
        %vm1103 = vcmp.gt.f32.partialorder %v795, 0.0
        %vm1104 = vcmp.gt.f32.partialorder %v797, 0.0
        %vm1105 = vcmp.gt.f32.partialorder %v801, 0.0
        %vm1106 = vcmp.gt.f32.partialorder %v803, 0.0
        %vm1107 = vcmp.gt.f32.partialorder %v805, 0.0
        %vm1108 = vcmp.gt.f32.partialorder %v807, 0.0
        %vm1109 = vcmp.gt.f32.partialorder %v811, 0.0
        %vm1110 = vcmp.gt.f32.partialorder %v813, 0.0
        %vm1111 = vcmp.gt.f32.partialorder %v815, 0.0
        %vm1112 = vcmp.gt.f32.partialorder %v817, 0.0
        %vm1113 = vcmp.gt.f32.partialorder %v821, 0.0
        %vm1114 = vcmp.gt.f32.partialorder %v823, 0.0
        %vm1115 = vcmp.gt.f32.partialorder %v825, 0.0
        %vm1116 = vcmp.gt.f32.partialorder %v827, 0.0
        %vm1117 = vcmp.gt.f32.partialorder %v831, 0.0
        %vm1118 = vcmp.gt.f32.partialorder %v833, 0.0
        %vm1119 = vcmp.gt.f32.partialorder %v835, 0.0
        %vm1120 = vcmp.gt.f32.partialorder %v837, 0.0
        %vm1121 = vcmp.gt.f32.partialorder %v841, 0.0
        %vm1122 = vcmp.gt.f32.partialorder %v843, 0.0
        %vm1123 = vcmp.gt.f32.partialorder %v845, 0.0
        %vm1124 = vcmp.gt.f32.partialorder %v847, 0.0
        %vm1125 = vcmp.gt.f32.partialorder %v851, 0.0
        %vm1126 = vcmp.gt.f32.partialorder %v853, 0.0
        %vm1127 = vcmp.gt.f32.partialorder %v855, 0.0
        %vm1128 = vcmp.gt.f32.partialorder %v857, 0.0
        %vm1129 = vcmp.gt.f32.partialorder %v861, 0.0
        %vm1130 = vcmp.gt.f32.partialorder %v863, 0.0
        %vm1131 = vcmp.gt.f32.partialorder %v865, 0.0
        %vm1132 = vcmp.gt.f32.partialorder %v867, 0.0
        %vm1133 = vcmp.gt.f32.partialorder %v871, 0.0
        %vm1134 = vcmp.gt.f32.partialorder %v873, 0.0
        %vm1135 = vcmp.gt.f32.partialorder %v875, 0.0
        %vm1136 = vcmp.gt.f32.partialorder %v877, 0.0
        %vm1137 = vcmp.gt.f32.partialorder %v881, 0.0
        %vm1138 = vcmp.gt.f32.partialorder %v883, 0.0
        %vm1139 = vcmp.gt.f32.partialorder %v885, 0.0
        %vm1140 = vcmp.gt.f32.partialorder %v887, 0.0
        %vm1141 = vcmp.gt.f32.partialorder %v891, 0.0
        %vm1142 = vcmp.gt.f32.partialorder %v893, 0.0
        %vm1143 = vcmp.gt.f32.partialorder %v895, 0.0
        %vm1144 = vcmp.gt.f32.partialorder %v897, 0.0
        %vm1145 = vcmp.gt.f32.partialorder %v901, 0.0
        %vm1146 = vcmp.gt.f32.partialorder %v903, 0.0
        %vm1147 = vcmp.gt.f32.partialorder %v905, 0.0
        %vm1148 = vcmp.gt.f32.partialorder %v907, 0.0
        %vm1149 = vcmp.gt.f32.partialorder %v911, 0.0
        %vm1150 = vcmp.gt.f32.partialorder %v913, 0.0
        %vm1151 = vcmp.gt.f32.partialorder %v915, 0.0
        %vm1152 = vcmp.gt.f32.partialorder %v917, 0.0
        %vm1153 = vcmp.gt.f32.partialorder %v921, 0.0
        %vm1154 = vcmp.gt.f32.partialorder %v923, 0.0
        %vm1155 = vcmp.gt.f32.partialorder %v925, 0.0
        %vm1156 = vcmp.gt.f32.partialorder %v927, 0.0
        %vm1157 = vcmp.gt.f32.partialorder %v931, 0.0
        %vm1158 = vcmp.gt.f32.partialorder %v933, 0.0
        %vm1159 = vcmp.gt.f32.partialorder %v935, 0.0
        %vm1160 = vcmp.gt.f32.partialorder %v937, 0.0
        %vm1161 = vcmp.gt.f32.partialorder %v941, 0.0
        %vm1162 = vcmp.gt.f32.partialorder %v943, 0.0
        %vm1163 = vcmp.gt.f32.partialorder %v945, 0.0
        %vm1164 = vcmp.gt.f32.partialorder %v947, 0.0
        %vm1165 = vcmp.gt.f32.partialorder %v951, 0.0
        %vm1166 = vcmp.gt.f32.partialorder %v953, 0.0
        %vm1167 = vcmp.gt.f32.partialorder %v955, 0.0
        %vm1168 = vcmp.gt.f32.partialorder %v957, 0.0
        %vm1169 = vcmp.gt.f32.partialorder %v961, 0.0
        %vm1170 = vcmp.gt.f32.partialorder %v963, 0.0
        %vm1171 = vcmp.gt.f32.partialorder %v965, 0.0
        %vm1172 = vcmp.gt.f32.partialorder %v967, 0.0
        %vm1173 = vcmp.gt.f32.partialorder %v971, 0.0
        %vm1174 = vcmp.gt.f32.partialorder %v973, 0.0
        %vm1175 = vcmp.gt.f32.partialorder %v975, 0.0
        %vm1176 = vcmp.gt.f32.partialorder %v977, 0.0
        %vm1177 = vcmp.gt.f32.partialorder %v981, 0.0
        %vm1178 = vcmp.gt.f32.partialorder %v983, 0.0
        %vm1179 = vcmp.gt.f32.partialorder %v985, 0.0
        %vm1180 = vcmp.gt.f32.partialorder %v987, 0.0
        %vm1181 = vcmp.gt.f32.partialorder %v991, 0.0
        %vm1182 = vcmp.gt.f32.partialorder %v993, 0.0
        %vm1183 = vcmp.gt.f32.partialorder %v995, 0.0
        %vm1184 = vcmp.gt.f32.partialorder %v997, 0.0
        %vm1185 = vcmp.gt.f32.partialorder %v1001, 0.0
        %vm1186 = vcmp.gt.f32.partialorder %v1003, 0.0
        %vm1187 = vcmp.gt.f32.partialorder %v1005, 0.0
        %vm1188 = vcmp.gt.f32.partialorder %v1007, 0.0
        %vm1189 = vcmp.gt.f32.partialorder %v1011, 0.0
        %vm1190 = vcmp.gt.f32.partialorder %v1013, 0.0
        %vm1191 = vcmp.gt.f32.partialorder %v1015, 0.0
        %vm1192 = vcmp.gt.f32.partialorder %v1017, 0.0
        %vm1193 = vcmp.gt.f32.partialorder %v1021, 0.0
        %vm1194 = vcmp.gt.f32.partialorder %v1023, 0.0
        %vm1195 = vcmp.gt.f32.partialorder %v1025, 0.0
        %vm1196 = vcmp.gt.f32.partialorder %v1027, 0.0
        %vm1197 = vcmp.gt.f32.partialorder %v1031, 0.0
        %vm1198 = vcmp.gt.f32.partialorder %v1033, 0.0
        %vm1199 = vcmp.gt.f32.partialorder %v1035, 0.0
        %vm1200 = vcmp.gt.f32.partialorder %v1037, 0.0
        %vm1201 = vcmp.gt.f32.partialorder %v1041, 0.0
        %vm1202 = vcmp.gt.f32.partialorder %v1043, 0.0
        %vm1203 = vcmp.gt.f32.partialorder %v1045, 0.0
        %vm1204 = vcmp.gt.f32.partialorder %v1047, 0.0
        %vm1205 = vcmp.gt.f32.partialorder %v1051, 0.0
        %vm1206 = vcmp.gt.f32.partialorder %v1053, 0.0
        %vm1207 = vcmp.gt.f32.partialorder %v1055, 0.0
        %vm1208 = vcmp.gt.f32.partialorder %v1057, 0.0
        %vm1209 = vcmp.gt.f32.partialorder %v1061, 0.0
        %vm1210 = vcmp.gt.f32.partialorder %v1063, 0.0
        %vm1211 = vcmp.gt.f32.partialorder %v1065, 0.0
        %vm1212 = vcmp.gt.f32.partialorder %v1067, 0.0
        %vm1213 = vcmp.gt.f32.partialorder %v1071, 0.0
        %vm1214 = vcmp.gt.f32.partialorder %v1073, 0.0
        %vm1215 = vcmp.gt.f32.partialorder %v1075, 0.0
        %vm1216 = vcmp.gt.f32.partialorder %v1077, 0.0
        %vm1217 = vcmp.gt.f32.partialorder %v1081, 0.0
        %vm1218 = vcmp.gt.f32.partialorder %v1083, 0.0
        %vm1219 = vcmp.gt.f32.partialorder %v1085, 0.0
        %vm1220 = vcmp.gt.f32.partialorder %v1087, 0.0
        %vm1221 = vcmp.gt.f32.partialorder %v1091, 0.0
        %vm1222 = vcmp.gt.f32.partialorder %v1093, 0.0
        %v1223 = vmul.f32 %v781, 1.442695
        %v1224 = vpow.pop %v1223
        %v1225 = vmul.f32 %v783, 1.442695
        %v1226 = vpow.pop %v1225
        %v1227 = vmul.f32 %v785, 1.442695
        %v1228 = vpow.pop %v1227
        %v1229 = vmul.f32 %v787, 1.442695
        %v1230 = vpow.pop %v1229
        %v1231 = vmul.f32 %v791, 1.442695
        %v1232 = vpow.pop %v1231
        %v1233 = vmul.f32 %v793, 1.442695
        %v1234 = vpow.pop %v1233
        %v1235 = vmul.f32 %v795, 1.442695
        %v1236 = vpow.pop %v1235
        %v1237 = vmul.f32 %v797, 1.442695
        %v1238 = vpow.pop %v1237
        %v1239 = vmul.f32 %v801, 1.442695
        %v1240 = vpow.pop %v1239
        %v1241 = vmul.f32 %v803, 1.442695
        %v1242 = vpow.pop %v1241
        %v1243 = vmul.f32 %v805, 1.442695
        %v1244 = vpow.pop %v1243
        %v1245 = vmul.f32 %v807, 1.442695
        %v1246 = vpow.pop %v1245
        %v1247 = vmul.f32 %v811, 1.442695
        %v1248 = vpow.pop %v1247
        %v1249 = vmul.f32 %v813, 1.442695
        %v1250 = vpow.pop %v1249
        %v1251 = vmul.f32 %v815, 1.442695
        %v1252 = vpow.pop %v1251
        %v1253 = vmul.f32 %v817, 1.442695
        %v1254 = vpow.pop %v1253
        %v1255 = vmul.f32 %v821, 1.442695
        %v1256 = vpow.pop %v1255
        %v1257 = vmul.f32 %v823, 1.442695
        %v1258 = vpow.pop %v1257
        %v1259 = vmul.f32 %v825, 1.442695
        %v1260 = vpow.pop %v1259
        %v1261 = vmul.f32 %v827, 1.442695
        %v1262 = vpow.pop %v1261
        %v1263 = vmul.f32 %v831, 1.442695
        %v1264 = vpow.pop %v1263
        %v1265 = vmul.f32 %v833, 1.442695
        %v1266 = vpow.pop %v1265
        %v1267 = vmul.f32 %v835, 1.442695
        %v1268 = vpow.pop %v1267
        %v1269 = vmul.f32 %v837, 1.442695
        %v1270 = vpow.pop %v1269
        %v1271 = vmul.f32 %v841, 1.442695
        %v1272 = vpow.pop %v1271
        %v1273 = vmul.f32 %v843, 1.442695
        %v1274 = vpow.pop %v1273
        %v1275 = vmul.f32 %v845, 1.442695
        %v1276 = vpow.pop %v1275
        %v1277 = vmul.f32 %v847, 1.442695
        %v1278 = vpow.pop %v1277
        %v1279 = vmul.f32 %v851, 1.442695
        %v1280 = vpow.pop %v1279
        %v1281 = vmul.f32 %v853, 1.442695
        %v1282 = vpow.pop %v1281
        %v1283 = vmul.f32 %v855, 1.442695
        %v1284 = vpow.pop %v1283
        %v1285 = vmul.f32 %v857, 1.442695
        %v1286 = vpow.pop %v1285
        %v1287 = vmul.f32 %v861, 1.442695
        %v1288 = vpow.pop %v1287
        %v1289 = vmul.f32 %v863, 1.442695
        %v1290 = vpow.pop %v1289
        %v1291 = vmul.f32 %v865, 1.442695
        %v1292 = vpow.pop %v1291
        %v1293 = vmul.f32 %v867, 1.442695
        %v1294 = vpow.pop %v1293
        %v1295 = vmul.f32 %v871, 1.442695
        %v1296 = vpow.pop %v1295
        %v1297 = vmul.f32 %v873, 1.442695
        %v1298 = vpow.pop %v1297
        %v1299 = vmul.f32 %v875, 1.442695
        %v1300 = vpow.pop %v1299
        %v1301 = vmul.f32 %v877, 1.442695
        %v1302 = vpow.pop %v1301
        %v1303 = vmul.f32 %v881, 1.442695
        %v1304 = vpow.pop %v1303
        %v1305 = vmul.f32 %v883, 1.442695
        %v1306 = vpow.pop %v1305
        %v1307 = vmul.f32 %v885, 1.442695
        %v1308 = vpow.pop %v1307
        %v1309 = vmul.f32 %v887, 1.442695
        %v1310 = vpow.pop %v1309
        %v1311 = vmul.f32 %v891, 1.442695
        %v1312 = vpow.pop %v1311
        %v1313 = vmul.f32 %v893, 1.442695
        %v1314 = vpow.pop %v1313
        %v1315 = vmul.f32 %v895, 1.442695
        %v1316 = vpow.pop %v1315
        %v1317 = vmul.f32 %v897, 1.442695
        %v1318 = vpow.pop %v1317
        %v1319 = vmul.f32 %v901, 1.442695
        %v1320 = vpow.pop %v1319
        %v1321 = vmul.f32 %v903, 1.442695
        %v1322 = vpow.pop %v1321
        %v1323 = vmul.f32 %v905, 1.442695
        %v1324 = vpow.pop %v1323
        %v1325 = vmul.f32 %v907, 1.442695
        %v1326 = vpow.pop %v1325
        %v1327 = vmul.f32 %v911, 1.442695
        %v1328 = vpow.pop %v1327
        %v1329 = vmul.f32 %v913, 1.442695
        %v1330 = vpow.pop %v1329
        %v1331 = vmul.f32 %v915, 1.442695
        %v1332 = vpow.pop %v1331
        %v1333 = vmul.f32 %v917, 1.442695
        %v1334 = vpow.pop %v1333
        %v1335 = vmul.f32 %v921, 1.442695
        %v1336 = vpow.pop %v1335
        %v1337 = vmul.f32 %v923, 1.442695
        %v1338 = vpow.pop %v1337
        %v1339 = vmul.f32 %v925, 1.442695
        %v1340 = vpow.pop %v1339
        %v1341 = vmul.f32 %v927, 1.442695
        %v1342 = vpow.pop %v1341
        %v1343 = vmul.f32 %v931, 1.442695
        %v1344 = vpow.pop %v1343
        %v1345 = vmul.f32 %v933, 1.442695
        %v1346 = vpow.pop %v1345
        %v1347 = vmul.f32 %v935, 1.442695
        %v1348 = vpow.pop %v1347
        %v1349 = vmul.f32 %v937, 1.442695
        %v1350 = vpow.pop %v1349
        %v1351 = vmul.f32 %v941, 1.442695
        %v1352 = vpow.pop %v1351
        %v1353 = vmul.f32 %v943, 1.442695
        %v1354 = vpow.pop %v1353
        %v1355 = vmul.f32 %v945, 1.442695
        %v1356 = vpow.pop %v1355
        %v1357 = vmul.f32 %v947, 1.442695
        %v1358 = vpow.pop %v1357
        %v1359 = vmul.f32 %v951, 1.442695
        %v1360 = vpow.pop %v1359
        %v1361 = vmul.f32 %v953, 1.442695
        %v1362 = vpow.pop %v1361
        %v1363 = vmul.f32 %v955, 1.442695
        %v1364 = vpow.pop %v1363
        %v1365 = vmul.f32 %v957, 1.442695
        %v1366 = vpow.pop %v1365
        %v1367 = vmul.f32 %v961, 1.442695
        %v1368 = vpow.pop %v1367
        %v1369 = vmul.f32 %v963, 1.442695
        %v1370 = vpow.pop %v1369
        %v1371 = vmul.f32 %v965, 1.442695
        %v1372 = vpow.pop %v1371
        %v1373 = vmul.f32 %v967, 1.442695
        %v1374 = vpow.pop %v1373
        %v1375 = vmul.f32 %v971, 1.442695
        %v1376 = vpow.pop %v1375
        %v1377 = vmul.f32 %v973, 1.442695
        %v1378 = vpow.pop %v1377
        %v1379 = vmul.f32 %v975, 1.442695
        %v1380 = vpow.pop %v1379
        %v1381 = vmul.f32 %v977, 1.442695
        %v1382 = vpow.pop %v1381
        %v1383 = vmul.f32 %v981, 1.442695
        %v1384 = vpow.pop %v1383
        %v1385 = vmul.f32 %v983, 1.442695
        %v1386 = vpow.pop %v1385
        %v1387 = vmul.f32 %v985, 1.442695
        %v1388 = vpow.pop %v1387
        %v1389 = vmul.f32 %v987, 1.442695
        %v1390 = vpow.pop %v1389
        %v1391 = vmul.f32 %v991, 1.442695
        %v1392 = vpow.pop %v1391
        %v1393 = vmul.f32 %v993, 1.442695
        %v1394 = vpow.pop %v1393
        %v1395 = vmul.f32 %v995, 1.442695
        %v1396 = vpow.pop %v1395
        %v1397 = vmul.f32 %v997, 1.442695
        %v1398 = vpow.pop %v1397
        %v1399 = vmul.f32 %v1001, 1.442695
        %v1400 = vpow.pop %v1399
        %v1401 = vmul.f32 %v1003, 1.442695
        %v1402 = vpow.pop %v1401
        %v1403 = vmul.f32 %v1005, 1.442695
        %v1404 = vpow.pop %v1403
        %v1405 = vmul.f32 %v1007, 1.442695
        %v1406 = vpow.pop %v1405
        %v1407 = vmul.f32 %v1011, 1.442695
        %v1408 = vpow.pop %v1407
        %v1409 = vmul.f32 %v1013, 1.442695
        %v1410 = vpow.pop %v1409
        %v1411 = vmul.f32 %v1015, 1.442695
        %v1412 = vpow.pop %v1411
        %v1413 = vmul.f32 %v1017, 1.442695
        %v1414 = vpow.pop %v1413
        %v1415 = vmul.f32 %v1021, 1.442695
        %v1416 = vpow.pop %v1415
        %v1417 = vmul.f32 %v1023, 1.442695
        %v1418 = vpow.pop %v1417
        %v1419 = vmul.f32 %v1025, 1.442695
        %v1420 = vpow.pop %v1419
        %v1421 = vmul.f32 %v1027, 1.442695
        %v1422 = vpow.pop %v1421
        %v1423 = vmul.f32 %v1031, 1.442695
        %v1424 = vpow.pop %v1423
        %v1425 = vmul.f32 %v1033, 1.442695
        %v1426 = vpow.pop %v1425
        %v1427 = vmul.f32 %v1035, 1.442695
        %v1428 = vpow.pop %v1427
        %v1429 = vmul.f32 %v1037, 1.442695
        %v1430 = vpow.pop %v1429
        %v1431 = vmul.f32 %v1041, 1.442695
        %v1432 = vpow.pop %v1431
        %v1433 = vmul.f32 %v1043, 1.442695
        %v1434 = vpow.pop %v1433
        %v1435 = vmul.f32 %v1045, 1.442695
        %v1436 = vpow.pop %v1435
        %v1437 = vmul.f32 %v1047, 1.442695
        %v1438 = vpow.pop %v1437
        %v1439 = vmul.f32 %v1051, 1.442695
        %v1440 = vpow.pop %v1439
        %v1441 = vmul.f32 %v1053, 1.442695
        %v1442 = vpow.pop %v1441
        %v1443 = vmul.f32 %v1055, 1.442695
        %v1444 = vpow.pop %v1443
        %v1445 = vmul.f32 %v1057, 1.442695
        %v1446 = vpow.pop %v1445
        %v1447 = vmul.f32 %v1061, 1.442695
        %v1448 = vpow.pop %v1447
        %v1449 = vmul.f32 %v1063, 1.442695
        %v1450 = vpow.pop %v1449
        %v1451 = vmul.f32 %v1065, 1.442695
        %v1452 = vpow.pop %v1451
        %v1453 = vmul.f32 %v1067, 1.442695
        %v1454 = vpow.pop %v1453
        %v1455 = vmul.f32 %v1071, 1.442695
        %v1456 = vpow.pop %v1455
        %v1457 = vmul.f32 %v1073, 1.442695
        %v1458 = vpow.pop %v1457
        %v1459 = vmul.f32 %v1075, 1.442695
        %v1460 = vpow.pop %v1459
        %v1461 = vmul.f32 %v1077, 1.442695
        %v1462 = vpow.pop %v1461
        %v1463 = vmul.f32 %v1081, 1.442695
        %v1464 = vpow.pop %v1463
        %v1465 = vmul.f32 %v1083, 1.442695
        %v1466 = vpow.pop %v1465
        %v1467 = vmul.f32 %v1085, 1.442695
        %v1468 = vpow.pop %v1467
        %v1469 = vmul.f32 %v1087, 1.442695
        %v1470 = vpow.pop %v1469
        %v1471 = vmul.f32 %v1091, 1.442695
        %v1472 = vpow.pop %v1471
        %v1473 = vmul.f32 %v1093, 1.442695
        %v1474 = vpow.pop %v1473
        %v1475 = vsub.f32 %v1224, 1.0
        %v1476 = vsub.f32 %v1226, 1.0
        %v1477 = vsub.f32 %v1228, 1.0
        %v1478 = vsub.f32 %v1230, 1.0
        %v1479 = vsub.f32 %v1232, 1.0
        %v1480 = vsub.f32 %v1234, 1.0
        %v1481 = vsub.f32 %v1236, 1.0
        %v1482 = vsub.f32 %v1238, 1.0
        %v1483 = vsub.f32 %v1240, 1.0
        %v1484 = vsub.f32 %v1242, 1.0
        %v1485 = vsub.f32 %v1244, 1.0
        %v1486 = vsub.f32 %v1246, 1.0
        %v1487 = vsub.f32 %v1248, 1.0
        %v1488 = vsub.f32 %v1250, 1.0
        %v1489 = vsub.f32 %v1252, 1.0
        %v1490 = vsub.f32 %v1254, 1.0
        %v1491 = vsub.f32 %v1256, 1.0
        %v1492 = vsub.f32 %v1258, 1.0
        %v1493 = vsub.f32 %v1260, 1.0
        %v1494 = vsub.f32 %v1262, 1.0
        %v1495 = vsub.f32 %v1264, 1.0
        %v1496 = vsub.f32 %v1266, 1.0
        %v1497 = vsub.f32 %v1268, 1.0
        %v1498 = vsub.f32 %v1270, 1.0
        %v1499 = vsub.f32 %v1272, 1.0
        %v1500 = vsub.f32 %v1274, 1.0
        %v1501 = vsub.f32 %v1276, 1.0
        %v1502 = vsub.f32 %v1278, 1.0
        %v1503 = vsub.f32 %v1280, 1.0
        %v1504 = vsub.f32 %v1282, 1.0
        %v1505 = vsub.f32 %v1284, 1.0
        %v1506 = vsub.f32 %v1286, 1.0
        %v1507 = vsub.f32 %v1288, 1.0
        %v1508 = vsub.f32 %v1290, 1.0
        %v1509 = vsub.f32 %v1292, 1.0
        %v1510 = vsub.f32 %v1294, 1.0
        %v1511 = vsub.f32 %v1296, 1.0
        %v1512 = vsub.f32 %v1298, 1.0
        %v1513 = vsub.f32 %v1300, 1.0
        %v1514 = vsub.f32 %v1302, 1.0
        %v1515 = vsub.f32 %v1304, 1.0
        %v1516 = vsub.f32 %v1306, 1.0
        %v1517 = vsub.f32 %v1308, 1.0
        %v1518 = vsub.f32 %v1310, 1.0
        %v1519 = vsub.f32 %v1312, 1.0
        %v1520 = vsub.f32 %v1314, 1.0
        %v1521 = vsub.f32 %v1316, 1.0
        %v1522 = vsub.f32 %v1318, 1.0
        %v1523 = vsub.f32 %v1320, 1.0
        %v1524 = vsub.f32 %v1322, 1.0
        %v1525 = vsub.f32 %v1324, 1.0
        %v1526 = vsub.f32 %v1326, 1.0
        %v1527 = vsub.f32 %v1328, 1.0
        %v1528 = vsub.f32 %v1330, 1.0
        %v1529 = vsub.f32 %v1332, 1.0
        %v1530 = vsub.f32 %v1334, 1.0
        %v1531 = vsub.f32 %v1336, 1.0
        %v1532 = vsub.f32 %v1338, 1.0
        %v1533 = vsub.f32 %v1340, 1.0
        %v1534 = vsub.f32 %v1342, 1.0
        %v1535 = vsub.f32 %v1344, 1.0
        %v1536 = vsub.f32 %v1346, 1.0
        %v1537 = vsub.f32 %v1348, 1.0
        %v1538 = vsub.f32 %v1350, 1.0
        %v1539 = vsub.f32 %v1352, 1.0
        %v1540 = vsub.f32 %v1354, 1.0
        %v1541 = vsub.f32 %v1356, 1.0
        %v1542 = vsub.f32 %v1358, 1.0
        %v1543 = vsub.f32 %v1360, 1.0
        %v1544 = vsub.f32 %v1362, 1.0
        %v1545 = vsub.f32 %v1364, 1.0
        %v1546 = vsub.f32 %v1366, 1.0
        %v1547 = vsub.f32 %v1368, 1.0
        %v1548 = vsub.f32 %v1370, 1.0
        %v1549 = vsub.f32 %v1372, 1.0
        %v1550 = vsub.f32 %v1374, 1.0
        %v1551 = vsub.f32 %v1376, 1.0
        %v1552 = vsub.f32 %v1378, 1.0
        %v1553 = vsub.f32 %v1380, 1.0
        %v1554 = vsub.f32 %v1382, 1.0
        %v1555 = vsub.f32 %v1384, 1.0
        %v1556 = vsub.f32 %v1386, 1.0
        %v1557 = vsub.f32 %v1388, 1.0
        %v1558 = vsub.f32 %v1390, 1.0
        %v1559 = vsub.f32 %v1392, 1.0
        %v1560 = vsub.f32 %v1394, 1.0
        %v1561 = vsub.f32 %v1396, 1.0
        %v1562 = vsub.f32 %v1398, 1.0
        %v1563 = vsub.f32 %v1400, 1.0
        %v1564 = vsub.f32 %v1402, 1.0
        %v1565 = vsub.f32 %v1404, 1.0
        %v1566 = vsub.f32 %v1406, 1.0
        %v1567 = vsub.f32 %v1408, 1.0
        %v1568 = vsub.f32 %v1410, 1.0
        %v1569 = vsub.f32 %v1412, 1.0
        %v1570 = vsub.f32 %v1414, 1.0
        %v1571 = vsub.f32 %v1416, 1.0
        %v1572 = vsub.f32 %v1418, 1.0
        %v1573 = vsub.f32 %v1420, 1.0
        %v1574 = vsub.f32 %v1422, 1.0
        %v1575 = vsub.f32 %v1424, 1.0
        %v1576 = vsub.f32 %v1426, 1.0
        %v1577 = vsub.f32 %v1428, 1.0
        %v1578 = vsub.f32 %v1430, 1.0
        %v1579 = vsub.f32 %v1432, 1.0
        %v1580 = vsub.f32 %v1434, 1.0
        %v1581 = vsub.f32 %v1436, 1.0
        %v1582 = vsub.f32 %v1438, 1.0
        %v1583 = vsub.f32 %v1440, 1.0
        %v1584 = vsub.f32 %v1442, 1.0
        %v1585 = vsub.f32 %v1444, 1.0
        %v1586 = vsub.f32 %v1446, 1.0
        %v1587 = vsub.f32 %v1448, 1.0
        %v1588 = vsub.f32 %v1450, 1.0
        %v1589 = vsub.f32 %v1452, 1.0
        %v1590 = vsub.f32 %v1454, 1.0
        %v1591 = vsub.f32 %v1456, 1.0
        %v1592 = vsub.f32 %v1458, 1.0
        %v1593 = vsub.f32 %v1460, 1.0
        %v1594 = vsub.f32 %v1462, 1.0
        %v1595 = vsub.f32 %v1464, 1.0
        %v1596 = vsub.f32 %v1466, 1.0
        %v1597 = vsub.f32 %v1468, 1.0
        %v1598 = vsub.f32 %v1470, 1.0
        %v1599 = vsub.f32 %v1472, 1.0
        %v1600 = vsub.f32 %v1474, 1.0
        %v1601 = vsel %vm1097, %v781, %v1475
        %v1602 = vsel %vm1098, %v783, %v1476
        %v1603 = vsel %vm1099, %v785, %v1477
        %v1604 = vsel %vm1100, %v787, %v1478
        %v1605 = vsel %vm1101, %v791, %v1479
        %v1606 = vsel %vm1102, %v793, %v1480
        %v1607 = vsel %vm1103, %v795, %v1481
        %v1608 = vsel %vm1104, %v797, %v1482
        %v1609 = vsel %vm1105, %v801, %v1483
        %v1610 = vsel %vm1106, %v803, %v1484
        %v1611 = vsel %vm1107, %v805, %v1485
        %v1612 = vsel %vm1108, %v807, %v1486
        %v1613 = vsel %vm1109, %v811, %v1487
        %v1614 = vsel %vm1110, %v813, %v1488
        %v1615 = vsel %vm1111, %v815, %v1489
        %v1616 = vsel %vm1112, %v817, %v1490
        %v1617 = vsel %vm1113, %v821, %v1491
        %v1618 = vsel %vm1114, %v823, %v1492
        %v1619 = vsel %vm1115, %v825, %v1493
        %v1620 = vsel %vm1116, %v827, %v1494
        %v1621 = vsel %vm1117, %v831, %v1495
        %v1622 = vsel %vm1118, %v833, %v1496
        %v1623 = vsel %vm1119, %v835, %v1497
        %v1624 = vsel %vm1120, %v837, %v1498
        %v1625 = vsel %vm1121, %v841, %v1499
        %v1626 = vsel %vm1122, %v843, %v1500
        %v1627 = vsel %vm1123, %v845, %v1501
        %v1628 = vsel %vm1124, %v847, %v1502
        %v1629 = vsel %vm1125, %v851, %v1503
        %v1630 = vsel %vm1126, %v853, %v1504
        %v1631 = vsel %vm1127, %v855, %v1505
        %v1632 = vsel %vm1128, %v857, %v1506
        %v1633 = vsel %vm1129, %v861, %v1507
        %v1634 = vsel %vm1130, %v863, %v1508
        %v1635 = vsel %vm1131, %v865, %v1509
        %v1636 = vsel %vm1132, %v867, %v1510
        %v1637 = vsel %vm1133, %v871, %v1511
        %v1638 = vsel %vm1134, %v873, %v1512
        %v1639 = vsel %vm1135, %v875, %v1513
        %v1640 = vsel %vm1136, %v877, %v1514
        %v1641 = vsel %vm1137, %v881, %v1515
        %v1642 = vsel %vm1138, %v883, %v1516
        %v1643 = vsel %vm1139, %v885, %v1517
        %v1644 = vsel %vm1140, %v887, %v1518
        %v1645 = vsel %vm1141, %v891, %v1519
        %v1646 = vsel %vm1142, %v893, %v1520
        %v1647 = vsel %vm1143, %v895, %v1521
        %v1648 = vsel %vm1144, %v897, %v1522
        %v1649 = vsel %vm1145, %v901, %v1523
        %v1650 = vsel %vm1146, %v903, %v1524
        %v1651 = vsel %vm1147, %v905, %v1525
        %v1652 = vsel %vm1148, %v907, %v1526
        %v1653 = vsel %vm1149, %v911, %v1527
        %v1654 = vsel %vm1150, %v913, %v1528
        %v1655 = vsel %vm1151, %v915, %v1529
        %v1656 = vsel %vm1152, %v917, %v1530
        %v1657 = vsel %vm1153, %v921, %v1531
        %v1658 = vsel %vm1154, %v923, %v1532
        %v1659 = vsel %vm1155, %v925, %v1533
        %v1660 = vsel %vm1156, %v927, %v1534
        %v1661 = vsel %vm1157, %v931, %v1535
        %v1662 = vsel %vm1158, %v933, %v1536
        %v1663 = vsel %vm1159, %v935, %v1537
        %v1664 = vsel %vm1160, %v937, %v1538
        %v1665 = vsel %vm1161, %v941, %v1539
        %v1666 = vsel %vm1162, %v943, %v1540
        %v1667 = vsel %vm1163, %v945, %v1541
        %v1668 = vsel %vm1164, %v947, %v1542
        %v1669 = vsel %vm1165, %v951, %v1543
        %v1670 = vsel %vm1166, %v953, %v1544
        %v1671 = vsel %vm1167, %v955, %v1545
        %v1672 = vsel %vm1168, %v957, %v1546
        %v1673 = vsel %vm1169, %v961, %v1547
        %v1674 = vsel %vm1170, %v963, %v1548
        %v1675 = vsel %vm1171, %v965, %v1549
        %v1676 = vsel %vm1172, %v967, %v1550
        %v1677 = vsel %vm1173, %v971, %v1551
        %v1678 = vsel %vm1174, %v973, %v1552
        %v1679 = vsel %vm1175, %v975, %v1553
        %v1680 = vsel %vm1176, %v977, %v1554
        %v1681 = vsel %vm1177, %v981, %v1555
        %v1682 = vsel %vm1178, %v983, %v1556
        %v1683 = vsel %vm1179, %v985, %v1557
        %v1684 = vsel %vm1180, %v987, %v1558
        %v1685 = vsel %vm1181, %v991, %v1559
        %v1686 = vsel %vm1182, %v993, %v1560
        %v1687 = vsel %vm1183, %v995, %v1561
        %v1688 = vsel %vm1184, %v997, %v1562
        %v1689 = vsel %vm1185, %v1001, %v1563
        %v1690 = vsel %vm1186, %v1003, %v1564
        %v1691 = vsel %vm1187, %v1005, %v1565
        %v1692 = vsel %vm1188, %v1007, %v1566
        %v1693 = vsel %vm1189, %v1011, %v1567
        %v1694 = vsel %vm1190, %v1013, %v1568
        %v1695 = vsel %vm1191, %v1015, %v1569
        %v1696 = vsel %vm1192, %v1017, %v1570
        %v1697 = vsel %vm1193, %v1021, %v1571
        %v1698 = vsel %vm1194, %v1023, %v1572
        %v1699 = vsel %vm1195, %v1025, %v1573
        %v1700 = vsel %vm1196, %v1027, %v1574
        %v1701 = vsel %vm1197, %v1031, %v1575
        %v1702 = vsel %vm1198, %v1033, %v1576
        %v1703 = vsel %vm1199, %v1035, %v1577
        %v1704 = vsel %vm1200, %v1037, %v1578
        %v1705 = vsel %vm1201, %v1041, %v1579
        %v1706 = vsel %vm1202, %v1043, %v1580
        %v1707 = vsel %vm1203, %v1045, %v1581
        %v1708 = vsel %vm1204, %v1047, %v1582
        %v1709 = vsel %vm1205, %v1051, %v1583
        %v1710 = vsel %vm1206, %v1053, %v1584
        %v1711 = vsel %vm1207, %v1055, %v1585
        %v1712 = vsel %vm1208, %v1057, %v1586
        %v1713 = vsel %vm1209, %v1061, %v1587
        %v1714 = vsel %vm1210, %v1063, %v1588
        %v1715 = vsel %vm1211, %v1065, %v1589
        %v1716 = vsel %vm1212, %v1067, %v1590
        %v1717 = vsel %vm1213, %v1071, %v1591
        %v1718 = vsel %vm1214, %v1073, %v1592
        %v1719 = vsel %vm1215, %v1075, %v1593
        %v1720 = vsel %vm1216, %v1077, %v1594
        %v1721 = vsel %vm1217, %v1081, %v1595
        %v1722 = vsel %vm1218, %v1083, %v1596
        %v1723 = vsel %vm1219, %v1085, %v1597
        %v1724 = vsel %vm1220, %v1087, %v1598
        %v1725 = vsel %vm1221, %v1091, %v1599
        %v1726 = vsel %vm1222, %v1093, %v1600
        %v1727 = vpack.c.bf16 %v1603, %v1601
        %v1728 = vpack.c.bf16 %v1604, %v1602
        %v1729 = vpack.c.bf16 %v1607, %v1605
        %v1730 = vpack.c.bf16 %v1608, %v1606
        %v1731 = vpack.c.bf16 %v1611, %v1609
        %v1732 = vpack.c.bf16 %v1612, %v1610
        %v1733 = vpack.c.bf16 %v1615, %v1613
        %v1734 = vpack.c.bf16 %v1616, %v1614
        %v1735 = vpack.c.bf16 %v1619, %v1617
        %v1736 = vpack.c.bf16 %v1620, %v1618
        %v1737 = vpack.c.bf16 %v1623, %v1621
        %v1738 = vpack.c.bf16 %v1624, %v1622
        %v1739 = vpack.c.bf16 %v1627, %v1625
        %v1740 = vpack.c.bf16 %v1628, %v1626
        %v1741 = vpack.c.bf16 %v1631, %v1629
        %v1742 = vpack.c.bf16 %v1632, %v1630
        %v1743 = vpack.c.bf16 %v1635, %v1633
        %v1744 = vpack.c.bf16 %v1636, %v1634
        %v1745 = vpack.c.bf16 %v1639, %v1637
        %v1746 = vpack.c.bf16 %v1640, %v1638
        %v1747 = vpack.c.bf16 %v1643, %v1641
        %v1748 = vpack.c.bf16 %v1644, %v1642
        %v1749 = vpack.c.bf16 %v1647, %v1645
        %v1750 = vpack.c.bf16 %v1648, %v1646
        %v1751 = vpack.c.bf16 %v1651, %v1649
        %v1752 = vpack.c.bf16 %v1652, %v1650
        %v1753 = vpack.c.bf16 %v1655, %v1653
        %v1754 = vpack.c.bf16 %v1656, %v1654
        %v1755 = vpack.c.bf16 %v1659, %v1657
        %v1756 = vpack.c.bf16 %v1660, %v1658
        %v1757 = vpack.c.bf16 %v1663, %v1661
        %v1758 = vpack.c.bf16 %v1664, %v1662
        %v1759 = vpack.c.bf16 %v1667, %v1665
        %v1760 = vpack.c.bf16 %v1668, %v1666
        %v1761 = vpack.c.bf16 %v1671, %v1669
        %v1762 = vpack.c.bf16 %v1672, %v1670
        %v1763 = vpack.c.bf16 %v1675, %v1673
        %v1764 = vpack.c.bf16 %v1676, %v1674
        %v1765 = vpack.c.bf16 %v1679, %v1677
        %v1766 = vpack.c.bf16 %v1680, %v1678
        %v1767 = vpack.c.bf16 %v1683, %v1681
        %v1768 = vpack.c.bf16 %v1684, %v1682
        %v1769 = vpack.c.bf16 %v1687, %v1685
        %v1770 = vpack.c.bf16 %v1688, %v1686
        %v1771 = vpack.c.bf16 %v1691, %v1689
        %v1772 = vpack.c.bf16 %v1692, %v1690
        %v1773 = vpack.c.bf16 %v1695, %v1693
        %v1774 = vpack.c.bf16 %v1696, %v1694
        %v1775 = vpack.c.bf16 %v1699, %v1697
        %v1776 = vpack.c.bf16 %v1700, %v1698
        %v1777 = vpack.c.bf16 %v1703, %v1701
        %v1778 = vpack.c.bf16 %v1704, %v1702
        %v1779 = vpack.c.bf16 %v1707, %v1705
        %v1780 = vpack.c.bf16 %v1708, %v1706
        %v1781 = vpack.c.bf16 %v1711, %v1709
        %v1782 = vpack.c.bf16 %v1712, %v1710
        %v1783 = vpack.c.bf16 %v1715, %v1713
        %v1784 = vpack.c.bf16 %v1716, %v1714
        %v1785 = vpack.c.bf16 %v1719, %v1717
        %v1786 = vpack.c.bf16 %v1720, %v1718
        %v1787 = vpack.c.bf16 %v1723, %v1721
        %v1788 = vpack.c.bf16 %v1724, %v1722
        %v1789 = vpack.c.bf16 %v1725, %v1725
        %v1790 = vpack.c.bf16 %v1726, %v1726
        %v1791 = vld [vmem:[%s3] sm:$0xf]
        %v1792 = vld [vmem:[%s3 + $0x4] sm:$0xf]
        %v1793 = vld [vmem:[%s3 + $0x8] sm:$0xf]
        %v1794 = vld [vmem:[%s3 + $0xc] sm:$0xf]
        %v1795 = vld [vmem:[%s3 + $0x10] sm:$0xf]
        %v1796 = vld [vmem:[%s3 + $0x14] sm:$0xf]
        %v1797 = vld [vmem:[%s3 + $0x18] sm:$0xf]
        %v1798 = vld [vmem:[%s3 + $0x1c] sm:$0xf]
        %v1799 = vld [vmem:[%s3 + $0x20] sm:$0xf]
        %v1800 = vld [vmem:[%s3 + $0x24] sm:$0xf]
        %v1801 = vld [vmem:[%s3 + $0x28] sm:$0xf]
        %v1802 = vld [vmem:[%s3 + $0x2c] sm:$0xf]
        %v1803 = vld [vmem:[%s3 + $0x30] sm:$0xf]
        %v1804 = vld [vmem:[%s3 + $0x34] sm:$0xf]
        %v1805 = vld [vmem:[%s3 + $0x38] sm:$0xf]
        %v1806 = vld [vmem:[%s3 + $0x3c] sm:$0xf]
        %v1807 = vld [vmem:[%s3 + $0x40] sm:$0xf]
        %v1808 = vld [vmem:[%s3 + $0x44] sm:$0xf]
        %v1809 = vld [vmem:[%s3 + $0x48] sm:$0xf]
        %v1810 = vld [vmem:[%s3 + $0x4c] sm:$0xf]
        %v1811 = vld [vmem:[%s3 + $0x50] sm:$0xf]
        %v1812 = vld [vmem:[%s3 + $0x54] sm:$0xf]
        %v1813 = vld [vmem:[%s3 + $0x58] sm:$0xf]
        %v1814 = vld [vmem:[%s3 + $0x5c] sm:$0xf]
        %v1815 = vld [vmem:[%s3 + $0x60] sm:$0xf]
        %v1816 = vld [vmem:[%s3 + $0x64] sm:$0xf]
        %v1817 = vld [vmem:[%s3 + $0x68] sm:$0xf]
        %v1818 = vld [vmem:[%s3 + $0x6c] sm:$0xf]
        %v1819 = vld [vmem:[%s3 + $0x70] sm:$0xf]
        %v1820 = vld [vmem:[%s3 + $0x74] sm:$0xf]
        %v1821 = vld [vmem:[%s3 + $0x78] sm:$0xf]
        %v1822 = vld [vmem:[%s3 + $0x7c] sm:$0xf]
        %v1823 = vld [vmem:[%s4] sm:$0x1]
        %v1825 = vlaneseq
        %v1826 = vshrl.u32 %v1825, 7
        %v1827 = vsub.s32 0, %v1826
        %v1828 = vrot.slane %v1823, %v1827
        %v1862 = vunpack.c.l.b16 %v1791
        %v1863 = vunpack.c.l.b16 %v1792
        %v1864 = vunpack.c.l.b16 %v1793
        %v1865 = vunpack.c.l.b16 %v1794
        %v1866 = vunpack.c.l.b16 %v1795
        %v1867 = vunpack.c.l.b16 %v1796
        %v1868 = vunpack.c.l.b16 %v1797
        %v1869 = vunpack.c.l.b16 %v1798
        %v1870 = vunpack.c.l.b16 %v1799
        %v1871 = vunpack.c.l.b16 %v1800
        %v1872 = vunpack.c.l.b16 %v1801
        %v1873 = vunpack.c.l.b16 %v1802
        %v1874 = vunpack.c.l.b16 %v1803
        %v1875 = vunpack.c.l.b16 %v1804
        %v1876 = vunpack.c.l.b16 %v1805
        %v1877 = vunpack.c.l.b16 %v1806
        %v1878 = vunpack.c.l.b16 %v1807
        %v1879 = vunpack.c.l.b16 %v1808
        %v1880 = vunpack.c.l.b16 %v1809
        %v1881 = vunpack.c.l.b16 %v1810
        %v1882 = vunpack.c.l.b16 %v1811
        %v1883 = vunpack.c.l.b16 %v1812
        %v1884 = vunpack.c.l.b16 %v1813
        %v1885 = vunpack.c.l.b16 %v1814
        %v1886 = vunpack.c.l.b16 %v1815
        %v1887 = vunpack.c.l.b16 %v1816
        %v1888 = vunpack.c.l.b16 %v1817
        %v1889 = vunpack.c.l.b16 %v1818
        %v1890 = vunpack.c.l.b16 %v1819
        %v1891 = vunpack.c.l.b16 %v1820
        %v1892 = vunpack.c.l.b16 %v1821
        %v1893 = vunpack.c.l.b16 %v1822
        %v1894 = vpack.c.b16 %v1863, %v1862
        %v1895 = vpack.c.b16 %v1865, %v1864
        %v1896 = vpack.c.b16 %v1867, %v1866
        %v1897 = vpack.c.b16 %v1869, %v1868
        %v1898 = vpack.c.b16 %v1871, %v1870
        %v1899 = vpack.c.b16 %v1873, %v1872
        %v1900 = vpack.c.b16 %v1875, %v1874
        %v1901 = vpack.c.b16 %v1877, %v1876
        %v1902 = vpack.c.b16 %v1879, %v1878
        %v1903 = vpack.c.b16 %v1881, %v1880
        %v1904 = vpack.c.b16 %v1883, %v1882
        %v1905 = vpack.c.b16 %v1885, %v1884
        %v1906 = vpack.c.b16 %v1887, %v1886
        %v1907 = vpack.c.b16 %v1889, %v1888
        %v1908 = vpack.c.b16 %v1891, %v1890
        %v1909 = vpack.c.b16 %v1893, %v1892
        %1926 = vmatprep.subr.bf16.mxu0 0
        %1927 = vmatpush1.bf16.msra.mxu0 %v1894
        %1928 = vmatprep.subr.bf16.mxu0 0
        %1929 = vmatpush1.bf16.msra.mxu0 %v1895
        %1930 = vmatprep.subr.bf16.mxu0 0
        %1931 = vmatpush1.bf16.msra.mxu0 %v1896
        %1932 = vmatprep.subr.bf16.mxu0 0
        %1933 = vmatpush1.bf16.msra.mxu0 %v1897
        %1934 = vmatprep.subr.bf16.mxu0 0
        %1935 = vmatpush1.bf16.msra.mxu0 %v1898
        %1936 = vmatprep.subr.bf16.mxu0 0
        %1937 = vmatpush1.bf16.msra.mxu0 %v1899
        %1938 = vmatprep.subr.bf16.mxu0 0
        %1939 = vmatpush1.bf16.msra.mxu0 %v1900
        %1940 = vmatprep.subr.bf16.mxu0 0
        %1941 = vmatpush1.bf16.msra.mxu0 %v1901
        %1942 = vmatprep.subr.bf16.mxu0 0
        %1943 = vmatpush1.bf16.msra.mxu0 %v1902
        %1944 = vmatprep.subr.bf16.mxu0 0
        %1945 = vmatpush1.bf16.msra.mxu0 %v1903
        %1946 = vmatprep.subr.bf16.mxu0 0
        %1947 = vmatpush1.bf16.msra.mxu0 %v1904
        %1948 = vmatprep.subr.bf16.mxu0 0
        %1949 = vmatpush1.bf16.msra.mxu0 %v1905
        %1950 = vmatprep.subr.bf16.mxu0 0
        %1951 = vmatpush1.bf16.msra.mxu0 %v1906
        %1952 = vmatprep.subr.bf16.mxu0 0
        %1953 = vmatpush1.bf16.msra.mxu0 %v1907
        %1954 = vmatprep.subr.bf16.mxu0 0
        %1955 = vmatpush1.bf16.msra.mxu0 %v1908
        %1956 = vmatprep.subr.bf16.mxu0 0
        %1957 = vmatpush1.bf16.msra.mxu0 %v1909
        %1958 = vmatprep.mubr.bf16.mxu0 %v1728
        %1959 = vmatmul.mubr.bf16.gmra.mrb[0].mxu0 %v1727
        %v1960 = vpop.f32.mrb[0].mxu0
        %v1961 = vadd.f32 %v1828, %v1960
        %v1962 = vpop.f32.mrb[0].mxu0
        %v1963 = vpop.f32.mrb[0].mxu0
        %v1964 = vadd.f32 %v1828, %v1963
        %v1965 = vpop.f32.mrb[0].mxu0
        %1966 = vmatprep.mubr.bf16.mxu0 %v1730
        %1967 = vmatmul.mubr.bf16.gmra.mrb[0].mxu0 %v1729
        %v1968 = vpop.f32.mrb[0].mxu0
        %v1969 = vadd.f32 %v1828, %v1968
        %v1970 = vpop.f32.mrb[0].mxu0
        %v1971 = vpop.f32.mrb[0].mxu0
        %v1972 = vadd.f32 %v1828, %v1971
        %v1973 = vpop.f32.mrb[0].mxu0
        %1974 = vmatprep.mubr.bf16.mxu0 %v1732
        %1975 = vmatmul.mubr.bf16.gmra.mrb[0].mxu0 %v1731
        %v1976 = vpop.f32.mrb[0].mxu0
        %v1977 = vadd.f32 %v1828, %v1976
        %v1978 = vpop.f32.mrb[0].mxu0
        %v1979 = vpop.f32.mrb[0].mxu0
        %v1980 = vadd.f32 %v1828, %v1979
        %v1981 = vpop.f32.mrb[0].mxu0
        %1982 = vmatprep.mubr.bf16.mxu0 %v1734
        %1983 = vmatmul.mubr.bf16.gmra.mrb[0].mxu0 %v1733
        %v1984 = vpop.f32.mrb[0].mxu0
        %v1985 = vadd.f32 %v1828, %v1984
        %v1986 = vpop.f32.mrb[0].mxu0
        %v1987 = vpop.f32.mrb[0].mxu0
        %v1988 = vadd.f32 %v1828, %v1987
        %v1989 = vpop.f32.mrb[0].mxu0
        %1990 = vmatprep.mubr.bf16.mxu0 %v1736
        %1991 = vmatmul.mubr.bf16.gmra.mrb[0].mxu0 %v1735
        %v1992 = vpop.f32.mrb[0].mxu0
        %v1993 = vadd.f32 %v1828, %v1992
        %v1994 = vpop.f32.mrb[0].mxu0
        %v1995 = vpop.f32.mrb[0].mxu0
        %v1996 = vadd.f32 %v1828, %v1995
        %v1997 = vpop.f32.mrb[0].mxu0
        %1998 = vmatprep.mubr.bf16.mxu0 %v1738
        %1999 = vmatmul.mubr.bf16.gmra.mrb[0].mxu0 %v1737
        %v2000 = vpop.f32.mrb[0].mxu0
        %v2001 = vadd.f32 %v1828, %v2000
        %v2002 = vpop.f32.mrb[0].mxu0
        %v2003 = vpop.f32.mrb[0].mxu0
        %v2004 = vadd.f32 %v1828, %v2003
        %v2005 = vpop.f32.mrb[0].mxu0
        %2006 = vmatprep.mubr.bf16.mxu0 %v1740
        %2007 = vmatmul.mubr.bf16.gmra.mrb[0].mxu0 %v1739
        %v2008 = vpop.f32.mrb[0].mxu0
        %v2009 = vadd.f32 %v1828, %v2008
        %v2010 = vpop.f32.mrb[0].mxu0
        %v2011 = vpop.f32.mrb[0].mxu0
        %v2012 = vadd.f32 %v1828, %v2011
        %v2013 = vpop.f32.mrb[0].mxu0
        %2014 = vmatprep.mubr.bf16.mxu0 %v1742
        %2015 = vmatmul.mubr.bf16.gmra.mrb[0].mxu0 %v1741
        %v2016 = vpop.f32.mrb[0].mxu0
        %v2017 = vadd.f32 %v1828, %v2016
        %v2018 = vpop.f32.mrb[0].mxu0
        %v2019 = vpop.f32.mrb[0].mxu0
        %v2020 = vadd.f32 %v1828, %v2019
        %v2021 = vpop.f32.mrb[0].mxu0
        %2022 = vmatprep.mubr.bf16.mxu0 %v1744
        %2023 = vmatmul.mubr.bf16.gmra.mrb[0].mxu0 %v1743
        %v2024 = vpop.f32.mrb[0].mxu0
        %v2025 = vadd.f32 %v1828, %v2024
        %v2026 = vpop.f32.mrb[0].mxu0
        %v2027 = vpop.f32.mrb[0].mxu0
        %v2028 = vadd.f32 %v1828, %v2027
        %v2029 = vpop.f32.mrb[0].mxu0
        %2030 = vmatprep.mubr.bf16.mxu0 %v1746
        %2031 = vmatmul.mubr.bf16.gmra.mrb[0].mxu0 %v1745
        %v2032 = vpop.f32.mrb[0].mxu0
        %v2033 = vadd.f32 %v1828, %v2032
        %v2034 = vpop.f32.mrb[0].mxu0
        %v2035 = vpop.f32.mrb[0].mxu0
        %v2036 = vadd.f32 %v1828, %v2035
        %v2037 = vpop.f32.mrb[0].mxu0
        %2038 = vmatprep.mubr.bf16.mxu0 %v1748
        %2039 = vmatmul.mubr.bf16.gmra.mrb[0].mxu0 %v1747
        %v2040 = vpop.f32.mrb[0].mxu0
        %v2041 = vadd.f32 %v1828, %v2040
        %v2042 = vpop.f32.mrb[0].mxu0
        %v2043 = vpop.f32.mrb[0].mxu0
        %v2044 = vadd.f32 %v1828, %v2043
        %v2045 = vpop.f32.mrb[0].mxu0
        %2046 = vmatprep.mubr.bf16.mxu0 %v1750
        %2047 = vmatmul.mubr.bf16.gmra.mrb[0].mxu0 %v1749
        %v2048 = vpop.f32.mrb[0].mxu0
        %v2049 = vadd.f32 %v1828, %v2048
        %v2050 = vpop.f32.mrb[0].mxu0
        %v2051 = vpop.f32.mrb[0].mxu0
        %v2052 = vadd.f32 %v1828, %v2051
        %v2053 = vpop.f32.mrb[0].mxu0
        %2054 = vmatprep.mubr.bf16.mxu0 %v1752
        %2055 = vmatmul.mubr.bf16.gmra.mrb[0].mxu0 %v1751
        %v2056 = vpop.f32.mrb[0].mxu0
        %v2057 = vadd.f32 %v1828, %v2056
        %v2058 = vpop.f32.mrb[0].mxu0
        %v2059 = vpop.f32.mrb[0].mxu0
        %v2060 = vadd.f32 %v1828, %v2059
        %v2061 = vpop.f32.mrb[0].mxu0
        %2062 = vmatprep.mubr.bf16.mxu0 %v1754
        %2063 = vmatmul.mubr.bf16.gmra.mrb[0].mxu0 %v1753
        %v2064 = vpop.f32.mrb[0].mxu0
        %v2065 = vadd.f32 %v1828, %v2064
        %v2066 = vpop.f32.mrb[0].mxu0
        %v2067 = vpop.f32.mrb[0].mxu0
        %v2068 = vadd.f32 %v1828, %v2067
        %v2069 = vpop.f32.mrb[0].mxu0
        %2070 = vmatprep.mubr.bf16.mxu0 %v1756
        %2071 = vmatmul.mubr.bf16.gmra.mrb[0].mxu0 %v1755
        %v2072 = vpop.f32.mrb[0].mxu0
        %v2073 = vadd.f32 %v1828, %v2072
        %v2074 = vpop.f32.mrb[0].mxu0
        %v2075 = vpop.f32.mrb[0].mxu0
        %v2076 = vadd.f32 %v1828, %v2075
        %v2077 = vpop.f32.mrb[0].mxu0
        %2078 = vmatprep.mubr.bf16.mxu0 %v1758
        %2079 = vmatmul.mubr.bf16.gmra.mrb[0].mxu0 %v1757
        %v2080 = vpop.f32.mrb[0].mxu0
        %v2081 = vadd.f32 %v1828, %v2080
        %v2082 = vpop.f32.mrb[0].mxu0
        %v2083 = vpop.f32.mrb[0].mxu0
        %v2084 = vadd.f32 %v1828, %v2083
        %v2085 = vpop.f32.mrb[0].mxu0
        %2086 = vmatprep.mubr.bf16.mxu0 %v1760
        %2087 = vmatmul.mubr.bf16.gmra.mrb[0].mxu0 %v1759
        %v2088 = vpop.f32.mrb[0].mxu0
        %v2089 = vadd.f32 %v1828, %v2088
        %v2090 = vpop.f32.mrb[0].mxu0
        %v2091 = vpop.f32.mrb[0].mxu0
        %v2092 = vadd.f32 %v1828, %v2091
        %v2093 = vpop.f32.mrb[0].mxu0
        %2094 = vmatprep.mubr.bf16.mxu0 %v1762
        %2095 = vmatmul.mubr.bf16.gmra.mrb[0].mxu0 %v1761
        %v2096 = vpop.f32.mrb[0].mxu0
        %v2097 = vadd.f32 %v1828, %v2096
        %v2098 = vpop.f32.mrb[0].mxu0
        %v2099 = vpop.f32.mrb[0].mxu0
        %v2100 = vadd.f32 %v1828, %v2099
        %v2101 = vpop.f32.mrb[0].mxu0
        %2102 = vmatprep.mubr.bf16.mxu0 %v1764
        %2103 = vmatmul.mubr.bf16.gmra.mrb[0].mxu0 %v1763
        %v2104 = vpop.f32.mrb[0].mxu0
        %v2105 = vadd.f32 %v1828, %v2104
        %v2106 = vpop.f32.mrb[0].mxu0
        %v2107 = vpop.f32.mrb[0].mxu0
        %v2108 = vadd.f32 %v1828, %v2107
        %v2109 = vpop.f32.mrb[0].mxu0
        %2110 = vmatprep.mubr.bf16.mxu0 %v1766
        %2111 = vmatmul.mubr.bf16.gmra.mrb[0].mxu0 %v1765
        %v2112 = vpop.f32.mrb[0].mxu0
        %v2113 = vadd.f32 %v1828, %v2112
        %v2114 = vpop.f32.mrb[0].mxu0
        %v2115 = vpop.f32.mrb[0].mxu0
        %v2116 = vadd.f32 %v1828, %v2115
        %v2117 = vpop.f32.mrb[0].mxu0
        %2118 = vmatprep.mubr.bf16.mxu0 %v1768
        %2119 = vmatmul.mubr.bf16.gmra.mrb[0].mxu0 %v1767
        %v2120 = vpop.f32.mrb[0].mxu0
        %v2121 = vadd.f32 %v1828, %v2120
        %v2122 = vpop.f32.mrb[0].mxu0
        %v2123 = vpop.f32.mrb[0].mxu0
        %v2124 = vadd.f32 %v1828, %v2123
        %v2125 = vpop.f32.mrb[0].mxu0
        %2126 = vmatprep.mubr.bf16.mxu0 %v1770
        %2127 = vmatmul.mubr.bf16.gmra.mrb[0].mxu0 %v1769
        %v2128 = vpop.f32.mrb[0].mxu0
        %v2129 = vadd.f32 %v1828, %v2128
        %v2130 = vpop.f32.mrb[0].mxu0
        %v2131 = vpop.f32.mrb[0].mxu0
        %v2132 = vadd.f32 %v1828, %v2131
        %v2133 = vpop.f32.mrb[0].mxu0
        %2134 = vmatprep.mubr.bf16.mxu0 %v1772
        %2135 = vmatmul.mubr.bf16.gmra.mrb[0].mxu0 %v1771
        %v2136 = vpop.f32.mrb[0].mxu0
        %v2137 = vadd.f32 %v1828, %v2136
        %v2138 = vpop.f32.mrb[0].mxu0
        %v2139 = vpop.f32.mrb[0].mxu0
        %v2140 = vadd.f32 %v1828, %v2139
        %v2141 = vpop.f32.mrb[0].mxu0
        %2142 = vmatprep.mubr.bf16.mxu0 %v1774
        %2143 = vmatmul.mubr.bf16.gmra.mrb[0].mxu0 %v1773
        %v2144 = vpop.f32.mrb[0].mxu0
        %v2145 = vadd.f32 %v1828, %v2144
        %v2146 = vpop.f32.mrb[0].mxu0
        %v2147 = vpop.f32.mrb[0].mxu0
        %v2148 = vadd.f32 %v1828, %v2147
        %v2149 = vpop.f32.mrb[0].mxu0
        %2150 = vmatprep.mubr.bf16.mxu0 %v1776
        %2151 = vmatmul.mubr.bf16.gmra.mrb[0].mxu0 %v1775
        %v2152 = vpop.f32.mrb[0].mxu0
        %v2153 = vadd.f32 %v1828, %v2152
        %v2154 = vpop.f32.mrb[0].mxu0
        %v2155 = vpop.f32.mrb[0].mxu0
        %v2156 = vadd.f32 %v1828, %v2155
        %v2157 = vpop.f32.mrb[0].mxu0
        %2158 = vmatprep.mubr.bf16.mxu0 %v1778
        %2159 = vmatmul.mubr.bf16.gmra.mrb[0].mxu0 %v1777
        %v2160 = vpop.f32.mrb[0].mxu0
        %v2161 = vadd.f32 %v1828, %v2160
        %v2162 = vpop.f32.mrb[0].mxu0
        %v2163 = vpop.f32.mrb[0].mxu0
        %v2164 = vadd.f32 %v1828, %v2163
        %v2165 = vpop.f32.mrb[0].mxu0
        %2166 = vmatprep.mubr.bf16.mxu0 %v1780
        %2167 = vmatmul.mubr.bf16.gmra.mrb[0].mxu0 %v1779
        %v2168 = vpop.f32.mrb[0].mxu0
        %v2169 = vadd.f32 %v1828, %v2168
        %v2170 = vpop.f32.mrb[0].mxu0
        %v2171 = vpop.f32.mrb[0].mxu0
        %v2172 = vadd.f32 %v1828, %v2171
        %v2173 = vpop.f32.mrb[0].mxu0
        %2174 = vmatprep.mubr.bf16.mxu0 %v1782
        %2175 = vmatmul.mubr.bf16.gmra.mrb[0].mxu0 %v1781
        %v2176 = vpop.f32.mrb[0].mxu0
        %v2177 = vadd.f32 %v1828, %v2176
        %v2178 = vpop.f32.mrb[0].mxu0
        %v2179 = vpop.f32.mrb[0].mxu0
        %v2180 = vadd.f32 %v1828, %v2179
        %v2181 = vpop.f32.mrb[0].mxu0
        %2182 = vmatprep.mubr.bf16.mxu0 %v1784
        %2183 = vmatmul.mubr.bf16.gmra.mrb[0].mxu0 %v1783
        %v2184 = vpop.f32.mrb[0].mxu0
        %v2185 = vadd.f32 %v1828, %v2184
        %v2186 = vpop.f32.mrb[0].mxu0
        %v2187 = vpop.f32.mrb[0].mxu0
        %v2188 = vadd.f32 %v1828, %v2187
        %v2189 = vpop.f32.mrb[0].mxu0
        %2190 = vmatprep.mubr.bf16.mxu0 %v1786
        %2191 = vmatmul.mubr.bf16.gmra.mrb[0].mxu0 %v1785
        %v2192 = vpop.f32.mrb[0].mxu0
        %v2193 = vadd.f32 %v1828, %v2192
        %v2194 = vpop.f32.mrb[0].mxu0
        %v2195 = vpop.f32.mrb[0].mxu0
        %v2196 = vadd.f32 %v1828, %v2195
        %v2197 = vpop.f32.mrb[0].mxu0
        %2198 = vmatprep.mubr.bf16.mxu0 %v1788
        %2199 = vmatmul.mubr.bf16.gmra.mrb[0].mxu0 %v1787
        %v2200 = vpop.f32.mrb[0].mxu0
        %v2201 = vadd.f32 %v1828, %v2200
        %v2202 = vpop.f32.mrb[0].mxu0
        %v2203 = vpop.f32.mrb[0].mxu0
        %v2204 = vadd.f32 %v1828, %v2203
        %v2205 = vpop.f32.mrb[0].mxu0
        %2206 = vmatprep.mubr.bf16.mxu0 %v1790
        %2207 = vmatmul.mubr.bf16.gmra.mrb[0].mxu0 %v1789
        %v2208 = vpop.f32.mrb[0].mxu0
        %v2209 = vadd.f32 %v1828, %v2208
        %v2210 = vpop.f32.mrb[0].mxu0
        %v2211 = vpop.f32.mrb[0].mxu0
        %v2212 = vpop.f32.mrb[0].mxu0
        %2213 = vdwg.mxu0
        %vm2214 = vcmp.gt.f32.partialorder %v1961, 0.0
        %vm2215 = vcmp.gt.f32.partialorder %v1964, 0.0
        %vm2216 = vcmp.gt.f32.partialorder %v1969, 0.0
        %vm2217 = vcmp.gt.f32.partialorder %v1972, 0.0
        %vm2218 = vcmp.gt.f32.partialorder %v1977, 0.0
        %vm2219 = vcmp.gt.f32.partialorder %v1980, 0.0
        %vm2220 = vcmp.gt.f32.partialorder %v1985, 0.0
        %vm2221 = vcmp.gt.f32.partialorder %v1988, 0.0
        %vm2222 = vcmp.gt.f32.partialorder %v1993, 0.0
        %vm2223 = vcmp.gt.f32.partialorder %v1996, 0.0
        %vm2224 = vcmp.gt.f32.partialorder %v2001, 0.0
        %vm2225 = vcmp.gt.f32.partialorder %v2004, 0.0
        %vm2226 = vcmp.gt.f32.partialorder %v2009, 0.0
        %vm2227 = vcmp.gt.f32.partialorder %v2012, 0.0
        %vm2228 = vcmp.gt.f32.partialorder %v2017, 0.0
        %vm2229 = vcmp.gt.f32.partialorder %v2020, 0.0
        %vm2230 = vcmp.gt.f32.partialorder %v2025, 0.0
        %vm2231 = vcmp.gt.f32.partialorder %v2028, 0.0
        %vm2232 = vcmp.gt.f32.partialorder %v2033, 0.0
        %vm2233 = vcmp.gt.f32.partialorder %v2036, 0.0
        %vm2234 = vcmp.gt.f32.partialorder %v2041, 0.0
        %vm2235 = vcmp.gt.f32.partialorder %v2044, 0.0
        %vm2236 = vcmp.gt.f32.partialorder %v2049, 0.0
        %vm2237 = vcmp.gt.f32.partialorder %v2052, 0.0
        %vm2238 = vcmp.gt.f32.partialorder %v2057, 0.0
        %vm2239 = vcmp.gt.f32.partialorder %v2060, 0.0
        %vm2240 = vcmp.gt.f32.partialorder %v2065, 0.0
        %vm2241 = vcmp.gt.f32.partialorder %v2068, 0.0
        %vm2242 = vcmp.gt.f32.partialorder %v2073, 0.0
        %vm2243 = vcmp.gt.f32.partialorder %v2076, 0.0
        %vm2244 = vcmp.gt.f32.partialorder %v2081, 0.0
        %vm2245 = vcmp.gt.f32.partialorder %v2084, 0.0
        %vm2246 = vcmp.gt.f32.partialorder %v2089, 0.0
        %vm2247 = vcmp.gt.f32.partialorder %v2092, 0.0
        %vm2248 = vcmp.gt.f32.partialorder %v2097, 0.0
        %vm2249 = vcmp.gt.f32.partialorder %v2100, 0.0
        %vm2250 = vcmp.gt.f32.partialorder %v2105, 0.0
        %vm2251 = vcmp.gt.f32.partialorder %v2108, 0.0
        %vm2252 = vcmp.gt.f32.partialorder %v2113, 0.0
        %vm2253 = vcmp.gt.f32.partialorder %v2116, 0.0
        %vm2254 = vcmp.gt.f32.partialorder %v2121, 0.0
        %vm2255 = vcmp.gt.f32.partialorder %v2124, 0.0
        %vm2256 = vcmp.gt.f32.partialorder %v2129, 0.0
        %vm2257 = vcmp.gt.f32.partialorder %v2132, 0.0
        %vm2258 = vcmp.gt.f32.partialorder %v2137, 0.0
        %vm2259 = vcmp.gt.f32.partialorder %v2140, 0.0
        %vm2260 = vcmp.gt.f32.partialorder %v2145, 0.0
        %vm2261 = vcmp.gt.f32.partialorder %v2148, 0.0
        %vm2262 = vcmp.gt.f32.partialorder %v2153, 0.0
        %vm2263 = vcmp.gt.f32.partialorder %v2156, 0.0
        %vm2264 = vcmp.gt.f32.partialorder %v2161, 0.0
        %vm2265 = vcmp.gt.f32.partialorder %v2164, 0.0
        %vm2266 = vcmp.gt.f32.partialorder %v2169, 0.0
        %vm2267 = vcmp.gt.f32.partialorder %v2172, 0.0
        %vm2268 = vcmp.gt.f32.partialorder %v2177, 0.0
        %vm2269 = vcmp.gt.f32.partialorder %v2180, 0.0
        %vm2270 = vcmp.gt.f32.partialorder %v2185, 0.0
        %vm2271 = vcmp.gt.f32.partialorder %v2188, 0.0
        %vm2272 = vcmp.gt.f32.partialorder %v2193, 0.0
        %vm2273 = vcmp.gt.f32.partialorder %v2196, 0.0
        %vm2274 = vcmp.gt.f32.partialorder %v2201, 0.0
        %vm2275 = vcmp.gt.f32.partialorder %v2204, 0.0
        %vm2276 = vcmp.gt.f32.partialorder %v2209, 0.0
        %v2277 = vmul.f32 %v1961, 1.442695
        %v2278 = vpow.pop %v2277
        %v2279 = vmul.f32 %v1964, 1.442695
        %v2280 = vpow.pop %v2279
        %v2281 = vmul.f32 %v1969, 1.442695
        %v2282 = vpow.pop %v2281
        %v2283 = vmul.f32 %v1972, 1.442695
        %v2284 = vpow.pop %v2283
        %v2285 = vmul.f32 %v1977, 1.442695
        %v2286 = vpow.pop %v2285
        %v2287 = vmul.f32 %v1980, 1.442695
        %v2288 = vpow.pop %v2287
        %v2289 = vmul.f32 %v1985, 1.442695
        %v2290 = vpow.pop %v2289
        %v2291 = vmul.f32 %v1988, 1.442695
        %v2292 = vpow.pop %v2291
        %v2293 = vmul.f32 %v1993, 1.442695
        %v2294 = vpow.pop %v2293
        %v2295 = vmul.f32 %v1996, 1.442695
        %v2296 = vpow.pop %v2295
        %v2297 = vmul.f32 %v2001, 1.442695
        %v2298 = vpow.pop %v2297
        %v2299 = vmul.f32 %v2004, 1.442695
        %v2300 = vpow.pop %v2299
        %v2301 = vmul.f32 %v2009, 1.442695
        %v2302 = vpow.pop %v2301
        %v2303 = vmul.f32 %v2012, 1.442695
        %v2304 = vpow.pop %v2303
        %v2305 = vmul.f32 %v2017, 1.442695
        %v2306 = vpow.pop %v2305
        %v2307 = vmul.f32 %v2020, 1.442695
        %v2308 = vpow.pop %v2307
        %v2309 = vmul.f32 %v2025, 1.442695
        %v2310 = vpow.pop %v2309
        %v2311 = vmul.f32 %v2028, 1.442695
        %v2312 = vpow.pop %v2311
        %v2313 = vmul.f32 %v2033, 1.442695
        %v2314 = vpow.pop %v2313
        %v2315 = vmul.f32 %v2036, 1.442695
        %v2316 = vpow.pop %v2315
        %v2317 = vmul.f32 %v2041, 1.442695
        %v2318 = vpow.pop %v2317
        %v2319 = vmul.f32 %v2044, 1.442695
        %v2320 = vpow.pop %v2319
        %v2321 = vmul.f32 %v2049, 1.442695
        %v2322 = vpow.pop %v2321
        %v2323 = vmul.f32 %v2052, 1.442695
        %v2324 = vpow.pop %v2323
        %v2325 = vmul.f32 %v2057, 1.442695
        %v2326 = vpow.pop %v2325
        %v2327 = vmul.f32 %v2060, 1.442695
        %v2328 = vpow.pop %v2327
        %v2329 = vmul.f32 %v2065, 1.442695
        %v2330 = vpow.pop %v2329
        %v2331 = vmul.f32 %v2068, 1.442695
        %v2332 = vpow.pop %v2331
        %v2333 = vmul.f32 %v2073, 1.442695
        %v2334 = vpow.pop %v2333
        %v2335 = vmul.f32 %v2076, 1.442695
        %v2336 = vpow.pop %v2335
        %v2337 = vmul.f32 %v2081, 1.442695
        %v2338 = vpow.pop %v2337
        %v2339 = vmul.f32 %v2084, 1.442695
        %v2340 = vpow.pop %v2339
        %v2341 = vmul.f32 %v2089, 1.442695
        %v2342 = vpow.pop %v2341
        %v2343 = vmul.f32 %v2092, 1.442695
        %v2344 = vpow.pop %v2343
        %v2345 = vmul.f32 %v2097, 1.442695
        %v2346 = vpow.pop %v2345
        %v2347 = vmul.f32 %v2100, 1.442695
        %v2348 = vpow.pop %v2347
        %v2349 = vmul.f32 %v2105, 1.442695
        %v2350 = vpow.pop %v2349
        %v2351 = vmul.f32 %v2108, 1.442695
        %v2352 = vpow.pop %v2351
        %v2353 = vmul.f32 %v2113, 1.442695
        %v2354 = vpow.pop %v2353
        %v2355 = vmul.f32 %v2116, 1.442695
        %v2356 = vpow.pop %v2355
        %v2357 = vmul.f32 %v2121, 1.442695
        %v2358 = vpow.pop %v2357
        %v2359 = vmul.f32 %v2124, 1.442695
        %v2360 = vpow.pop %v2359
        %v2361 = vmul.f32 %v2129, 1.442695
        %v2362 = vpow.pop %v2361
        %v2363 = vmul.f32 %v2132, 1.442695
        %v2364 = vpow.pop %v2363
        %v2365 = vmul.f32 %v2137, 1.442695
        %v2366 = vpow.pop %v2365
        %v2367 = vmul.f32 %v2140, 1.442695
        %v2368 = vpow.pop %v2367
        %v2369 = vmul.f32 %v2145, 1.442695
        %v2370 = vpow.pop %v2369
        %v2371 = vmul.f32 %v2148, 1.442695
        %v2372 = vpow.pop %v2371
        %v2373 = vmul.f32 %v2153, 1.442695
        %v2374 = vpow.pop %v2373
        %v2375 = vmul.f32 %v2156, 1.442695
        %v2376 = vpow.pop %v2375
        %v2377 = vmul.f32 %v2161, 1.442695
        %v2378 = vpow.pop %v2377
        %v2379 = vmul.f32 %v2164, 1.442695
        %v2380 = vpow.pop %v2379
        %v2381 = vmul.f32 %v2169, 1.442695
        %v2382 = vpow.pop %v2381
        %v2383 = vmul.f32 %v2172, 1.442695
        %v2384 = vpow.pop %v2383
        %v2385 = vmul.f32 %v2177, 1.442695
        %v2386 = vpow.pop %v2385
        %v2387 = vmul.f32 %v2180, 1.442695
        %v2388 = vpow.pop %v2387
        %v2389 = vmul.f32 %v2185, 1.442695
        %v2390 = vpow.pop %v2389
        %v2391 = vmul.f32 %v2188, 1.442695
        %v2392 = vpow.pop %v2391
        %v2393 = vmul.f32 %v2193, 1.442695
        %v2394 = vpow.pop %v2393
        %v2395 = vmul.f32 %v2196, 1.442695
        %v2396 = vpow.pop %v2395
        %v2397 = vmul.f32 %v2201, 1.442695
        %v2398 = vpow.pop %v2397
        %v2399 = vmul.f32 %v2204, 1.442695
        %v2400 = vpow.pop %v2399
        %v2401 = vmul.f32 %v2209, 1.442695
        %v2402 = vpow.pop %v2401
        %v2403 = vsub.f32 %v2278, 1.0
        %v2404 = vsub.f32 %v2280, 1.0
        %v2405 = vsub.f32 %v2282, 1.0
        %v2406 = vsub.f32 %v2284, 1.0
        %v2407 = vsub.f32 %v2286, 1.0
        %v2408 = vsub.f32 %v2288, 1.0
        %v2409 = vsub.f32 %v2290, 1.0
        %v2410 = vsub.f32 %v2292, 1.0
        %v2411 = vsub.f32 %v2294, 1.0
        %v2412 = vsub.f32 %v2296, 1.0
        %v2413 = vsub.f32 %v2298, 1.0
        %v2414 = vsub.f32 %v2300, 1.0
        %v2415 = vsub.f32 %v2302, 1.0
        %v2416 = vsub.f32 %v2304, 1.0
        %v2417 = vsub.f32 %v2306, 1.0
        %v2418 = vsub.f32 %v2308, 1.0
        %v2419 = vsub.f32 %v2310, 1.0
        %v2420 = vsub.f32 %v2312, 1.0
        %v2421 = vsub.f32 %v2314, 1.0
        %v2422 = vsub.f32 %v2316, 1.0
        %v2423 = vsub.f32 %v2318, 1.0
        %v2424 = vsub.f32 %v2320, 1.0
        %v2425 = vsub.f32 %v2322, 1.0
        %v2426 = vsub.f32 %v2324, 1.0
        %v2427 = vsub.f32 %v2326, 1.0
        %v2428 = vsub.f32 %v2328, 1.0
        %v2429 = vsub.f32 %v2330, 1.0
        %v2430 = vsub.f32 %v2332, 1.0
        %v2431 = vsub.f32 %v2334, 1.0
        %v2432 = vsub.f32 %v2336, 1.0
        %v2433 = vsub.f32 %v2338, 1.0
        %v2434 = vsub.f32 %v2340, 1.0
        %v2435 = vsub.f32 %v2342, 1.0
        %v2436 = vsub.f32 %v2344, 1.0
        %v2437 = vsub.f32 %v2346, 1.0
        %v2438 = vsub.f32 %v2348, 1.0
        %v2439 = vsub.f32 %v2350, 1.0
        %v2440 = vsub.f32 %v2352, 1.0
        %v2441 = vsub.f32 %v2354, 1.0
        %v2442 = vsub.f32 %v2356, 1.0
        %v2443 = vsub.f32 %v2358, 1.0
        %v2444 = vsub.f32 %v2360, 1.0
        %v2445 = vsub.f32 %v2362, 1.0
        %v2446 = vsub.f32 %v2364, 1.0
        %v2447 = vsub.f32 %v2366, 1.0
        %v2448 = vsub.f32 %v2368, 1.0
        %v2449 = vsub.f32 %v2370, 1.0
        %v2450 = vsub.f32 %v2372, 1.0
        %v2451 = vsub.f32 %v2374, 1.0
        %v2452 = vsub.f32 %v2376, 1.0
        %v2453 = vsub.f32 %v2378, 1.0
        %v2454 = vsub.f32 %v2380, 1.0
        %v2455 = vsub.f32 %v2382, 1.0
        %v2456 = vsub.f32 %v2384, 1.0
        %v2457 = vsub.f32 %v2386, 1.0
        %v2458 = vsub.f32 %v2388, 1.0
        %v2459 = vsub.f32 %v2390, 1.0
        %v2460 = vsub.f32 %v2392, 1.0
        %v2461 = vsub.f32 %v2394, 1.0
        %v2462 = vsub.f32 %v2396, 1.0
        %v2463 = vsub.f32 %v2398, 1.0
        %v2464 = vsub.f32 %v2400, 1.0
        %v2465 = vsub.f32 %v2402, 1.0
        %v2466 = vsel %vm2214, %v1961, %v2403
        %v2467 = vsel %vm2215, %v1964, %v2404
        %v2468 = vsel %vm2216, %v1969, %v2405
        %v2469 = vsel %vm2217, %v1972, %v2406
        %v2470 = vsel %vm2218, %v1977, %v2407
        %v2471 = vsel %vm2219, %v1980, %v2408
        %v2472 = vsel %vm2220, %v1985, %v2409
        %v2473 = vsel %vm2221, %v1988, %v2410
        %v2474 = vsel %vm2222, %v1993, %v2411
        %v2475 = vsel %vm2223, %v1996, %v2412
        %v2476 = vsel %vm2224, %v2001, %v2413
        %v2477 = vsel %vm2225, %v2004, %v2414
        %v2478 = vsel %vm2226, %v2009, %v2415
        %v2479 = vsel %vm2227, %v2012, %v2416
        %v2480 = vsel %vm2228, %v2017, %v2417
        %v2481 = vsel %vm2229, %v2020, %v2418
        %v2482 = vsel %vm2230, %v2025, %v2419
        %v2483 = vsel %vm2231, %v2028, %v2420
        %v2484 = vsel %vm2232, %v2033, %v2421
        %v2485 = vsel %vm2233, %v2036, %v2422
        %v2486 = vsel %vm2234, %v2041, %v2423
        %v2487 = vsel %vm2235, %v2044, %v2424
        %v2488 = vsel %vm2236, %v2049, %v2425
        %v2489 = vsel %vm2237, %v2052, %v2426
        %v2490 = vsel %vm2238, %v2057, %v2427
        %v2491 = vsel %vm2239, %v2060, %v2428
        %v2492 = vsel %vm2240, %v2065, %v2429
        %v2493 = vsel %vm2241, %v2068, %v2430
        %v2494 = vsel %vm2242, %v2073, %v2431
        %v2495 = vsel %vm2243, %v2076, %v2432
        %v2496 = vsel %vm2244, %v2081, %v2433
        %v2497 = vsel %vm2245, %v2084, %v2434
        %v2498 = vsel %vm2246, %v2089, %v2435
        %v2499 = vsel %vm2247, %v2092, %v2436
        %v2500 = vsel %vm2248, %v2097, %v2437
        %v2501 = vsel %vm2249, %v2100, %v2438
        %v2502 = vsel %vm2250, %v2105, %v2439
        %v2503 = vsel %vm2251, %v2108, %v2440
        %v2504 = vsel %vm2252, %v2113, %v2441
        %v2505 = vsel %vm2253, %v2116, %v2442
        %v2506 = vsel %vm2254, %v2121, %v2443
        %v2507 = vsel %vm2255, %v2124, %v2444
        %v2508 = vsel %vm2256, %v2129, %v2445
        %v2509 = vsel %vm2257, %v2132, %v2446
        %v2510 = vsel %vm2258, %v2137, %v2447
        %v2511 = vsel %vm2259, %v2140, %v2448
        %v2512 = vsel %vm2260, %v2145, %v2449
        %v2513 = vsel %vm2261, %v2148, %v2450
        %v2514 = vsel %vm2262, %v2153, %v2451
        %v2515 = vsel %vm2263, %v2156, %v2452
        %v2516 = vsel %vm2264, %v2161, %v2453
        %v2517 = vsel %vm2265, %v2164, %v2454
        %v2518 = vsel %vm2266, %v2169, %v2455
        %v2519 = vsel %vm2267, %v2172, %v2456
        %v2520 = vsel %vm2268, %v2177, %v2457
        %v2521 = vsel %vm2269, %v2180, %v2458
        %v2522 = vsel %vm2270, %v2185, %v2459
        %v2523 = vsel %vm2271, %v2188, %v2460
        %v2524 = vsel %vm2272, %v2193, %v2461
        %v2525 = vsel %vm2273, %v2196, %v2462
        %v2526 = vsel %vm2274, %v2201, %v2463
        %v2527 = vsel %vm2275, %v2204, %v2464
        %v2528 = vsel %vm2276, %v2209, %v2465
        %v2529 = vpack.c.bf16 %v2467, %v2466
        %v2530 = vpack.c.bf16 %v2469, %v2468
        %v2531 = vpack.c.bf16 %v2471, %v2470
        %v2532 = vpack.c.bf16 %v2473, %v2472
        %v2533 = vpack.c.bf16 %v2475, %v2474
        %v2534 = vpack.c.bf16 %v2477, %v2476
        %v2535 = vpack.c.bf16 %v2479, %v2478
        %v2536 = vpack.c.bf16 %v2481, %v2480
        %v2537 = vpack.c.bf16 %v2483, %v2482
        %v2538 = vpack.c.bf16 %v2485, %v2484
        %v2539 = vpack.c.bf16 %v2487, %v2486
        %v2540 = vpack.c.bf16 %v2489, %v2488
        %v2541 = vpack.c.bf16 %v2491, %v2490
        %v2542 = vpack.c.bf16 %v2493, %v2492
        %v2543 = vpack.c.bf16 %v2495, %v2494
        %v2544 = vpack.c.bf16 %v2497, %v2496
        %v2545 = vpack.c.bf16 %v2499, %v2498
        %v2546 = vpack.c.bf16 %v2501, %v2500
        %v2547 = vpack.c.bf16 %v2503, %v2502
        %v2548 = vpack.c.bf16 %v2505, %v2504
        %v2549 = vpack.c.bf16 %v2507, %v2506
        %v2550 = vpack.c.bf16 %v2509, %v2508
        %v2551 = vpack.c.bf16 %v2511, %v2510
        %v2552 = vpack.c.bf16 %v2513, %v2512
        %v2553 = vpack.c.bf16 %v2515, %v2514
        %v2554 = vpack.c.bf16 %v2517, %v2516
        %v2555 = vpack.c.bf16 %v2519, %v2518
        %v2556 = vpack.c.bf16 %v2521, %v2520
        %v2557 = vpack.c.bf16 %v2523, %v2522
        %v2558 = vpack.c.bf16 %v2525, %v2524
        %v2559 = vpack.c.bf16 %v2527, %v2526
        %v2560 = vpack.c.bf16 %v2528, %v2528
        %v2561 = vld [vmem:[%s5] sm:$0xf]
        %v2562 = vld [vmem:[%s5 + $0x4] sm:$0xf]
        %v2563 = vld [vmem:[%s5 + $0x8] sm:$0xf]
        %v2564 = vld [vmem:[%s5 + $0xc] sm:$0xf]
        %v2565 = vld [vmem:[%s5 + $0x10] sm:$0xf]
        %v2566 = vld [vmem:[%s5 + $0x14] sm:$0xf]
        %v2567 = vld [vmem:[%s5 + $0x18] sm:$0xf]
        %v2568 = vld [vmem:[%s5 + $0x1c] sm:$0xf]
        %v2569 = vld [vmem:[%s5 + $0x20] sm:$0xf]
        %v2570 = vld [vmem:[%s5 + $0x24] sm:$0xf]
        %v2571 = vld [vmem:[%s5 + $0x28] sm:$0xf]
        %v2572 = vld [vmem:[%s5 + $0x2c] sm:$0xf]
        %v2573 = vld [vmem:[%s5 + $0x30] sm:$0xf]
        %v2574 = vld [vmem:[%s5 + $0x34] sm:$0xf]
        %v2575 = vld [vmem:[%s5 + $0x38] sm:$0xf]
        %v2576 = vld [vmem:[%s5 + $0x3c] sm:$0xf]
        %v2577 = vld [vmem:[%s6] sm:$0x1]
        %v2579 = vlaneseq
        %v2580 = vshrl.u32 %v2579, 7
        %v2581 = vsub.s32 0, %v2580
        %v2582 = vrot.slane %v2577, %v2581
        %v2600 = vunpack.c.l.b16 %v2561
        %v2601 = vunpack.c.l.b16 %v2562
        %v2602 = vunpack.c.l.b16 %v2563
        %v2603 = vunpack.c.l.b16 %v2564
        %v2604 = vunpack.c.l.b16 %v2565
        %v2605 = vunpack.c.l.b16 %v2566
        %v2606 = vunpack.c.l.b16 %v2567
        %v2607 = vunpack.c.l.b16 %v2568
        %v2608 = vunpack.c.l.b16 %v2569
        %v2609 = vunpack.c.l.b16 %v2570
        %v2610 = vunpack.c.l.b16 %v2571
        %v2611 = vunpack.c.l.b16 %v2572
        %v2612 = vunpack.c.l.b16 %v2573
        %v2613 = vunpack.c.l.b16 %v2574
        %v2614 = vunpack.c.l.b16 %v2575
        %v2615 = vunpack.c.l.b16 %v2576
        %v2616 = vpack.c.b16 %v2601, %v2600
        %v2617 = vpack.c.b16 %v2603, %v2602
        %v2618 = vpack.c.b16 %v2605, %v2604
        %v2619 = vpack.c.b16 %v2607, %v2606
        %v2620 = vpack.c.b16 %v2609, %v2608
        %v2621 = vpack.c.b16 %v2611, %v2610
        %v2622 = vpack.c.b16 %v2613, %v2612
        %v2623 = vpack.c.b16 %v2615, %v2614
        %2632 = vmatprep.subr.bf16.mxu0 0
        %2633 = vmatpush1.bf16.msra.mxu0 %v2616
        %2634 = vmatprep.subr.bf16.mxu0 0
        %2635 = vmatpush1.bf16.msra.mxu0 %v2617
        %2636 = vmatprep.subr.bf16.mxu0 0
        %2637 = vmatpush1.bf16.msra.mxu0 %v2618
        %2638 = vmatprep.subr.bf16.mxu0 0
        %2639 = vmatpush1.bf16.msra.mxu0 %v2619
        %2640 = vmatprep.subr.bf16.mxu0 0
        %2641 = vmatpush1.bf16.msra.mxu0 %v2620
        %2642 = vmatprep.subr.bf16.mxu0 0
        %2643 = vmatpush1.bf16.msra.mxu0 %v2621
        %2644 = vmatprep.subr.bf16.mxu0 0
        %2645 = vmatpush1.bf16.msra.mxu0 %v2622
        %2646 = vmatprep.subr.bf16.mxu0 0
        %2647 = vmatpush1.bf16.msra.mxu0 %v2623
        %2648 = vmatprep.subr.bf16.mxu0 0
        %2649 = vmatpush1.bf16.msra.mxu0 0
        %2650 = vmatprep.subr.bf16.mxu0 0
        %2651 = vmatpush1.bf16.msra.mxu0 0
        %2652 = vmatprep.subr.bf16.mxu0 0
        %2653 = vmatpush1.bf16.msra.mxu0 0
        %2654 = vmatprep.subr.bf16.mxu0 0
        %2655 = vmatpush1.bf16.msra.mxu0 0
        %2656 = vmatprep.subr.bf16.mxu0 0
        %2657 = vmatpush1.bf16.msra.mxu0 0
        %2658 = vmatprep.subr.bf16.mxu0 0
        %2659 = vmatpush1.bf16.msra.mxu0 0
        %2660 = vmatprep.subr.bf16.mxu0 0
        %2661 = vmatpush1.bf16.msra.mxu0 0
        %2662 = vmatprep.subr.bf16.mxu0 0
        %2663 = vmatpush1.bf16.msra.mxu0 0
        %2664 = vmatprep.mubr.bf16.mxu0 0
        %2665 = vmatmul.mubr.bf16.gmra.mrb[0].mxu0 %v2529
        %v2666 = vpop.f32.mrb[0].mxu0
        %v2667 = vadd.f32 %v2582, %v2666
        %v2668 = vpop.f32.mrb[0].mxu0
        %v2669 = vpop.f32.mrb[0].mxu0
        %v2670 = vadd.f32 %v2582, %v2669
        %v2671 = vpop.f32.mrb[0].mxu0
        %2672 = vmatprep.mubr.bf16.mxu0 0
        %2673 = vmatmul.mubr.bf16.gmra.mrb[0].mxu0 %v2530
        %v2674 = vpop.f32.mrb[0].mxu0
        %v2675 = vadd.f32 %v2582, %v2674
        %v2676 = vpop.f32.mrb[0].mxu0
        %v2677 = vpop.f32.mrb[0].mxu0
        %v2678 = vadd.f32 %v2582, %v2677
        %v2679 = vpop.f32.mrb[0].mxu0
        %2680 = vmatprep.mubr.bf16.mxu0 0
        %2681 = vmatmul.mubr.bf16.gmra.mrb[0].mxu0 %v2531
        %v2682 = vpop.f32.mrb[0].mxu0
        %v2683 = vadd.f32 %v2582, %v2682
        %v2684 = vpop.f32.mrb[0].mxu0
        %v2685 = vpop.f32.mrb[0].mxu0
        %v2686 = vadd.f32 %v2582, %v2685
        %v2687 = vpop.f32.mrb[0].mxu0
        %2688 = vmatprep.mubr.bf16.mxu0 0
        %2689 = vmatmul.mubr.bf16.gmra.mrb[0].mxu0 %v2532
        %v2690 = vpop.f32.mrb[0].mxu0
        %v2691 = vadd.f32 %v2582, %v2690
        %v2692 = vpop.f32.mrb[0].mxu0
        %v2693 = vpop.f32.mrb[0].mxu0
        %v2694 = vadd.f32 %v2582, %v2693
        %v2695 = vpop.f32.mrb[0].mxu0
        %2696 = vmatprep.mubr.bf16.mxu0 0
        %2697 = vmatmul.mubr.bf16.gmra.mrb[0].mxu0 %v2533
        %v2698 = vpop.f32.mrb[0].mxu0
        %v2699 = vadd.f32 %v2582, %v2698
        %v2700 = vpop.f32.mrb[0].mxu0
        %v2701 = vpop.f32.mrb[0].mxu0
        %v2702 = vadd.f32 %v2582, %v2701
        %v2703 = vpop.f32.mrb[0].mxu0
        %2704 = vmatprep.mubr.bf16.mxu0 0
        %2705 = vmatmul.mubr.bf16.gmra.mrb[0].mxu0 %v2534
        %v2706 = vpop.f32.mrb[0].mxu0
        %v2707 = vadd.f32 %v2582, %v2706
        %v2708 = vpop.f32.mrb[0].mxu0
        %v2709 = vpop.f32.mrb[0].mxu0
        %v2710 = vadd.f32 %v2582, %v2709
        %v2711 = vpop.f32.mrb[0].mxu0
        %2712 = vmatprep.mubr.bf16.mxu0 0
        %2713 = vmatmul.mubr.bf16.gmra.mrb[0].mxu0 %v2535
        %v2714 = vpop.f32.mrb[0].mxu0
        %v2715 = vadd.f32 %v2582, %v2714
        %v2716 = vpop.f32.mrb[0].mxu0
        %v2717 = vpop.f32.mrb[0].mxu0
        %v2718 = vadd.f32 %v2582, %v2717
        %v2719 = vpop.f32.mrb[0].mxu0
        %2720 = vmatprep.mubr.bf16.mxu0 0
        %2721 = vmatmul.mubr.bf16.gmra.mrb[0].mxu0 %v2536
        %v2722 = vpop.f32.mrb[0].mxu0
        %v2723 = vadd.f32 %v2582, %v2722
        %v2724 = vpop.f32.mrb[0].mxu0
        %v2725 = vpop.f32.mrb[0].mxu0
        %v2726 = vadd.f32 %v2582, %v2725
        %v2727 = vpop.f32.mrb[0].mxu0
        %2728 = vmatprep.mubr.bf16.mxu0 0
        %2729 = vmatmul.mubr.bf16.gmra.mrb[0].mxu0 %v2537
        %v2730 = vpop.f32.mrb[0].mxu0
        %v2731 = vadd.f32 %v2582, %v2730
        %v2732 = vpop.f32.mrb[0].mxu0
        %v2733 = vpop.f32.mrb[0].mxu0
        %v2734 = vadd.f32 %v2582, %v2733
        %v2735 = vpop.f32.mrb[0].mxu0
        %2736 = vmatprep.mubr.bf16.mxu0 0
        %2737 = vmatmul.mubr.bf16.gmra.mrb[0].mxu0 %v2538
        %v2738 = vpop.f32.mrb[0].mxu0
        %v2739 = vadd.f32 %v2582, %v2738
        %v2740 = vpop.f32.mrb[0].mxu0
        %v2741 = vpop.f32.mrb[0].mxu0
        %v2742 = vadd.f32 %v2582, %v2741
        %v2743 = vpop.f32.mrb[0].mxu0
        %2744 = vmatprep.mubr.bf16.mxu0 0
        %2745 = vmatmul.mubr.bf16.gmra.mrb[0].mxu0 %v2539
        %v2746 = vpop.f32.mrb[0].mxu0
        %v2747 = vadd.f32 %v2582, %v2746
        %v2748 = vpop.f32.mrb[0].mxu0
        %v2749 = vpop.f32.mrb[0].mxu0
        %v2750 = vadd.f32 %v2582, %v2749
        %v2751 = vpop.f32.mrb[0].mxu0
        %2752 = vmatprep.mubr.bf16.mxu0 0
        %2753 = vmatmul.mubr.bf16.gmra.mrb[0].mxu0 %v2540
        %v2754 = vpop.f32.mrb[0].mxu0
        %v2755 = vadd.f32 %v2582, %v2754
        %v2756 = vpop.f32.mrb[0].mxu0
        %v2757 = vpop.f32.mrb[0].mxu0
        %v2758 = vadd.f32 %v2582, %v2757
        %v2759 = vpop.f32.mrb[0].mxu0
        %2760 = vmatprep.mubr.bf16.mxu0 0
        %2761 = vmatmul.mubr.bf16.gmra.mrb[0].mxu0 %v2541
        %v2762 = vpop.f32.mrb[0].mxu0
        %v2763 = vadd.f32 %v2582, %v2762
        %v2764 = vpop.f32.mrb[0].mxu0
        %v2765 = vpop.f32.mrb[0].mxu0
        %v2766 = vadd.f32 %v2582, %v2765
        %v2767 = vpop.f32.mrb[0].mxu0
        %2768 = vmatprep.mubr.bf16.mxu0 0
        %2769 = vmatmul.mubr.bf16.gmra.mrb[0].mxu0 %v2542
        %v2770 = vpop.f32.mrb[0].mxu0
        %v2771 = vadd.f32 %v2582, %v2770
        %v2772 = vpop.f32.mrb[0].mxu0
        %v2773 = vpop.f32.mrb[0].mxu0
        %v2774 = vadd.f32 %v2582, %v2773
        %v2775 = vpop.f32.mrb[0].mxu0
        %2776 = vmatprep.mubr.bf16.mxu0 0
        %2777 = vmatmul.mubr.bf16.gmra.mrb[0].mxu0 %v2543
        %v2778 = vpop.f32.mrb[0].mxu0
        %v2779 = vadd.f32 %v2582, %v2778
        %v2780 = vpop.f32.mrb[0].mxu0
        %v2781 = vpop.f32.mrb[0].mxu0
        %v2782 = vadd.f32 %v2582, %v2781
        %v2783 = vpop.f32.mrb[0].mxu0
        %2784 = vmatprep.mubr.bf16.mxu0 0
        %2785 = vmatmul.mubr.bf16.gmra.mrb[0].mxu0 %v2544
        %v2786 = vpop.f32.mrb[0].mxu0
        %v2787 = vadd.f32 %v2582, %v2786
        %v2788 = vpop.f32.mrb[0].mxu0
        %v2789 = vpop.f32.mrb[0].mxu0
        %v2790 = vadd.f32 %v2582, %v2789
        %v2791 = vpop.f32.mrb[0].mxu0
        %2792 = vmatprep.mubr.bf16.mxu0 0
        %2793 = vmatmul.mubr.bf16.gmra.mrb[0].mxu0 %v2545
        %v2794 = vpop.f32.mrb[0].mxu0
        %v2795 = vadd.f32 %v2582, %v2794
        %v2796 = vpop.f32.mrb[0].mxu0
        %v2797 = vpop.f32.mrb[0].mxu0
        %v2798 = vadd.f32 %v2582, %v2797
        %v2799 = vpop.f32.mrb[0].mxu0
        %2800 = vmatprep.mubr.bf16.mxu0 0
        %2801 = vmatmul.mubr.bf16.gmra.mrb[0].mxu0 %v2546
        %v2802 = vpop.f32.mrb[0].mxu0
        %v2803 = vadd.f32 %v2582, %v2802
        %v2804 = vpop.f32.mrb[0].mxu0
        %v2805 = vpop.f32.mrb[0].mxu0
        %v2806 = vadd.f32 %v2582, %v2805
        %v2807 = vpop.f32.mrb[0].mxu0
        %2808 = vmatprep.mubr.bf16.mxu0 0
        %2809 = vmatmul.mubr.bf16.gmra.mrb[0].mxu0 %v2547
        %v2810 = vpop.f32.mrb[0].mxu0
        %v2811 = vadd.f32 %v2582, %v2810
        %v2812 = vpop.f32.mrb[0].mxu0
        %v2813 = vpop.f32.mrb[0].mxu0
        %v2814 = vadd.f32 %v2582, %v2813
        %v2815 = vpop.f32.mrb[0].mxu0
        %2816 = vmatprep.mubr.bf16.mxu0 0
        %2817 = vmatmul.mubr.bf16.gmra.mrb[0].mxu0 %v2548
        %v2818 = vpop.f32.mrb[0].mxu0
        %v2819 = vadd.f32 %v2582, %v2818
        %v2820 = vpop.f32.mrb[0].mxu0
        %v2821 = vpop.f32.mrb[0].mxu0
        %v2822 = vadd.f32 %v2582, %v2821
        %v2823 = vpop.f32.mrb[0].mxu0
        %2824 = vmatprep.mubr.bf16.mxu0 0
        %2825 = vmatmul.mubr.bf16.gmra.mrb[0].mxu0 %v2549
        %v2826 = vpop.f32.mrb[0].mxu0
        %v2827 = vadd.f32 %v2582, %v2826
        %v2828 = vpop.f32.mrb[0].mxu0
        %v2829 = vpop.f32.mrb[0].mxu0
        %v2830 = vadd.f32 %v2582, %v2829
        %v2831 = vpop.f32.mrb[0].mxu0
        %2832 = vmatprep.mubr.bf16.mxu0 0
        %2833 = vmatmul.mubr.bf16.gmra.mrb[0].mxu0 %v2550
        %v2834 = vpop.f32.mrb[0].mxu0
        %v2835 = vadd.f32 %v2582, %v2834
        %v2836 = vpop.f32.mrb[0].mxu0
        %v2837 = vpop.f32.mrb[0].mxu0
        %v2838 = vadd.f32 %v2582, %v2837
        %v2839 = vpop.f32.mrb[0].mxu0
        %2840 = vmatprep.mubr.bf16.mxu0 0
        %2841 = vmatmul.mubr.bf16.gmra.mrb[0].mxu0 %v2551
        %v2842 = vpop.f32.mrb[0].mxu0
        %v2843 = vadd.f32 %v2582, %v2842
        %v2844 = vpop.f32.mrb[0].mxu0
        %v2845 = vpop.f32.mrb[0].mxu0
        %v2846 = vadd.f32 %v2582, %v2845
        %v2847 = vpop.f32.mrb[0].mxu0
        %2848 = vmatprep.mubr.bf16.mxu0 0
        %2849 = vmatmul.mubr.bf16.gmra.mrb[0].mxu0 %v2552
        %v2850 = vpop.f32.mrb[0].mxu0
        %v2851 = vadd.f32 %v2582, %v2850
        %v2852 = vpop.f32.mrb[0].mxu0
        %v2853 = vpop.f32.mrb[0].mxu0
        %v2854 = vadd.f32 %v2582, %v2853
        %v2855 = vpop.f32.mrb[0].mxu0
        %2856 = vmatprep.mubr.bf16.mxu0 0
        %2857 = vmatmul.mubr.bf16.gmra.mrb[0].mxu0 %v2553
        %v2858 = vpop.f32.mrb[0].mxu0
        %v2859 = vadd.f32 %v2582, %v2858
        %v2860 = vpop.f32.mrb[0].mxu0
        %v2861 = vpop.f32.mrb[0].mxu0
        %v2862 = vadd.f32 %v2582, %v2861
        %v2863 = vpop.f32.mrb[0].mxu0
        %2864 = vmatprep.mubr.bf16.mxu0 0
        %2865 = vmatmul.mubr.bf16.gmra.mrb[0].mxu0 %v2554
        %v2866 = vpop.f32.mrb[0].mxu0
        %v2867 = vadd.f32 %v2582, %v2866
        %v2868 = vpop.f32.mrb[0].mxu0
        %v2869 = vpop.f32.mrb[0].mxu0
        %v2870 = vadd.f32 %v2582, %v2869
        %v2871 = vpop.f32.mrb[0].mxu0
        %2872 = vmatprep.mubr.bf16.mxu0 0
        %2873 = vmatmul.mubr.bf16.gmra.mrb[0].mxu0 %v2555
        %v2874 = vpop.f32.mrb[0].mxu0
        %v2875 = vadd.f32 %v2582, %v2874
        %v2876 = vpop.f32.mrb[0].mxu0
        %v2877 = vpop.f32.mrb[0].mxu0
        %v2878 = vadd.f32 %v2582, %v2877
        %v2879 = vpop.f32.mrb[0].mxu0
        %2880 = vmatprep.mubr.bf16.mxu0 0
        %2881 = vmatmul.mubr.bf16.gmra.mrb[0].mxu0 %v2556
        %v2882 = vpop.f32.mrb[0].mxu0
        %v2883 = vadd.f32 %v2582, %v2882
        %v2884 = vpop.f32.mrb[0].mxu0
        %v2885 = vpop.f32.mrb[0].mxu0
        %v2886 = vadd.f32 %v2582, %v2885
        %v2887 = vpop.f32.mrb[0].mxu0
        %2888 = vmatprep.mubr.bf16.mxu0 0
        %2889 = vmatmul.mubr.bf16.gmra.mrb[0].mxu0 %v2557
        %v2890 = vpop.f32.mrb[0].mxu0
        %v2891 = vadd.f32 %v2582, %v2890
        %v2892 = vpop.f32.mrb[0].mxu0
        %v2893 = vpop.f32.mrb[0].mxu0
        %v2894 = vadd.f32 %v2582, %v2893
        %v2895 = vpop.f32.mrb[0].mxu0
        %2896 = vmatprep.mubr.bf16.mxu0 0
        %2897 = vmatmul.mubr.bf16.gmra.mrb[0].mxu0 %v2558
        %v2898 = vpop.f32.mrb[0].mxu0
        %v2899 = vadd.f32 %v2582, %v2898
        %v2900 = vpop.f32.mrb[0].mxu0
        %v2901 = vpop.f32.mrb[0].mxu0
        %v2902 = vadd.f32 %v2582, %v2901
        %v2903 = vpop.f32.mrb[0].mxu0
        %2904 = vmatprep.mubr.bf16.mxu0 0
        %2905 = vmatmul.mubr.bf16.gmra.mrb[0].mxu0 %v2559
        %v2906 = vpop.f32.mrb[0].mxu0
        %v2907 = vadd.f32 %v2582, %v2906
        %v2908 = vpop.f32.mrb[0].mxu0
        %v2909 = vpop.f32.mrb[0].mxu0
        %v2910 = vadd.f32 %v2582, %v2909
        %v2911 = vpop.f32.mrb[0].mxu0
        %2912 = vmatprep.mubr.bf16.mxu0 0
        %2913 = vmatmul.mubr.bf16.gmra.mrb[0].mxu0 %v2560
        %v2914 = vpop.f32.mrb[0].mxu0
        %v2915 = vadd.f32 %v2582, %v2914
        %v2916 = vpop.f32.mrb[0].mxu0
        %v2917 = vpop.f32.mrb[0].mxu0
        %v2918 = vpop.f32.mrb[0].mxu0
        %2919 = vdwg.mxu0
        %vm2920 = vcmp.gt.f32.partialorder %v2667, 0.0
        %vm2921 = vcmp.gt.f32.partialorder %v2670, 0.0
        %vm2922 = vcmp.gt.f32.partialorder %v2675, 0.0
        %vm2923 = vcmp.gt.f32.partialorder %v2678, 0.0
        %vm2924 = vcmp.gt.f32.partialorder %v2683, 0.0
        %vm2925 = vcmp.gt.f32.partialorder %v2686, 0.0
        %vm2926 = vcmp.gt.f32.partialorder %v2691, 0.0
        %vm2927 = vcmp.gt.f32.partialorder %v2694, 0.0
        %vm2928 = vcmp.gt.f32.partialorder %v2699, 0.0
        %vm2929 = vcmp.gt.f32.partialorder %v2702, 0.0
        %vm2930 = vcmp.gt.f32.partialorder %v2707, 0.0
        %vm2931 = vcmp.gt.f32.partialorder %v2710, 0.0
        %vm2932 = vcmp.gt.f32.partialorder %v2715, 0.0
        %vm2933 = vcmp.gt.f32.partialorder %v2718, 0.0
        %vm2934 = vcmp.gt.f32.partialorder %v2723, 0.0
        %vm2935 = vcmp.gt.f32.partialorder %v2726, 0.0
        %vm2936 = vcmp.gt.f32.partialorder %v2731, 0.0
        %vm2937 = vcmp.gt.f32.partialorder %v2734, 0.0
        %vm2938 = vcmp.gt.f32.partialorder %v2739, 0.0
        %vm2939 = vcmp.gt.f32.partialorder %v2742, 0.0
        %vm2940 = vcmp.gt.f32.partialorder %v2747, 0.0
        %vm2941 = vcmp.gt.f32.partialorder %v2750, 0.0
        %vm2942 = vcmp.gt.f32.partialorder %v2755, 0.0
        %vm2943 = vcmp.gt.f32.partialorder %v2758, 0.0
        %vm2944 = vcmp.gt.f32.partialorder %v2763, 0.0
        %vm2945 = vcmp.gt.f32.partialorder %v2766, 0.0
        %vm2946 = vcmp.gt.f32.partialorder %v2771, 0.0
        %vm2947 = vcmp.gt.f32.partialorder %v2774, 0.0
        %vm2948 = vcmp.gt.f32.partialorder %v2779, 0.0
        %vm2949 = vcmp.gt.f32.partialorder %v2782, 0.0
        %vm2950 = vcmp.gt.f32.partialorder %v2787, 0.0
        %vm2951 = vcmp.gt.f32.partialorder %v2790, 0.0
        %vm2952 = vcmp.gt.f32.partialorder %v2795, 0.0
        %vm2953 = vcmp.gt.f32.partialorder %v2798, 0.0
        %vm2954 = vcmp.gt.f32.partialorder %v2803, 0.0
        %vm2955 = vcmp.gt.f32.partialorder %v2806, 0.0
        %vm2956 = vcmp.gt.f32.partialorder %v2811, 0.0
        %vm2957 = vcmp.gt.f32.partialorder %v2814, 0.0
        %vm2958 = vcmp.gt.f32.partialorder %v2819, 0.0
        %vm2959 = vcmp.gt.f32.partialorder %v2822, 0.0
        %vm2960 = vcmp.gt.f32.partialorder %v2827, 0.0
        %vm2961 = vcmp.gt.f32.partialorder %v2830, 0.0
        %vm2962 = vcmp.gt.f32.partialorder %v2835, 0.0
        %vm2963 = vcmp.gt.f32.partialorder %v2838, 0.0
        %vm2964 = vcmp.gt.f32.partialorder %v2843, 0.0
        %vm2965 = vcmp.gt.f32.partialorder %v2846, 0.0
        %vm2966 = vcmp.gt.f32.partialorder %v2851, 0.0
        %vm2967 = vcmp.gt.f32.partialorder %v2854, 0.0
        %vm2968 = vcmp.gt.f32.partialorder %v2859, 0.0
        %vm2969 = vcmp.gt.f32.partialorder %v2862, 0.0
        %vm2970 = vcmp.gt.f32.partialorder %v2867, 0.0
        %vm2971 = vcmp.gt.f32.partialorder %v2870, 0.0
        %vm2972 = vcmp.gt.f32.partialorder %v2875, 0.0
        %vm2973 = vcmp.gt.f32.partialorder %v2878, 0.0
        %vm2974 = vcmp.gt.f32.partialorder %v2883, 0.0
        %vm2975 = vcmp.gt.f32.partialorder %v2886, 0.0
        %vm2976 = vcmp.gt.f32.partialorder %v2891, 0.0
        %vm2977 = vcmp.gt.f32.partialorder %v2894, 0.0
        %vm2978 = vcmp.gt.f32.partialorder %v2899, 0.0
        %vm2979 = vcmp.gt.f32.partialorder %v2902, 0.0
        %vm2980 = vcmp.gt.f32.partialorder %v2907, 0.0
        %vm2981 = vcmp.gt.f32.partialorder %v2910, 0.0
        %vm2982 = vcmp.gt.f32.partialorder %v2915, 0.0
        %v2983 = vmul.f32 %v2667, 1.442695
        %v2984 = vpow.pop %v2983
        %v2985 = vmul.f32 %v2670, 1.442695
        %v2986 = vpow.pop %v2985
        %v2987 = vmul.f32 %v2675, 1.442695
        %v2988 = vpow.pop %v2987
        %v2989 = vmul.f32 %v2678, 1.442695
        %v2990 = vpow.pop %v2989
        %v2991 = vmul.f32 %v2683, 1.442695
        %v2992 = vpow.pop %v2991
        %v2993 = vmul.f32 %v2686, 1.442695
        %v2994 = vpow.pop %v2993
        %v2995 = vmul.f32 %v2691, 1.442695
        %v2996 = vpow.pop %v2995
        %v2997 = vmul.f32 %v2694, 1.442695
        %v2998 = vpow.pop %v2997
        %v2999 = vmul.f32 %v2699, 1.442695
        %v3000 = vpow.pop %v2999
        %v3001 = vmul.f32 %v2702, 1.442695
        %v3002 = vpow.pop %v3001
        %v3003 = vmul.f32 %v2707, 1.442695
        %v3004 = vpow.pop %v3003
        %v3005 = vmul.f32 %v2710, 1.442695
        %v3006 = vpow.pop %v3005
        %v3007 = vmul.f32 %v2715, 1.442695
        %v3008 = vpow.pop %v3007
        %v3009 = vmul.f32 %v2718, 1.442695
        %v3010 = vpow.pop %v3009
        %v3011 = vmul.f32 %v2723, 1.442695
        %v3012 = vpow.pop %v3011
        %v3013 = vmul.f32 %v2726, 1.442695
        %v3014 = vpow.pop %v3013
        %v3015 = vmul.f32 %v2731, 1.442695
        %v3016 = vpow.pop %v3015
        %v3017 = vmul.f32 %v2734, 1.442695
        %v3018 = vpow.pop %v3017
        %v3019 = vmul.f32 %v2739, 1.442695
        %v3020 = vpow.pop %v3019
        %v3021 = vmul.f32 %v2742, 1.442695
        %v3022 = vpow.pop %v3021
        %v3023 = vmul.f32 %v2747, 1.442695
        %v3024 = vpow.pop %v3023
        %v3025 = vmul.f32 %v2750, 1.442695
        %v3026 = vpow.pop %v3025
        %v3027 = vmul.f32 %v2755, 1.442695
        %v3028 = vpow.pop %v3027
        %v3029 = vmul.f32 %v2758, 1.442695
        %v3030 = vpow.pop %v3029
        %v3031 = vmul.f32 %v2763, 1.442695
        %v3032 = vpow.pop %v3031
        %v3033 = vmul.f32 %v2766, 1.442695
        %v3034 = vpow.pop %v3033
        %v3035 = vmul.f32 %v2771, 1.442695
        %v3036 = vpow.pop %v3035
        %v3037 = vmul.f32 %v2774, 1.442695
        %v3038 = vpow.pop %v3037
        %v3039 = vmul.f32 %v2779, 1.442695
        %v3040 = vpow.pop %v3039
        %v3041 = vmul.f32 %v2782, 1.442695
        %v3042 = vpow.pop %v3041
        %v3043 = vmul.f32 %v2787, 1.442695
        %v3044 = vpow.pop %v3043
        %v3045 = vmul.f32 %v2790, 1.442695
        %v3046 = vpow.pop %v3045
        %v3047 = vmul.f32 %v2795, 1.442695
        %v3048 = vpow.pop %v3047
        %v3049 = vmul.f32 %v2798, 1.442695
        %v3050 = vpow.pop %v3049
        %v3051 = vmul.f32 %v2803, 1.442695
        %v3052 = vpow.pop %v3051
        %v3053 = vmul.f32 %v2806, 1.442695
        %v3054 = vpow.pop %v3053
        %v3055 = vmul.f32 %v2811, 1.442695
        %v3056 = vpow.pop %v3055
        %v3057 = vmul.f32 %v2814, 1.442695
        %v3058 = vpow.pop %v3057
        %v3059 = vmul.f32 %v2819, 1.442695
        %v3060 = vpow.pop %v3059
        %v3061 = vmul.f32 %v2822, 1.442695
        %v3062 = vpow.pop %v3061
        %v3063 = vmul.f32 %v2827, 1.442695
        %v3064 = vpow.pop %v3063
        %v3065 = vmul.f32 %v2830, 1.442695
        %v3066 = vpow.pop %v3065
        %v3067 = vmul.f32 %v2835, 1.442695
        %v3068 = vpow.pop %v3067
        %v3069 = vmul.f32 %v2838, 1.442695
        %v3070 = vpow.pop %v3069
        %v3071 = vmul.f32 %v2843, 1.442695
        %v3072 = vpow.pop %v3071
        %v3073 = vmul.f32 %v2846, 1.442695
        %v3074 = vpow.pop %v3073
        %v3075 = vmul.f32 %v2851, 1.442695
        %v3076 = vpow.pop %v3075
        %v3077 = vmul.f32 %v2854, 1.442695
        %v3078 = vpow.pop %v3077
        %v3079 = vmul.f32 %v2859, 1.442695
        %v3080 = vpow.pop %v3079
        %v3081 = vmul.f32 %v2862, 1.442695
        %v3082 = vpow.pop %v3081
        %v3083 = vmul.f32 %v2867, 1.442695
        %v3084 = vpow.pop %v3083
        %v3085 = vmul.f32 %v2870, 1.442695
        %v3086 = vpow.pop %v3085
        %v3087 = vmul.f32 %v2875, 1.442695
        %v3088 = vpow.pop %v3087
        %v3089 = vmul.f32 %v2878, 1.442695
        %v3090 = vpow.pop %v3089
        %v3091 = vmul.f32 %v2883, 1.442695
        %v3092 = vpow.pop %v3091
        %v3093 = vmul.f32 %v2886, 1.442695
        %v3094 = vpow.pop %v3093
        %v3095 = vmul.f32 %v2891, 1.442695
        %v3096 = vpow.pop %v3095
        %v3097 = vmul.f32 %v2894, 1.442695
        %v3098 = vpow.pop %v3097
        %v3099 = vmul.f32 %v2899, 1.442695
        %v3100 = vpow.pop %v3099
        %v3101 = vmul.f32 %v2902, 1.442695
        %v3102 = vpow.pop %v3101
        %v3103 = vmul.f32 %v2907, 1.442695
        %v3104 = vpow.pop %v3103
        %v3105 = vmul.f32 %v2910, 1.442695
        %v3106 = vpow.pop %v3105
        %v3107 = vmul.f32 %v2915, 1.442695
        %v3108 = vpow.pop %v3107
        %v3109 = vsub.f32 %v2984, 1.0
        %v3110 = vsub.f32 %v2986, 1.0
        %v3111 = vsub.f32 %v2988, 1.0
        %v3112 = vsub.f32 %v2990, 1.0
        %v3113 = vsub.f32 %v2992, 1.0
        %v3114 = vsub.f32 %v2994, 1.0
        %v3115 = vsub.f32 %v2996, 1.0
        %v3116 = vsub.f32 %v2998, 1.0
        %v3117 = vsub.f32 %v3000, 1.0
        %v3118 = vsub.f32 %v3002, 1.0
        %v3119 = vsub.f32 %v3004, 1.0
        %v3120 = vsub.f32 %v3006, 1.0
        %v3121 = vsub.f32 %v3008, 1.0
        %v3122 = vsub.f32 %v3010, 1.0
        %v3123 = vsub.f32 %v3012, 1.0
        %v3124 = vsub.f32 %v3014, 1.0
        %v3125 = vsub.f32 %v3016, 1.0
        %v3126 = vsub.f32 %v3018, 1.0
        %v3127 = vsub.f32 %v3020, 1.0
        %v3128 = vsub.f32 %v3022, 1.0
        %v3129 = vsub.f32 %v3024, 1.0
        %v3130 = vsub.f32 %v3026, 1.0
        %v3131 = vsub.f32 %v3028, 1.0
        %v3132 = vsub.f32 %v3030, 1.0
        %v3133 = vsub.f32 %v3032, 1.0
        %v3134 = vsub.f32 %v3034, 1.0
        %v3135 = vsub.f32 %v3036, 1.0
        %v3136 = vsub.f32 %v3038, 1.0
        %v3137 = vsub.f32 %v3040, 1.0
        %v3138 = vsub.f32 %v3042, 1.0
        %v3139 = vsub.f32 %v3044, 1.0
        %v3140 = vsub.f32 %v3046, 1.0
        %v3141 = vsub.f32 %v3048, 1.0
        %v3142 = vsub.f32 %v3050, 1.0
        %v3143 = vsub.f32 %v3052, 1.0
        %v3144 = vsub.f32 %v3054, 1.0
        %v3145 = vsub.f32 %v3056, 1.0
        %v3146 = vsub.f32 %v3058, 1.0
        %v3147 = vsub.f32 %v3060, 1.0
        %v3148 = vsub.f32 %v3062, 1.0
        %v3149 = vsub.f32 %v3064, 1.0
        %v3150 = vsub.f32 %v3066, 1.0
        %v3151 = vsub.f32 %v3068, 1.0
        %v3152 = vsub.f32 %v3070, 1.0
        %v3153 = vsub.f32 %v3072, 1.0
        %v3154 = vsub.f32 %v3074, 1.0
        %v3155 = vsub.f32 %v3076, 1.0
        %v3156 = vsub.f32 %v3078, 1.0
        %v3157 = vsub.f32 %v3080, 1.0
        %v3158 = vsub.f32 %v3082, 1.0
        %v3159 = vsub.f32 %v3084, 1.0
        %v3160 = vsub.f32 %v3086, 1.0
        %v3161 = vsub.f32 %v3088, 1.0
        %v3162 = vsub.f32 %v3090, 1.0
        %v3163 = vsub.f32 %v3092, 1.0
        %v3164 = vsub.f32 %v3094, 1.0
        %v3165 = vsub.f32 %v3096, 1.0
        %v3166 = vsub.f32 %v3098, 1.0
        %v3167 = vsub.f32 %v3100, 1.0
        %v3168 = vsub.f32 %v3102, 1.0
        %v3169 = vsub.f32 %v3104, 1.0
        %v3170 = vsub.f32 %v3106, 1.0
        %v3171 = vsub.f32 %v3108, 1.0
        %v3172 = vsel %vm2920, %v2667, %v3109
        %v3173 = vsel %vm2921, %v2670, %v3110
        %v3174 = vsel %vm2922, %v2675, %v3111
        %v3175 = vsel %vm2923, %v2678, %v3112
        %v3176 = vsel %vm2924, %v2683, %v3113
        %v3177 = vsel %vm2925, %v2686, %v3114
        %v3178 = vsel %vm2926, %v2691, %v3115
        %v3179 = vsel %vm2927, %v2694, %v3116
        %v3180 = vsel %vm2928, %v2699, %v3117
        %v3181 = vsel %vm2929, %v2702, %v3118
        %v3182 = vsel %vm2930, %v2707, %v3119
        %v3183 = vsel %vm2931, %v2710, %v3120
        %v3184 = vsel %vm2932, %v2715, %v3121
        %v3185 = vsel %vm2933, %v2718, %v3122
        %v3186 = vsel %vm2934, %v2723, %v3123
        %v3187 = vsel %vm2935, %v2726, %v3124
        %v3188 = vsel %vm2936, %v2731, %v3125
        %v3189 = vsel %vm2937, %v2734, %v3126
        %v3190 = vsel %vm2938, %v2739, %v3127
        %v3191 = vsel %vm2939, %v2742, %v3128
        %v3192 = vsel %vm2940, %v2747, %v3129
        %v3193 = vsel %vm2941, %v2750, %v3130
        %v3194 = vsel %vm2942, %v2755, %v3131
        %v3195 = vsel %vm2943, %v2758, %v3132
        %v3196 = vsel %vm2944, %v2763, %v3133
        %v3197 = vsel %vm2945, %v2766, %v3134
        %v3198 = vsel %vm2946, %v2771, %v3135
        %v3199 = vsel %vm2947, %v2774, %v3136
        %v3200 = vsel %vm2948, %v2779, %v3137
        %v3201 = vsel %vm2949, %v2782, %v3138
        %v3202 = vsel %vm2950, %v2787, %v3139
        %v3203 = vsel %vm2951, %v2790, %v3140
        %v3204 = vsel %vm2952, %v2795, %v3141
        %v3205 = vsel %vm2953, %v2798, %v3142
        %v3206 = vsel %vm2954, %v2803, %v3143
        %v3207 = vsel %vm2955, %v2806, %v3144
        %v3208 = vsel %vm2956, %v2811, %v3145
        %v3209 = vsel %vm2957, %v2814, %v3146
        %v3210 = vsel %vm2958, %v2819, %v3147
        %v3211 = vsel %vm2959, %v2822, %v3148
        %v3212 = vsel %vm2960, %v2827, %v3149
        %v3213 = vsel %vm2961, %v2830, %v3150
        %v3214 = vsel %vm2962, %v2835, %v3151
        %v3215 = vsel %vm2963, %v2838, %v3152
        %v3216 = vsel %vm2964, %v2843, %v3153
        %v3217 = vsel %vm2965, %v2846, %v3154
        %v3218 = vsel %vm2966, %v2851, %v3155
        %v3219 = vsel %vm2967, %v2854, %v3156
        %v3220 = vsel %vm2968, %v2859, %v3157
        %v3221 = vsel %vm2969, %v2862, %v3158
        %v3222 = vsel %vm2970, %v2867, %v3159
        %v3223 = vsel %vm2971, %v2870, %v3160
        %v3224 = vsel %vm2972, %v2875, %v3161
        %v3225 = vsel %vm2973, %v2878, %v3162
        %v3226 = vsel %vm2974, %v2883, %v3163
        %v3227 = vsel %vm2975, %v2886, %v3164
        %v3228 = vsel %vm2976, %v2891, %v3165
        %v3229 = vsel %vm2977, %v2894, %v3166
        %v3230 = vsel %vm2978, %v2899, %v3167
        %v3231 = vsel %vm2979, %v2902, %v3168
        %v3232 = vsel %vm2980, %v2907, %v3169
        %v3233 = vsel %vm2981, %v2910, %v3170
        %v3234 = vsel %vm2982, %v2915, %v3171
        %v3235 = vld [vmem:[%s7] sm:$0xf]
        %v3236 = vld [vmem:[%s7 + $0x4] sm:$0xf]
        %v3237 = vld [vmem:[%s7 + $0x8] sm:$0xf]
        %v3238 = vld [vmem:[%s7 + $0xc] sm:$0xf]
        %v3239 = vld [vmem:[%s7 + $0x10] sm:$0xf]
        %v3240 = vld [vmem:[%s7 + $0x14] sm:$0xf]
        %v3241 = vld [vmem:[%s7 + $0x18] sm:$0xf]
        %v3242 = vld [vmem:[%s7 + $0x1c] sm:$0xf]
        %v3243 = vld [vmem:[%s7 + $0x20] sm:$0xf]
        %v3244 = vld [vmem:[%s7 + $0x24] sm:$0xf]
        %v3245 = vld [vmem:[%s7 + $0x28] sm:$0xf]
        %v3246 = vld [vmem:[%s7 + $0x2c] sm:$0xf]
        %v3247 = vpack.c.bf16 %v3173, %v3172
        %v3248 = vpack.c.bf16 %v3175, %v3174
        %v3249 = vpack.c.bf16 %v3177, %v3176
        %v3250 = vpack.c.bf16 %v3179, %v3178
        %v3251 = vpack.c.bf16 %v3181, %v3180
        %v3252 = vpack.c.bf16 %v3183, %v3182
        %v3253 = vpack.c.bf16 %v3185, %v3184
        %v3254 = vpack.c.bf16 %v3187, %v3186
        %v3255 = vpack.c.bf16 %v3189, %v3188
        %v3256 = vpack.c.bf16 %v3191, %v3190
        %v3257 = vpack.c.bf16 %v3193, %v3192
        %v3258 = vpack.c.bf16 %v3195, %v3194
        %v3259 = vpack.c.bf16 %v3197, %v3196
        %v3260 = vpack.c.bf16 %v3199, %v3198
        %v3261 = vpack.c.bf16 %v3201, %v3200
        %v3262 = vpack.c.bf16 %v3203, %v3202
        %v3263 = vpack.c.bf16 %v3205, %v3204
        %v3264 = vpack.c.bf16 %v3207, %v3206
        %v3265 = vpack.c.bf16 %v3209, %v3208
        %v3266 = vpack.c.bf16 %v3211, %v3210
        %v3267 = vpack.c.bf16 %v3213, %v3212
        %v3268 = vpack.c.bf16 %v3215, %v3214
        %v3269 = vpack.c.bf16 %v3217, %v3216
        %v3270 = vpack.c.bf16 %v3219, %v3218
        %v3271 = vpack.c.bf16 %v3221, %v3220
        %v3272 = vpack.c.bf16 %v3223, %v3222
        %v3273 = vpack.c.bf16 %v3225, %v3224
        %v3274 = vpack.c.bf16 %v3227, %v3226
        %v3275 = vpack.c.bf16 %v3229, %v3228
        %v3276 = vpack.c.bf16 %v3231, %v3230
        %v3277 = vpack.c.bf16 %v3233, %v3232
        %v3278 = vpack.c.bf16 %v3234, %v3234
        %v3279 = vld [vmem:[%s8] sm:$0xf]
        %v3280 = vld [vmem:[%s8 + $0x4] sm:$0xf]
        %v3281 = vld [vmem:[%s8 + $0x8] sm:$0xf]
        %v3282 = vld [vmem:[%s8 + $0xc] sm:$0xf]
        %v3283 = vld [vmem:[%s8 + $0x10] sm:$0xf]
        %v3284 = vld [vmem:[%s8 + $0x14] sm:$0xf]
        %v3285 = vld [vmem:[%s8 + $0x18] sm:$0xf]
        %v3286 = vld [vmem:[%s8 + $0x1c] sm:$0xf]
        %v3287 = vld [vmem:[%s8 + $0x20] sm:$0xf]
        %v3288 = vld [vmem:[%s8 + $0x24] sm:$0xf]
        %v3289 = vld [vmem:[%s8 + $0x28] sm:$0xf]
        %v3290 = vld [vmem:[%s8 + $0x2c] sm:$0xf]
        %v3291 = vld [vmem:[%s8 + $0x30] sm:$0xf]
        %v3292 = vld [vmem:[%s8 + $0x34] sm:$0xf]
        %v3293 = vld [vmem:[%s8 + $0x38] sm:$0xf]
        %v3294 = vld [vmem:[%s8 + $0x3c] sm:$0xf]
        %v3311 = vunpack.c.l.b16 %v3279
        %v3312 = vunpack.c.l.b16 %v3280
        %v3313 = vunpack.c.l.b16 %v3281
        %v3314 = vunpack.c.l.b16 %v3282
        %v3315 = vunpack.c.l.b16 %v3283
        %v3316 = vunpack.c.l.b16 %v3284
        %v3317 = vunpack.c.l.b16 %v3285
        %v3318 = vunpack.c.l.b16 %v3286
        %v3319 = vunpack.c.l.b16 %v3287
        %v3320 = vunpack.c.l.b16 %v3288
        %v3321 = vunpack.c.l.b16 %v3289
        %v3322 = vunpack.c.l.b16 %v3290
        %v3323 = vunpack.c.l.b16 %v3291
        %v3324 = vunpack.c.l.b16 %v3292
        %v3325 = vunpack.c.l.b16 %v3293
        %v3326 = vunpack.c.l.b16 %v3294
        %v3327 = vpack.c.b16 %v3312, %v3311
        %v3328 = vpack.c.b16 %v3314, %v3313
        %v3329 = vpack.c.b16 %v3316, %v3315
        %v3330 = vpack.c.b16 %v3318, %v3317
        %v3331 = vpack.c.b16 %v3320, %v3319
        %v3332 = vpack.c.b16 %v3322, %v3321
        %v3333 = vpack.c.b16 %v3324, %v3323
        %v3334 = vpack.c.b16 %v3326, %v3325
        %3343 = vmatprep.subr.bf16.mxu0 0
        %3344 = vmatpush1.bf16.msra.mxu0 %v3327
        %3345 = vmatprep.subr.bf16.mxu0 0
        %3346 = vmatpush1.bf16.msra.mxu0 %v3328
        %3347 = vmatprep.subr.bf16.mxu0 0
        %3348 = vmatpush1.bf16.msra.mxu0 %v3329
        %3349 = vmatprep.subr.bf16.mxu0 0
        %3350 = vmatpush1.bf16.msra.mxu0 %v3330
        %3351 = vmatprep.subr.bf16.mxu0 0
        %3352 = vmatpush1.bf16.msra.mxu0 %v3331
        %3353 = vmatprep.subr.bf16.mxu0 0
        %3354 = vmatpush1.bf16.msra.mxu0 %v3332
        %3355 = vmatprep.subr.bf16.mxu0 0
        %3356 = vmatpush1.bf16.msra.mxu0 %v3333
        %3357 = vmatprep.subr.bf16.mxu0 0
        %3358 = vmatpush1.bf16.msra.mxu0 %v3334
        %3359 = vmatprep.subr.bf16.mxu0 0
        %3360 = vmatpush1.bf16.msra.mxu0 0
        %3361 = vmatprep.subr.bf16.mxu0 0
        %3362 = vmatpush1.bf16.msra.mxu0 0
        %3363 = vmatprep.subr.bf16.mxu0 0
        %3364 = vmatpush1.bf16.msra.mxu0 0
        %3365 = vmatprep.subr.bf16.mxu0 0
        %3366 = vmatpush1.bf16.msra.mxu0 0
        %3367 = vmatprep.subr.bf16.mxu0 0
        %3368 = vmatpush1.bf16.msra.mxu0 0
        %3369 = vmatprep.subr.bf16.mxu0 0
        %3370 = vmatpush1.bf16.msra.mxu0 0
        %3371 = vmatprep.subr.bf16.mxu0 0
        %3372 = vmatpush1.bf16.msra.mxu0 0
        %3373 = vmatprep.subr.bf16.mxu0 0
        %3374 = vmatpush1.bf16.msra.mxu0 0
        %3375 = vmatprep.mubr.bf16.mxu0 0
        %3376 = vmatmul.mubr.bf16.gmra.mrb[0].mxu0 %v3247
        %v3377 = vpop.f32.mrb[0].mxu0
        %v3378 = vadd.f32 0.0, %v3377
        %v3379 = vpop.f32.mrb[0].mxu0
        %v3380 = vpop.f32.mrb[0].mxu0
        %v3381 = vadd.f32 0.0, %v3380
        %v3382 = vpop.f32.mrb[0].mxu0
        %3383 = vmatprep.mubr.bf16.mxu0 0
        %3384 = vmatmul.mubr.bf16.gmra.mrb[0].mxu0 %v3248
        %v3385 = vpop.f32.mrb[0].mxu0
        %v3386 = vadd.f32 0.0, %v3385
        %v3387 = vpop.f32.mrb[0].mxu0
        %v3388 = vpop.f32.mrb[0].mxu0
        %v3389 = vadd.f32 0.0, %v3388
        %v3390 = vpop.f32.mrb[0].mxu0
        %3391 = vmatprep.mubr.bf16.mxu0 0
        %3392 = vmatmul.mubr.bf16.gmra.mrb[0].mxu0 %v3249
        %v3393 = vpop.f32.mrb[0].mxu0
        %v3394 = vadd.f32 0.0, %v3393
        %v3395 = vpop.f32.mrb[0].mxu0
        %v3396 = vpop.f32.mrb[0].mxu0
        %v3397 = vadd.f32 0.0, %v3396
        %v3398 = vpop.f32.mrb[0].mxu0
        %3399 = vmatprep.mubr.bf16.mxu0 0
        %3400 = vmatmul.mubr.bf16.gmra.mrb[0].mxu0 %v3250
        %v3401 = vpop.f32.mrb[0].mxu0
        %v3402 = vadd.f32 0.0, %v3401
        %v3403 = vpop.f32.mrb[0].mxu0
        %v3404 = vpop.f32.mrb[0].mxu0
        %v3405 = vadd.f32 0.0, %v3404
        %v3406 = vpop.f32.mrb[0].mxu0
        %3407 = vmatprep.mubr.bf16.mxu0 0
        %3408 = vmatmul.mubr.bf16.gmra.mrb[0].mxu0 %v3251
        %v3409 = vpop.f32.mrb[0].mxu0
        %v3410 = vadd.f32 0.0, %v3409
        %v3411 = vpop.f32.mrb[0].mxu0
        %v3412 = vpop.f32.mrb[0].mxu0
        %v3413 = vadd.f32 0.0, %v3412
        %v3414 = vpop.f32.mrb[0].mxu0
        %3415 = vmatprep.mubr.bf16.mxu0 0
        %3416 = vmatmul.mubr.bf16.gmra.mrb[0].mxu0 %v3252
        %v3417 = vpop.f32.mrb[0].mxu0
        %v3418 = vadd.f32 0.0, %v3417
        %v3419 = vpop.f32.mrb[0].mxu0
        %v3420 = vpop.f32.mrb[0].mxu0
        %v3421 = vadd.f32 0.0, %v3420
        %v3422 = vpop.f32.mrb[0].mxu0
        %3423 = vmatprep.mubr.bf16.mxu0 0
        %3424 = vmatmul.mubr.bf16.gmra.mrb[0].mxu0 %v3253
        %v3425 = vpop.f32.mrb[0].mxu0
        %v3426 = vadd.f32 0.0, %v3425
        %v3427 = vpop.f32.mrb[0].mxu0
        %v3428 = vpop.f32.mrb[0].mxu0
        %v3429 = vadd.f32 0.0, %v3428
        %v3430 = vpop.f32.mrb[0].mxu0
        %3431 = vmatprep.mubr.bf16.mxu0 0
        %3432 = vmatmul.mubr.bf16.gmra.mrb[0].mxu0 %v3254
        %v3433 = vpop.f32.mrb[0].mxu0
        %v3434 = vadd.f32 0.0, %v3433
        %v3435 = vpop.f32.mrb[0].mxu0
        %v3436 = vpop.f32.mrb[0].mxu0
        %v3437 = vadd.f32 0.0, %v3436
        %v3438 = vpop.f32.mrb[0].mxu0
        %3439 = vmatprep.mubr.bf16.mxu0 0
        %3440 = vmatmul.mubr.bf16.gmra.mrb[0].mxu0 %v3255
        %v3441 = vpop.f32.mrb[0].mxu0
        %v3442 = vadd.f32 0.0, %v3441
        %v3443 = vpop.f32.mrb[0].mxu0
        %v3444 = vpop.f32.mrb[0].mxu0
        %v3445 = vadd.f32 0.0, %v3444
        %v3446 = vpop.f32.mrb[0].mxu0
        %3447 = vmatprep.mubr.bf16.mxu0 0
        %3448 = vmatmul.mubr.bf16.gmra.mrb[0].mxu0 %v3256
        %v3449 = vpop.f32.mrb[0].mxu0
        %v3450 = vadd.f32 0.0, %v3449
        %v3451 = vpop.f32.mrb[0].mxu0
        %v3452 = vpop.f32.mrb[0].mxu0
        %v3453 = vadd.f32 0.0, %v3452
        %v3454 = vpop.f32.mrb[0].mxu0
        %3455 = vmatprep.mubr.bf16.mxu0 0
        %3456 = vmatmul.mubr.bf16.gmra.mrb[0].mxu0 %v3257
        %v3457 = vpop.f32.mrb[0].mxu0
        %v3458 = vadd.f32 0.0, %v3457
        %v3459 = vpop.f32.mrb[0].mxu0
        %v3460 = vpop.f32.mrb[0].mxu0
        %v3461 = vadd.f32 0.0, %v3460
        %v3462 = vpop.f32.mrb[0].mxu0
        %3463 = vmatprep.mubr.bf16.mxu0 0
        %3464 = vmatmul.mubr.bf16.gmra.mrb[0].mxu0 %v3258
        %v3465 = vpop.f32.mrb[0].mxu0
        %v3466 = vadd.f32 0.0, %v3465
        %v3467 = vpop.f32.mrb[0].mxu0
        %v3468 = vpop.f32.mrb[0].mxu0
        %v3469 = vadd.f32 0.0, %v3468
        %v3470 = vpop.f32.mrb[0].mxu0
        %3471 = vmatprep.mubr.bf16.mxu0 0
        %3472 = vmatmul.mubr.bf16.gmra.mrb[0].mxu0 %v3259
        %v3473 = vpop.f32.mrb[0].mxu0
        %v3474 = vadd.f32 0.0, %v3473
        %v3475 = vpop.f32.mrb[0].mxu0
        %v3476 = vpop.f32.mrb[0].mxu0
        %v3477 = vadd.f32 0.0, %v3476
        %v3478 = vpop.f32.mrb[0].mxu0
        %3479 = vmatprep.mubr.bf16.mxu0 0
        %3480 = vmatmul.mubr.bf16.gmra.mrb[0].mxu0 %v3260
        %v3481 = vpop.f32.mrb[0].mxu0
        %v3482 = vadd.f32 0.0, %v3481
        %v3483 = vpop.f32.mrb[0].mxu0
        %v3484 = vpop.f32.mrb[0].mxu0
        %v3485 = vadd.f32 0.0, %v3484
        %v3486 = vpop.f32.mrb[0].mxu0
        %3487 = vmatprep.mubr.bf16.mxu0 0
        %3488 = vmatmul.mubr.bf16.gmra.mrb[0].mxu0 %v3261
        %v3489 = vpop.f32.mrb[0].mxu0
        %v3490 = vadd.f32 0.0, %v3489
        %v3491 = vpop.f32.mrb[0].mxu0
        %v3492 = vpop.f32.mrb[0].mxu0
        %v3493 = vadd.f32 0.0, %v3492
        %v3494 = vpop.f32.mrb[0].mxu0
        %3495 = vmatprep.mubr.bf16.mxu0 0
        %3496 = vmatmul.mubr.bf16.gmra.mrb[0].mxu0 %v3262
        %v3497 = vpop.f32.mrb[0].mxu0
        %v3498 = vadd.f32 0.0, %v3497
        %v3499 = vpop.f32.mrb[0].mxu0
        %v3500 = vpop.f32.mrb[0].mxu0
        %v3501 = vadd.f32 0.0, %v3500
        %v3502 = vpop.f32.mrb[0].mxu0
        %3503 = vmatprep.mubr.bf16.mxu0 0
        %3504 = vmatmul.mubr.bf16.gmra.mrb[0].mxu0 %v3263
        %v3505 = vpop.f32.mrb[0].mxu0
        %v3506 = vadd.f32 0.0, %v3505
        %v3507 = vpop.f32.mrb[0].mxu0
        %v3508 = vpop.f32.mrb[0].mxu0
        %v3509 = vadd.f32 0.0, %v3508
        %v3510 = vpop.f32.mrb[0].mxu0
        %3511 = vmatprep.mubr.bf16.mxu0 0
        %3512 = vmatmul.mubr.bf16.gmra.mrb[0].mxu0 %v3264
        %v3513 = vpop.f32.mrb[0].mxu0
        %v3514 = vadd.f32 0.0, %v3513
        %v3515 = vpop.f32.mrb[0].mxu0
        %v3516 = vpop.f32.mrb[0].mxu0
        %v3517 = vadd.f32 0.0, %v3516
        %v3518 = vpop.f32.mrb[0].mxu0
        %3519 = vmatprep.mubr.bf16.mxu0 0
        %3520 = vmatmul.mubr.bf16.gmra.mrb[0].mxu0 %v3265
        %v3521 = vpop.f32.mrb[0].mxu0
        %v3522 = vadd.f32 0.0, %v3521
        %v3523 = vpop.f32.mrb[0].mxu0
        %v3524 = vpop.f32.mrb[0].mxu0
        %v3525 = vadd.f32 0.0, %v3524
        %v3526 = vpop.f32.mrb[0].mxu0
        %3527 = vmatprep.mubr.bf16.mxu0 0
        %3528 = vmatmul.mubr.bf16.gmra.mrb[0].mxu0 %v3266
        %v3529 = vpop.f32.mrb[0].mxu0
        %v3530 = vadd.f32 0.0, %v3529
        %v3531 = vpop.f32.mrb[0].mxu0
        %v3532 = vpop.f32.mrb[0].mxu0
        %v3533 = vadd.f32 0.0, %v3532
        %v3534 = vpop.f32.mrb[0].mxu0
        %3535 = vmatprep.mubr.bf16.mxu0 0
        %3536 = vmatmul.mubr.bf16.gmra.mrb[0].mxu0 %v3267
        %v3537 = vpop.f32.mrb[0].mxu0
        %v3538 = vadd.f32 0.0, %v3537
        %v3539 = vpop.f32.mrb[0].mxu0
        %v3540 = vpop.f32.mrb[0].mxu0
        %v3541 = vadd.f32 0.0, %v3540
        %v3542 = vpop.f32.mrb[0].mxu0
        %3543 = vmatprep.mubr.bf16.mxu0 0
        %3544 = vmatmul.mubr.bf16.gmra.mrb[0].mxu0 %v3268
        %v3545 = vpop.f32.mrb[0].mxu0
        %v3546 = vadd.f32 0.0, %v3545
        %v3547 = vpop.f32.mrb[0].mxu0
        %v3548 = vpop.f32.mrb[0].mxu0
        %v3549 = vadd.f32 0.0, %v3548
        %v3550 = vpop.f32.mrb[0].mxu0
        %3551 = vmatprep.mubr.bf16.mxu0 0
        %3552 = vmatmul.mubr.bf16.gmra.mrb[0].mxu0 %v3269
        %v3553 = vpop.f32.mrb[0].mxu0
        %v3554 = vadd.f32 0.0, %v3553
        %v3555 = vpop.f32.mrb[0].mxu0
        %v3556 = vpop.f32.mrb[0].mxu0
        %v3557 = vadd.f32 0.0, %v3556
        %v3558 = vpop.f32.mrb[0].mxu0
        %3559 = vmatprep.mubr.bf16.mxu0 0
        %3560 = vmatmul.mubr.bf16.gmra.mrb[0].mxu0 %v3270
        %v3561 = vpop.f32.mrb[0].mxu0
        %v3562 = vadd.f32 0.0, %v3561
        %v3563 = vpop.f32.mrb[0].mxu0
        %v3564 = vpop.f32.mrb[0].mxu0
        %v3565 = vadd.f32 0.0, %v3564
        %v3566 = vpop.f32.mrb[0].mxu0
        %3567 = vmatprep.mubr.bf16.mxu0 0
        %3568 = vmatmul.mubr.bf16.gmra.mrb[0].mxu0 %v3271
        %v3569 = vpop.f32.mrb[0].mxu0
        %v3570 = vadd.f32 0.0, %v3569
        %v3571 = vpop.f32.mrb[0].mxu0
        %v3572 = vpop.f32.mrb[0].mxu0
        %v3573 = vadd.f32 0.0, %v3572
        %v3574 = vpop.f32.mrb[0].mxu0
        %3575 = vmatprep.mubr.bf16.mxu0 0
        %3576 = vmatmul.mubr.bf16.gmra.mrb[0].mxu0 %v3272
        %v3577 = vpop.f32.mrb[0].mxu0
        %v3578 = vadd.f32 0.0, %v3577
        %v3579 = vpop.f32.mrb[0].mxu0
        %v3580 = vpop.f32.mrb[0].mxu0
        %v3581 = vadd.f32 0.0, %v3580
        %v3582 = vpop.f32.mrb[0].mxu0
        %3583 = vmatprep.mubr.bf16.mxu0 0
        %3584 = vmatmul.mubr.bf16.gmra.mrb[0].mxu0 %v3273
        %v3585 = vpop.f32.mrb[0].mxu0
        %v3586 = vadd.f32 0.0, %v3585
        %v3587 = vpop.f32.mrb[0].mxu0
        %v3588 = vpop.f32.mrb[0].mxu0
        %v3589 = vadd.f32 0.0, %v3588
        %v3590 = vpop.f32.mrb[0].mxu0
        %3591 = vmatprep.mubr.bf16.mxu0 0
        %3592 = vmatmul.mubr.bf16.gmra.mrb[0].mxu0 %v3274
        %v3593 = vpop.f32.mrb[0].mxu0
        %v3594 = vadd.f32 0.0, %v3593
        %v3595 = vpop.f32.mrb[0].mxu0
        %v3596 = vpop.f32.mrb[0].mxu0
        %v3597 = vadd.f32 0.0, %v3596
        %v3598 = vpop.f32.mrb[0].mxu0
        %3599 = vmatprep.mubr.bf16.mxu0 0
        %3600 = vmatmul.mubr.bf16.gmra.mrb[0].mxu0 %v3275
        %v3601 = vpop.f32.mrb[0].mxu0
        %v3602 = vadd.f32 0.0, %v3601
        %v3603 = vpop.f32.mrb[0].mxu0
        %v3604 = vpop.f32.mrb[0].mxu0
        %v3605 = vadd.f32 0.0, %v3604
        %v3606 = vpop.f32.mrb[0].mxu0
        %3607 = vmatprep.mubr.bf16.mxu0 0
        %3608 = vmatmul.mubr.bf16.gmra.mrb[0].mxu0 %v3276
        %v3609 = vpop.f32.mrb[0].mxu0
        %v3610 = vadd.f32 0.0, %v3609
        %v3611 = vpop.f32.mrb[0].mxu0
        %v3612 = vpop.f32.mrb[0].mxu0
        %v3613 = vadd.f32 0.0, %v3612
        %v3614 = vpop.f32.mrb[0].mxu0
        %3615 = vmatprep.mubr.bf16.mxu0 0
        %3616 = vmatmul.mubr.bf16.gmra.mrb[0].mxu0 %v3277
        %v3617 = vpop.f32.mrb[0].mxu0
        %v3618 = vadd.f32 0.0, %v3617
        %v3619 = vpop.f32.mrb[0].mxu0
        %v3620 = vpop.f32.mrb[0].mxu0
        %v3621 = vadd.f32 0.0, %v3620
        %v3622 = vpop.f32.mrb[0].mxu0
        %3623 = vmatprep.mubr.bf16.mxu0 0
        %3624 = vmatmul.mubr.bf16.gmra.mrb[0].mxu0 %v3278
        %v3625 = vpop.f32.mrb[0].mxu0
        %v3626 = vadd.f32 0.0, %v3625
        %v3627 = vpop.f32.mrb[0].mxu0
        %v3628 = vpop.f32.mrb[0].mxu0
        %v3629 = vpop.f32.mrb[0].mxu0
        %3630 = vdwg.mxu0
        %v3643 = vunpack.c.l.b16 %v3235
        %v3644 = vunpack.c.l.b16 %v3236
        %v3645 = vunpack.c.l.b16 %v3237
        %v3646 = vunpack.c.l.b16 %v3238
        %v3647 = vunpack.c.l.b16 %v3239
        %v3648 = vunpack.c.l.b16 %v3240
        %v3649 = vunpack.c.l.b16 %v3241
        %v3650 = vunpack.c.l.b16 %v3242
        %v3651 = vunpack.c.l.b16 %v3243
        %v3652 = vunpack.c.l.b16 %v3244
        %v3653 = vunpack.c.l.b16 %v3245
        %v3654 = vunpack.c.l.b16 %v3246
        %v3655 = vpack.c.b16 %v3644, %v3643
        %v3656 = vpack.c.b16 %v3646, %v3645
        %v3657 = vpack.c.b16 %v3648, %v3647
        %v3658 = vpack.c.b16 %v3650, %v3649
        %v3659 = vpack.c.b16 %v3652, %v3651
        %v3660 = vpack.c.b16 %v3654, %v3653
        %3667 = vmatprep.subr.bf16.mxu0 0
        %3668 = vmatpush1.bf16.msra.mxu0 %v3655
        %3669 = vmatprep.subr.bf16.mxu0 0
        %3670 = vmatpush1.bf16.msra.mxu0 %v3656
        %3671 = vmatprep.subr.bf16.mxu0 0
        %3672 = vmatpush1.bf16.msra.mxu0 %v3657
        %3673 = vmatprep.subr.bf16.mxu0 0
        %3674 = vmatpush1.bf16.msra.mxu0 %v3658
        %3675 = vmatprep.subr.bf16.mxu0 0
        %3676 = vmatpush1.bf16.msra.mxu0 %v3659
        %3677 = vmatprep.subr.bf16.mxu0 0
        %3678 = vmatpush1.bf16.msra.mxu0 %v3660
        %3679 = vmatprep.subr.bf16.mxu0 0
        %3680 = vmatpush1.bf16.msra.mxu0 0
        %3681 = vmatprep.subr.bf16.mxu0 0
        %3682 = vmatpush1.bf16.msra.mxu0 0
        %3683 = vmatprep.subr.bf16.mxu0 0
        %3684 = vmatpush1.bf16.msra.mxu0 0
        %3685 = vmatprep.subr.bf16.mxu0 0
        %3686 = vmatpush1.bf16.msra.mxu0 0
        %3687 = vmatprep.subr.bf16.mxu0 0
        %3688 = vmatpush1.bf16.msra.mxu0 0
        %3689 = vmatprep.subr.bf16.mxu0 0
        %3690 = vmatpush1.bf16.msra.mxu0 0
        %3691 = vmatprep.subr.bf16.mxu0 0
        %3692 = vmatpush1.bf16.msra.mxu0 0
        %3693 = vmatprep.subr.bf16.mxu0 0
        %3694 = vmatpush1.bf16.msra.mxu0 0
        %3695 = vmatprep.subr.bf16.mxu0 0
        %3696 = vmatpush1.bf16.msra.mxu0 0
        %3697 = vmatprep.subr.bf16.mxu0 0
        %3698 = vmatpush1.bf16.msra.mxu0 0
        %3699 = vmatprep.mubr.bf16.mxu0 0
        %3700 = vmatmul.mubr.bf16.gmra.mrb[0].mxu0 %v651
        %v3701 = vpop.f32.mrb[0].mxu0
        %v3702 = vadd.f32 %v3378, %v3701
        %v3703 = vpop.f32.mrb[0].mxu0
        %v3704 = vpop.f32.mrb[0].mxu0
        %v3705 = vadd.f32 %v3381, %v3704
        %v3706 = vpop.f32.mrb[0].mxu0
        %3707 = vmatprep.mubr.bf16.mxu0 0
        %3708 = vmatmul.mubr.bf16.gmra.mrb[0].mxu0 %v654
        %v3709 = vpop.f32.mrb[0].mxu0
        %v3710 = vadd.f32 %v3386, %v3709
        %v3711 = vpop.f32.mrb[0].mxu0
        %v3712 = vpop.f32.mrb[0].mxu0
        %v3713 = vadd.f32 %v3389, %v3712
        %v3714 = vpop.f32.mrb[0].mxu0
        %3715 = vmatprep.mubr.bf16.mxu0 0
        %3716 = vmatmul.mubr.bf16.gmra.mrb[0].mxu0 %v657
        %v3717 = vpop.f32.mrb[0].mxu0
        %v3718 = vadd.f32 %v3394, %v3717
        %v3719 = vpop.f32.mrb[0].mxu0
        %v3720 = vpop.f32.mrb[0].mxu0
        %v3721 = vadd.f32 %v3397, %v3720
        %v3722 = vpop.f32.mrb[0].mxu0
        %3723 = vmatprep.mubr.bf16.mxu0 0
        %3724 = vmatmul.mubr.bf16.gmra.mrb[0].mxu0 %v660
        %v3725 = vpop.f32.mrb[0].mxu0
        %v3726 = vadd.f32 %v3402, %v3725
        %v3727 = vpop.f32.mrb[0].mxu0
        %v3728 = vpop.f32.mrb[0].mxu0
        %v3729 = vadd.f32 %v3405, %v3728
        %v3730 = vpop.f32.mrb[0].mxu0
        %3731 = vmatprep.mubr.bf16.mxu0 0
        %3732 = vmatmul.mubr.bf16.gmra.mrb[0].mxu0 %v663
        %v3733 = vpop.f32.mrb[0].mxu0
        %v3734 = vadd.f32 %v3410, %v3733
        %v3735 = vpop.f32.mrb[0].mxu0
        %v3736 = vpop.f32.mrb[0].mxu0
        %v3737 = vadd.f32 %v3413, %v3736
        %v3738 = vpop.f32.mrb[0].mxu0
        %3739 = vmatprep.mubr.bf16.mxu0 0
        %3740 = vmatmul.mubr.bf16.gmra.mrb[0].mxu0 %v666
        %v3741 = vpop.f32.mrb[0].mxu0
        %v3742 = vadd.f32 %v3418, %v3741
        %v3743 = vpop.f32.mrb[0].mxu0
        %v3744 = vpop.f32.mrb[0].mxu0
        %v3745 = vadd.f32 %v3421, %v3744
        %v3746 = vpop.f32.mrb[0].mxu0
        %3747 = vmatprep.mubr.bf16.mxu0 0
        %3748 = vmatmul.mubr.bf16.gmra.mrb[0].mxu0 %v669
        %v3749 = vpop.f32.mrb[0].mxu0
        %v3750 = vadd.f32 %v3426, %v3749
        %v3751 = vpop.f32.mrb[0].mxu0
        %v3752 = vpop.f32.mrb[0].mxu0
        %v3753 = vadd.f32 %v3429, %v3752
        %v3754 = vpop.f32.mrb[0].mxu0
        %3755 = vmatprep.mubr.bf16.mxu0 0
        %3756 = vmatmul.mubr.bf16.gmra.mrb[0].mxu0 %v672
        %v3757 = vpop.f32.mrb[0].mxu0
        %v3758 = vadd.f32 %v3434, %v3757
        %v3759 = vpop.f32.mrb[0].mxu0
        %v3760 = vpop.f32.mrb[0].mxu0
        %v3761 = vadd.f32 %v3437, %v3760
        %v3762 = vpop.f32.mrb[0].mxu0
        %3763 = vmatprep.mubr.bf16.mxu0 0
        %3764 = vmatmul.mubr.bf16.gmra.mrb[0].mxu0 %v675
        %v3765 = vpop.f32.mrb[0].mxu0
        %v3766 = vadd.f32 %v3442, %v3765
        %v3767 = vpop.f32.mrb[0].mxu0
        %v3768 = vpop.f32.mrb[0].mxu0
        %v3769 = vadd.f32 %v3445, %v3768
        %v3770 = vpop.f32.mrb[0].mxu0
        %3771 = vmatprep.mubr.bf16.mxu0 0
        %3772 = vmatmul.mubr.bf16.gmra.mrb[0].mxu0 %v678
        %v3773 = vpop.f32.mrb[0].mxu0
        %v3774 = vadd.f32 %v3450, %v3773
        %v3775 = vpop.f32.mrb[0].mxu0
        %v3776 = vpop.f32.mrb[0].mxu0
        %v3777 = vadd.f32 %v3453, %v3776
        %v3778 = vpop.f32.mrb[0].mxu0
        %3779 = vmatprep.mubr.bf16.mxu0 0
        %3780 = vmatmul.mubr.bf16.gmra.mrb[0].mxu0 %v681
        %v3781 = vpop.f32.mrb[0].mxu0
        %v3782 = vadd.f32 %v3458, %v3781
        %v3783 = vpop.f32.mrb[0].mxu0
        %v3784 = vpop.f32.mrb[0].mxu0
        %v3785 = vadd.f32 %v3461, %v3784
        %v3786 = vpop.f32.mrb[0].mxu0
        %3787 = vmatprep.mubr.bf16.mxu0 0
        %3788 = vmatmul.mubr.bf16.gmra.mrb[0].mxu0 %v684
        %v3789 = vpop.f32.mrb[0].mxu0
        %v3790 = vadd.f32 %v3466, %v3789
        %v3791 = vpop.f32.mrb[0].mxu0
        %v3792 = vpop.f32.mrb[0].mxu0
        %v3793 = vadd.f32 %v3469, %v3792
        %v3794 = vpop.f32.mrb[0].mxu0
        %3795 = vmatprep.mubr.bf16.mxu0 0
        %3796 = vmatmul.mubr.bf16.gmra.mrb[0].mxu0 %v687
        %v3797 = vpop.f32.mrb[0].mxu0
        %v3798 = vadd.f32 %v3474, %v3797
        %v3799 = vpop.f32.mrb[0].mxu0
        %v3800 = vpop.f32.mrb[0].mxu0
        %v3801 = vadd.f32 %v3477, %v3800
        %v3802 = vpop.f32.mrb[0].mxu0
        %3803 = vmatprep.mubr.bf16.mxu0 0
        %3804 = vmatmul.mubr.bf16.gmra.mrb[0].mxu0 %v690
        %v3805 = vpop.f32.mrb[0].mxu0
        %v3806 = vadd.f32 %v3482, %v3805
        %v3807 = vpop.f32.mrb[0].mxu0
        %v3808 = vpop.f32.mrb[0].mxu0
        %v3809 = vadd.f32 %v3485, %v3808
        %v3810 = vpop.f32.mrb[0].mxu0
        %3811 = vmatprep.mubr.bf16.mxu0 0
        %3812 = vmatmul.mubr.bf16.gmra.mrb[0].mxu0 %v693
        %v3813 = vpop.f32.mrb[0].mxu0
        %v3814 = vadd.f32 %v3490, %v3813
        %v3815 = vpop.f32.mrb[0].mxu0
        %v3816 = vpop.f32.mrb[0].mxu0
        %v3817 = vadd.f32 %v3493, %v3816
        %v3818 = vpop.f32.mrb[0].mxu0
        %3819 = vmatprep.mubr.bf16.mxu0 0
        %3820 = vmatmul.mubr.bf16.gmra.mrb[0].mxu0 %v696
        %v3821 = vpop.f32.mrb[0].mxu0
        %v3822 = vadd.f32 %v3498, %v3821
        %v3823 = vpop.f32.mrb[0].mxu0
        %v3824 = vpop.f32.mrb[0].mxu0
        %v3825 = vadd.f32 %v3501, %v3824
        %v3826 = vpop.f32.mrb[0].mxu0
        %3827 = vmatprep.mubr.bf16.mxu0 0
        %3828 = vmatmul.mubr.bf16.gmra.mrb[0].mxu0 %v699
        %v3829 = vpop.f32.mrb[0].mxu0
        %v3830 = vadd.f32 %v3506, %v3829
        %v3831 = vpop.f32.mrb[0].mxu0
        %v3832 = vpop.f32.mrb[0].mxu0
        %v3833 = vadd.f32 %v3509, %v3832
        %v3834 = vpop.f32.mrb[0].mxu0
        %3835 = vmatprep.mubr.bf16.mxu0 0
        %3836 = vmatmul.mubr.bf16.gmra.mrb[0].mxu0 %v702
        %v3837 = vpop.f32.mrb[0].mxu0
        %v3838 = vadd.f32 %v3514, %v3837
        %v3839 = vpop.f32.mrb[0].mxu0
        %v3840 = vpop.f32.mrb[0].mxu0
        %v3841 = vadd.f32 %v3517, %v3840
        %v3842 = vpop.f32.mrb[0].mxu0
        %3843 = vmatprep.mubr.bf16.mxu0 0
        %3844 = vmatmul.mubr.bf16.gmra.mrb[0].mxu0 %v705
        %v3845 = vpop.f32.mrb[0].mxu0
        %v3846 = vadd.f32 %v3522, %v3845
        %v3847 = vpop.f32.mrb[0].mxu0
        %v3848 = vpop.f32.mrb[0].mxu0
        %v3849 = vadd.f32 %v3525, %v3848
        %v3850 = vpop.f32.mrb[0].mxu0
        %3851 = vmatprep.mubr.bf16.mxu0 0
        %3852 = vmatmul.mubr.bf16.gmra.mrb[0].mxu0 %v708
        %v3853 = vpop.f32.mrb[0].mxu0
        %v3854 = vadd.f32 %v3530, %v3853
        %v3855 = vpop.f32.mrb[0].mxu0
        %v3856 = vpop.f32.mrb[0].mxu0
        %v3857 = vadd.f32 %v3533, %v3856
        %v3858 = vpop.f32.mrb[0].mxu0
        %3859 = vmatprep.mubr.bf16.mxu0 0
        %3860 = vmatmul.mubr.bf16.gmra.mrb[0].mxu0 %v711
        %v3861 = vpop.f32.mrb[0].mxu0
        %v3862 = vadd.f32 %v3538, %v3861
        %v3863 = vpop.f32.mrb[0].mxu0
        %v3864 = vpop.f32.mrb[0].mxu0
        %v3865 = vadd.f32 %v3541, %v3864
        %v3866 = vpop.f32.mrb[0].mxu0
        %3867 = vmatprep.mubr.bf16.mxu0 0
        %3868 = vmatmul.mubr.bf16.gmra.mrb[0].mxu0 %v714
        %v3869 = vpop.f32.mrb[0].mxu0
        %v3870 = vadd.f32 %v3546, %v3869
        %v3871 = vpop.f32.mrb[0].mxu0
        %v3872 = vpop.f32.mrb[0].mxu0
        %v3873 = vadd.f32 %v3549, %v3872
        %v3874 = vpop.f32.mrb[0].mxu0
        %3875 = vmatprep.mubr.bf16.mxu0 0
        %3876 = vmatmul.mubr.bf16.gmra.mrb[0].mxu0 %v717
        %v3877 = vpop.f32.mrb[0].mxu0
        %v3878 = vadd.f32 %v3554, %v3877
        %v3879 = vpop.f32.mrb[0].mxu0
        %v3880 = vpop.f32.mrb[0].mxu0
        %v3881 = vadd.f32 %v3557, %v3880
        %v3882 = vpop.f32.mrb[0].mxu0
        %3883 = vmatprep.mubr.bf16.mxu0 0
        %3884 = vmatmul.mubr.bf16.gmra.mrb[0].mxu0 %v720
        %v3885 = vpop.f32.mrb[0].mxu0
        %v3886 = vadd.f32 %v3562, %v3885
        %v3887 = vpop.f32.mrb[0].mxu0
        %v3888 = vpop.f32.mrb[0].mxu0
        %v3889 = vadd.f32 %v3565, %v3888
        %v3890 = vpop.f32.mrb[0].mxu0
        %3891 = vmatprep.mubr.bf16.mxu0 0
        %3892 = vmatmul.mubr.bf16.gmra.mrb[0].mxu0 %v723
        %v3893 = vpop.f32.mrb[0].mxu0
        %v3894 = vadd.f32 %v3570, %v3893
        %v3895 = vpop.f32.mrb[0].mxu0
        %v3896 = vpop.f32.mrb[0].mxu0
        %v3897 = vadd.f32 %v3573, %v3896
        %v3898 = vpop.f32.mrb[0].mxu0
        %3899 = vmatprep.mubr.bf16.mxu0 0
        %3900 = vmatmul.mubr.bf16.gmra.mrb[0].mxu0 %v726
        %v3901 = vpop.f32.mrb[0].mxu0
        %v3902 = vadd.f32 %v3578, %v3901
        %v3903 = vpop.f32.mrb[0].mxu0
        %v3904 = vpop.f32.mrb[0].mxu0
        %v3905 = vadd.f32 %v3581, %v3904
        %v3906 = vpop.f32.mrb[0].mxu0
        %3907 = vmatprep.mubr.bf16.mxu0 0
        %3908 = vmatmul.mubr.bf16.gmra.mrb[0].mxu0 %v729
        %v3909 = vpop.f32.mrb[0].mxu0
        %v3910 = vadd.f32 %v3586, %v3909
        %v3911 = vpop.f32.mrb[0].mxu0
        %v3912 = vpop.f32.mrb[0].mxu0
        %v3913 = vadd.f32 %v3589, %v3912
        %v3914 = vpop.f32.mrb[0].mxu0
        %3915 = vmatprep.mubr.bf16.mxu0 0
        %3916 = vmatmul.mubr.bf16.gmra.mrb[0].mxu0 %v732
        %v3917 = vpop.f32.mrb[0].mxu0
        %v3918 = vadd.f32 %v3594, %v3917
        %v3919 = vpop.f32.mrb[0].mxu0
        %v3920 = vpop.f32.mrb[0].mxu0
        %v3921 = vadd.f32 %v3597, %v3920
        %v3922 = vpop.f32.mrb[0].mxu0
        %3923 = vmatprep.mubr.bf16.mxu0 0
        %3924 = vmatmul.mubr.bf16.gmra.mrb[0].mxu0 %v735
        %v3925 = vpop.f32.mrb[0].mxu0
        %v3926 = vadd.f32 %v3602, %v3925
        %v3927 = vpop.f32.mrb[0].mxu0
        %v3928 = vpop.f32.mrb[0].mxu0
        %v3929 = vadd.f32 %v3605, %v3928
        %v3930 = vpop.f32.mrb[0].mxu0
        %3931 = vmatprep.mubr.bf16.mxu0 0
        %3932 = vmatmul.mubr.bf16.gmra.mrb[0].mxu0 %v738
        %v3933 = vpop.f32.mrb[0].mxu0
        %v3934 = vadd.f32 %v3610, %v3933
        %v3935 = vpop.f32.mrb[0].mxu0
        %v3936 = vpop.f32.mrb[0].mxu0
        %v3937 = vadd.f32 %v3613, %v3936
        %v3938 = vpop.f32.mrb[0].mxu0
        %3939 = vmatprep.mubr.bf16.mxu0 0
        %3940 = vmatmul.mubr.bf16.gmra.mrb[0].mxu0 %v741
        %v3941 = vpop.f32.mrb[0].mxu0
        %v3942 = vadd.f32 %v3618, %v3941
        %v3943 = vpop.f32.mrb[0].mxu0
        %v3944 = vpop.f32.mrb[0].mxu0
        %v3945 = vadd.f32 %v3621, %v3944
        %v3946 = vpop.f32.mrb[0].mxu0
        %3947 = vmatprep.mubr.bf16.mxu0 0
        %3948 = vmatmul.mubr.bf16.gmra.mrb[0].mxu0 %v744
        %v3949 = vpop.f32.mrb[0].mxu0
        %v3950 = vadd.f32 %v3626, %v3949
        %v3951 = vpop.f32.mrb[0].mxu0
        %v3952 = vpop.f32.mrb[0].mxu0
        %v3953 = vpop.f32.mrb[0].mxu0
        %3954 = vdwg.mxu0
        %v3955 = vld [vmem:[%s9] sm:$0x1]
        %v3957 = vlaneseq
        %v3958 = vshrl.u32 %v3957, 7
        %v3959 = vsub.s32 0, %v3958
        %v3960 = vrot.slane %v3955, %v3959
        %v3962 = vadd.f32 %v3702, %v3960
        %v3963 = vadd.f32 %v3705, %v3960
        %v3964 = vadd.f32 %v3710, %v3960
        %v3965 = vadd.f32 %v3713, %v3960
        %v3966 = vadd.f32 %v3718, %v3960
        %v3967 = vadd.f32 %v3721, %v3960
        %v3968 = vadd.f32 %v3726, %v3960
        %v3969 = vadd.f32 %v3729, %v3960
        %v3970 = vadd.f32 %v3734, %v3960
        %v3971 = vadd.f32 %v3737, %v3960
        %v3972 = vadd.f32 %v3742, %v3960
        %v3973 = vadd.f32 %v3745, %v3960
        %v3974 = vadd.f32 %v3750, %v3960
        %v3975 = vadd.f32 %v3753, %v3960
        %v3976 = vadd.f32 %v3758, %v3960
        %v3977 = vadd.f32 %v3761, %v3960
        %v3978 = vadd.f32 %v3766, %v3960
        %v3979 = vadd.f32 %v3769, %v3960
        %v3980 = vadd.f32 %v3774, %v3960
        %v3981 = vadd.f32 %v3777, %v3960
        %v3982 = vadd.f32 %v3782, %v3960
        %v3983 = vadd.f32 %v3785, %v3960
        %v3984 = vadd.f32 %v3790, %v3960
        %v3985 = vadd.f32 %v3793, %v3960
        %v3986 = vadd.f32 %v3798, %v3960
        %v3987 = vadd.f32 %v3801, %v3960
        %v3988 = vadd.f32 %v3806, %v3960
        %v3989 = vadd.f32 %v3809, %v3960
        %v3990 = vadd.f32 %v3814, %v3960
        %v3991 = vadd.f32 %v3817, %v3960
        %v3992 = vadd.f32 %v3822, %v3960
        %v3993 = vadd.f32 %v3825, %v3960
        %v3994 = vadd.f32 %v3830, %v3960
        %v3995 = vadd.f32 %v3833, %v3960
        %v3996 = vadd.f32 %v3838, %v3960
        %v3997 = vadd.f32 %v3841, %v3960
        %v3998 = vadd.f32 %v3846, %v3960
        %v3999 = vadd.f32 %v3849, %v3960
        %v4000 = vadd.f32 %v3854, %v3960
        %v4001 = vadd.f32 %v3857, %v3960
        %v4002 = vadd.f32 %v3862, %v3960
        %v4003 = vadd.f32 %v3865, %v3960
        %v4004 = vadd.f32 %v3870, %v3960
        %v4005 = vadd.f32 %v3873, %v3960
        %v4006 = vadd.f32 %v3878, %v3960
        %v4007 = vadd.f32 %v3881, %v3960
        %v4008 = vadd.f32 %v3886, %v3960
        %v4009 = vadd.f32 %v3889, %v3960
        %v4010 = vadd.f32 %v3894, %v3960
        %v4011 = vadd.f32 %v3897, %v3960
        %v4012 = vadd.f32 %v3902, %v3960
        %v4013 = vadd.f32 %v3905, %v3960
        %v4014 = vadd.f32 %v3910, %v3960
        %v4015 = vadd.f32 %v3913, %v3960
        %v4016 = vadd.f32 %v3918, %v3960
        %v4017 = vadd.f32 %v3921, %v3960
        %v4018 = vadd.f32 %v3926, %v3960
        %v4019 = vadd.f32 %v3929, %v3960
        %v4020 = vadd.f32 %v3934, %v3960
        %v4021 = vadd.f32 %v3937, %v3960
        %v4022 = vadd.f32 %v3942, %v3960
        %v4023 = vadd.f32 %v3945, %v3960
        %v4024 = vadd.f32 %v3950, %v3960
        %vm4025 = vcmp.gt.f32.partialorder %v3962, 0.0
        %vm4026 = vcmp.gt.f32.partialorder %v3963, 0.0
        %vm4027 = vcmp.gt.f32.partialorder %v3964, 0.0
        %vm4028 = vcmp.gt.f32.partialorder %v3965, 0.0
        %vm4029 = vcmp.gt.f32.partialorder %v3966, 0.0
        %vm4030 = vcmp.gt.f32.partialorder %v3967, 0.0
        %vm4031 = vcmp.gt.f32.partialorder %v3968, 0.0
        %vm4032 = vcmp.gt.f32.partialorder %v3969, 0.0
        %vm4033 = vcmp.gt.f32.partialorder %v3970, 0.0
        %vm4034 = vcmp.gt.f32.partialorder %v3971, 0.0
        %vm4035 = vcmp.gt.f32.partialorder %v3972, 0.0
        %vm4036 = vcmp.gt.f32.partialorder %v3973, 0.0
        %vm4037 = vcmp.gt.f32.partialorder %v3974, 0.0
        %vm4038 = vcmp.gt.f32.partialorder %v3975, 0.0
        %vm4039 = vcmp.gt.f32.partialorder %v3976, 0.0
        %vm4040 = vcmp.gt.f32.partialorder %v3977, 0.0
        %vm4041 = vcmp.gt.f32.partialorder %v3978, 0.0
        %vm4042 = vcmp.gt.f32.partialorder %v3979, 0.0
        %vm4043 = vcmp.gt.f32.partialorder %v3980, 0.0
        %vm4044 = vcmp.gt.f32.partialorder %v3981, 0.0
        %vm4045 = vcmp.gt.f32.partialorder %v3982, 0.0
        %vm4046 = vcmp.gt.f32.partialorder %v3983, 0.0
        %vm4047 = vcmp.gt.f32.partialorder %v3984, 0.0
        %vm4048 = vcmp.gt.f32.partialorder %v3985, 0.0
        %vm4049 = vcmp.gt.f32.partialorder %v3986, 0.0
        %vm4050 = vcmp.gt.f32.partialorder %v3987, 0.0
        %vm4051 = vcmp.gt.f32.partialorder %v3988, 0.0
        %vm4052 = vcmp.gt.f32.partialorder %v3989, 0.0
        %vm4053 = vcmp.gt.f32.partialorder %v3990, 0.0
        %vm4054 = vcmp.gt.f32.partialorder %v3991, 0.0
        %vm4055 = vcmp.gt.f32.partialorder %v3992, 0.0
        %vm4056 = vcmp.gt.f32.partialorder %v3993, 0.0
        %vm4057 = vcmp.gt.f32.partialorder %v3994, 0.0
        %vm4058 = vcmp.gt.f32.partialorder %v3995, 0.0
        %vm4059 = vcmp.gt.f32.partialorder %v3996, 0.0
        %vm4060 = vcmp.gt.f32.partialorder %v3997, 0.0
        %vm4061 = vcmp.gt.f32.partialorder %v3998, 0.0
        %vm4062 = vcmp.gt.f32.partialorder %v3999, 0.0
        %vm4063 = vcmp.gt.f32.partialorder %v4000, 0.0
        %vm4064 = vcmp.gt.f32.partialorder %v4001, 0.0
        %vm4065 = vcmp.gt.f32.partialorder %v4002, 0.0
        %vm4066 = vcmp.gt.f32.partialorder %v4003, 0.0
        %vm4067 = vcmp.gt.f32.partialorder %v4004, 0.0
        %vm4068 = vcmp.gt.f32.partialorder %v4005, 0.0
        %vm4069 = vcmp.gt.f32.partialorder %v4006, 0.0
        %vm4070 = vcmp.gt.f32.partialorder %v4007, 0.0
        %vm4071 = vcmp.gt.f32.partialorder %v4008, 0.0
        %vm4072 = vcmp.gt.f32.partialorder %v4009, 0.0
        %vm4073 = vcmp.gt.f32.partialorder %v4010, 0.0
        %vm4074 = vcmp.gt.f32.partialorder %v4011, 0.0
        %vm4075 = vcmp.gt.f32.partialorder %v4012, 0.0
        %vm4076 = vcmp.gt.f32.partialorder %v4013, 0.0
        %vm4077 = vcmp.gt.f32.partialorder %v4014, 0.0
        %vm4078 = vcmp.gt.f32.partialorder %v4015, 0.0
        %vm4079 = vcmp.gt.f32.partialorder %v4016, 0.0
        %vm4080 = vcmp.gt.f32.partialorder %v4017, 0.0
        %vm4081 = vcmp.gt.f32.partialorder %v4018, 0.0
        %vm4082 = vcmp.gt.f32.partialorder %v4019, 0.0
        %vm4083 = vcmp.gt.f32.partialorder %v4020, 0.0
        %vm4084 = vcmp.gt.f32.partialorder %v4021, 0.0
        %vm4085 = vcmp.gt.f32.partialorder %v4022, 0.0
        %vm4086 = vcmp.gt.f32.partialorder %v4023, 0.0
        %vm4087 = vcmp.gt.f32.partialorder %v4024, 0.0
        %v4088 = vmul.f32 %v3962, 1.442695
        %v4089 = vpow.pop %v4088
        %v4090 = vmul.f32 %v3963, 1.442695
        %v4091 = vpow.pop %v4090
        %v4092 = vmul.f32 %v3964, 1.442695
        %v4093 = vpow.pop %v4092
        %v4094 = vmul.f32 %v3965, 1.442695
        %v4095 = vpow.pop %v4094
        %v4096 = vmul.f32 %v3966, 1.442695
        %v4097 = vpow.pop %v4096
        %v4098 = vmul.f32 %v3967, 1.442695
        %v4099 = vpow.pop %v4098
        %v4100 = vmul.f32 %v3968, 1.442695
        %v4101 = vpow.pop %v4100
        %v4102 = vmul.f32 %v3969, 1.442695
        %v4103 = vpow.pop %v4102
        %v4104 = vmul.f32 %v3970, 1.442695
        %v4105 = vpow.pop %v4104
        %v4106 = vmul.f32 %v3971, 1.442695
        %v4107 = vpow.pop %v4106
        %v4108 = vmul.f32 %v3972, 1.442695
        %v4109 = vpow.pop %v4108
        %v4110 = vmul.f32 %v3973, 1.442695
        %v4111 = vpow.pop %v4110
        %v4112 = vmul.f32 %v3974, 1.442695
        %v4113 = vpow.pop %v4112
        %v4114 = vmul.f32 %v3975, 1.442695
        %v4115 = vpow.pop %v4114
        %v4116 = vmul.f32 %v3976, 1.442695
        %v4117 = vpow.pop %v4116
        %v4118 = vmul.f32 %v3977, 1.442695
        %v4119 = vpow.pop %v4118
        %v4120 = vmul.f32 %v3978, 1.442695
        %v4121 = vpow.pop %v4120
        %v4122 = vmul.f32 %v3979, 1.442695
        %v4123 = vpow.pop %v4122
        %v4124 = vmul.f32 %v3980, 1.442695
        %v4125 = vpow.pop %v4124
        %v4126 = vmul.f32 %v3981, 1.442695
        %v4127 = vpow.pop %v4126
        %v4128 = vmul.f32 %v3982, 1.442695
        %v4129 = vpow.pop %v4128
        %v4130 = vmul.f32 %v3983, 1.442695
        %v4131 = vpow.pop %v4130
        %v4132 = vmul.f32 %v3984, 1.442695
        %v4133 = vpow.pop %v4132
        %v4134 = vmul.f32 %v3985, 1.442695
        %v4135 = vpow.pop %v4134
        %v4136 = vmul.f32 %v3986, 1.442695
        %v4137 = vpow.pop %v4136
        %v4138 = vmul.f32 %v3987, 1.442695
        %v4139 = vpow.pop %v4138
        %v4140 = vmul.f32 %v3988, 1.442695
        %v4141 = vpow.pop %v4140
        %v4142 = vmul.f32 %v3989, 1.442695
        %v4143 = vpow.pop %v4142
        %v4144 = vmul.f32 %v3990, 1.442695
        %v4145 = vpow.pop %v4144
        %v4146 = vmul.f32 %v3991, 1.442695
        %v4147 = vpow.pop %v4146
        %v4148 = vmul.f32 %v3992, 1.442695
        %v4149 = vpow.pop %v4148
        %v4150 = vmul.f32 %v3993, 1.442695
        %v4151 = vpow.pop %v4150
        %v4152 = vmul.f32 %v3994, 1.442695
        %v4153 = vpow.pop %v4152
        %v4154 = vmul.f32 %v3995, 1.442695
        %v4155 = vpow.pop %v4154
        %v4156 = vmul.f32 %v3996, 1.442695
        %v4157 = vpow.pop %v4156
        %v4158 = vmul.f32 %v3997, 1.442695
        %v4159 = vpow.pop %v4158
        %v4160 = vmul.f32 %v3998, 1.442695
        %v4161 = vpow.pop %v4160
        %v4162 = vmul.f32 %v3999, 1.442695
        %v4163 = vpow.pop %v4162
        %v4164 = vmul.f32 %v4000, 1.442695
        %v4165 = vpow.pop %v4164
        %v4166 = vmul.f32 %v4001, 1.442695
        %v4167 = vpow.pop %v4166
        %v4168 = vmul.f32 %v4002, 1.442695
        %v4169 = vpow.pop %v4168
        %v4170 = vmul.f32 %v4003, 1.442695
        %v4171 = vpow.pop %v4170
        %v4172 = vmul.f32 %v4004, 1.442695
        %v4173 = vpow.pop %v4172
        %v4174 = vmul.f32 %v4005, 1.442695
        %v4175 = vpow.pop %v4174
        %v4176 = vmul.f32 %v4006, 1.442695
        %v4177 = vpow.pop %v4176
        %v4178 = vmul.f32 %v4007, 1.442695
        %v4179 = vpow.pop %v4178
        %v4180 = vmul.f32 %v4008, 1.442695
        %v4181 = vpow.pop %v4180
        %v4182 = vmul.f32 %v4009, 1.442695
        %v4183 = vpow.pop %v4182
        %v4184 = vmul.f32 %v4010, 1.442695
        %v4185 = vpow.pop %v4184
        %v4186 = vmul.f32 %v4011, 1.442695
        %v4187 = vpow.pop %v4186
        %v4188 = vmul.f32 %v4012, 1.442695
        %v4189 = vpow.pop %v4188
        %v4190 = vmul.f32 %v4013, 1.442695
        %v4191 = vpow.pop %v4190
        %v4192 = vmul.f32 %v4014, 1.442695
        %v4193 = vpow.pop %v4192
        %v4194 = vmul.f32 %v4015, 1.442695
        %v4195 = vpow.pop %v4194
        %v4196 = vmul.f32 %v4016, 1.442695
        %v4197 = vpow.pop %v4196
        %v4198 = vmul.f32 %v4017, 1.442695
        %v4199 = vpow.pop %v4198
        %v4200 = vmul.f32 %v4018, 1.442695
        %v4201 = vpow.pop %v4200
        %v4202 = vmul.f32 %v4019, 1.442695
        %v4203 = vpow.pop %v4202
        %v4204 = vmul.f32 %v4020, 1.442695
        %v4205 = vpow.pop %v4204
        %v4206 = vmul.f32 %v4021, 1.442695
        %v4207 = vpow.pop %v4206
        %v4208 = vmul.f32 %v4022, 1.442695
        %v4209 = vpow.pop %v4208
        %v4210 = vmul.f32 %v4023, 1.442695
        %v4211 = vpow.pop %v4210
        %v4212 = vmul.f32 %v4024, 1.442695
        %v4213 = vpow.pop %v4212
        %v4214 = vsub.f32 %v4089, 1.0
        %v4215 = vsub.f32 %v4091, 1.0
        %v4216 = vsub.f32 %v4093, 1.0
        %v4217 = vsub.f32 %v4095, 1.0
        %v4218 = vsub.f32 %v4097, 1.0
        %v4219 = vsub.f32 %v4099, 1.0
        %v4220 = vsub.f32 %v4101, 1.0
        %v4221 = vsub.f32 %v4103, 1.0
        %v4222 = vsub.f32 %v4105, 1.0
        %v4223 = vsub.f32 %v4107, 1.0
        %v4224 = vsub.f32 %v4109, 1.0
        %v4225 = vsub.f32 %v4111, 1.0
        %v4226 = vsub.f32 %v4113, 1.0
        %v4227 = vsub.f32 %v4115, 1.0
        %v4228 = vsub.f32 %v4117, 1.0
        %v4229 = vsub.f32 %v4119, 1.0
        %v4230 = vsub.f32 %v4121, 1.0
        %v4231 = vsub.f32 %v4123, 1.0
        %v4232 = vsub.f32 %v4125, 1.0
        %v4233 = vsub.f32 %v4127, 1.0
        %v4234 = vsub.f32 %v4129, 1.0
        %v4235 = vsub.f32 %v4131, 1.0
        %v4236 = vsub.f32 %v4133, 1.0
        %v4237 = vsub.f32 %v4135, 1.0
        %v4238 = vsub.f32 %v4137, 1.0
        %v4239 = vsub.f32 %v4139, 1.0
        %v4240 = vsub.f32 %v4141, 1.0
        %v4241 = vsub.f32 %v4143, 1.0
        %v4242 = vsub.f32 %v4145, 1.0
        %v4243 = vsub.f32 %v4147, 1.0
        %v4244 = vsub.f32 %v4149, 1.0
        %v4245 = vsub.f32 %v4151, 1.0
        %v4246 = vsub.f32 %v4153, 1.0
        %v4247 = vsub.f32 %v4155, 1.0
        %v4248 = vsub.f32 %v4157, 1.0
        %v4249 = vsub.f32 %v4159, 1.0
        %v4250 = vsub.f32 %v4161, 1.0
        %v4251 = vsub.f32 %v4163, 1.0
        %v4252 = vsub.f32 %v4165, 1.0
        %v4253 = vsub.f32 %v4167, 1.0
        %v4254 = vsub.f32 %v4169, 1.0
        %v4255 = vsub.f32 %v4171, 1.0
        %v4256 = vsub.f32 %v4173, 1.0
        %v4257 = vsub.f32 %v4175, 1.0
        %v4258 = vsub.f32 %v4177, 1.0
        %v4259 = vsub.f32 %v4179, 1.0
        %v4260 = vsub.f32 %v4181, 1.0
        %v4261 = vsub.f32 %v4183, 1.0
        %v4262 = vsub.f32 %v4185, 1.0
        %v4263 = vsub.f32 %v4187, 1.0
        %v4264 = vsub.f32 %v4189, 1.0
        %v4265 = vsub.f32 %v4191, 1.0
        %v4266 = vsub.f32 %v4193, 1.0
        %v4267 = vsub.f32 %v4195, 1.0
        %v4268 = vsub.f32 %v4197, 1.0
        %v4269 = vsub.f32 %v4199, 1.0
        %v4270 = vsub.f32 %v4201, 1.0
        %v4271 = vsub.f32 %v4203, 1.0
        %v4272 = vsub.f32 %v4205, 1.0
        %v4273 = vsub.f32 %v4207, 1.0
        %v4274 = vsub.f32 %v4209, 1.0
        %v4275 = vsub.f32 %v4211, 1.0
        %v4276 = vsub.f32 %v4213, 1.0
        %v4277 = vsel %vm4025, %v3962, %v4214
        %v4278 = vsel %vm4026, %v3963, %v4215
        %v4279 = vsel %vm4027, %v3964, %v4216
        %v4280 = vsel %vm4028, %v3965, %v4217
        %v4281 = vsel %vm4029, %v3966, %v4218
        %v4282 = vsel %vm4030, %v3967, %v4219
        %v4283 = vsel %vm4031, %v3968, %v4220
        %v4284 = vsel %vm4032, %v3969, %v4221
        %v4285 = vsel %vm4033, %v3970, %v4222
        %v4286 = vsel %vm4034, %v3971, %v4223
        %v4287 = vsel %vm4035, %v3972, %v4224
        %v4288 = vsel %vm4036, %v3973, %v4225
        %v4289 = vsel %vm4037, %v3974, %v4226
        %v4290 = vsel %vm4038, %v3975, %v4227
        %v4291 = vsel %vm4039, %v3976, %v4228
        %v4292 = vsel %vm4040, %v3977, %v4229
        %v4293 = vsel %vm4041, %v3978, %v4230
        %v4294 = vsel %vm4042, %v3979, %v4231
        %v4295 = vsel %vm4043, %v3980, %v4232
        %v4296 = vsel %vm4044, %v3981, %v4233
        %v4297 = vsel %vm4045, %v3982, %v4234
        %v4298 = vsel %vm4046, %v3983, %v4235
        %v4299 = vsel %vm4047, %v3984, %v4236
        %v4300 = vsel %vm4048, %v3985, %v4237
        %v4301 = vsel %vm4049, %v3986, %v4238
        %v4302 = vsel %vm4050, %v3987, %v4239
        %v4303 = vsel %vm4051, %v3988, %v4240
        %v4304 = vsel %vm4052, %v3989, %v4241
        %v4305 = vsel %vm4053, %v3990, %v4242
        %v4306 = vsel %vm4054, %v3991, %v4243
        %v4307 = vsel %vm4055, %v3992, %v4244
        %v4308 = vsel %vm4056, %v3993, %v4245
        %v4309 = vsel %vm4057, %v3994, %v4246
        %v4310 = vsel %vm4058, %v3995, %v4247
        %v4311 = vsel %vm4059, %v3996, %v4248
        %v4312 = vsel %vm4060, %v3997, %v4249
        %v4313 = vsel %vm4061, %v3998, %v4250
        %v4314 = vsel %vm4062, %v3999, %v4251
        %v4315 = vsel %vm4063, %v4000, %v4252
        %v4316 = vsel %vm4064, %v4001, %v4253
        %v4317 = vsel %vm4065, %v4002, %v4254
        %v4318 = vsel %vm4066, %v4003, %v4255
        %v4319 = vsel %vm4067, %v4004, %v4256
        %v4320 = vsel %vm4068, %v4005, %v4257
        %v4321 = vsel %vm4069, %v4006, %v4258
        %v4322 = vsel %vm4070, %v4007, %v4259
        %v4323 = vsel %vm4071, %v4008, %v4260
        %v4324 = vsel %vm4072, %v4009, %v4261
        %v4325 = vsel %vm4073, %v4010, %v4262
        %v4326 = vsel %vm4074, %v4011, %v4263
        %v4327 = vsel %vm4075, %v4012, %v4264
        %v4328 = vsel %vm4076, %v4013, %v4265
        %v4329 = vsel %vm4077, %v4014, %v4266
        %v4330 = vsel %vm4078, %v4015, %v4267
        %v4331 = vsel %vm4079, %v4016, %v4268
        %v4332 = vsel %vm4080, %v4017, %v4269
        %v4333 = vsel %vm4081, %v4018, %v4270
        %v4334 = vsel %vm4082, %v4019, %v4271
        %v4335 = vsel %vm4083, %v4020, %v4272
        %v4336 = vsel %vm4084, %v4021, %v4273
        %v4337 = vsel %vm4085, %v4022, %v4274
        %v4338 = vsel %vm4086, %v4023, %v4275
        %v4339 = vsel %vm4087, %v4024, %v4276
        %v4340 = vpack.c.bf16 %v4278, %v4277
        %v4341 = vpack.c.bf16 %v4280, %v4279
        %v4342 = vpack.c.bf16 %v4282, %v4281
        %v4343 = vpack.c.bf16 %v4284, %v4283
        %v4344 = vpack.c.bf16 %v4286, %v4285
        %v4345 = vpack.c.bf16 %v4288, %v4287
        %v4346 = vpack.c.bf16 %v4290, %v4289
        %v4347 = vpack.c.bf16 %v4292, %v4291
        %v4348 = vpack.c.bf16 %v4294, %v4293
        %v4349 = vpack.c.bf16 %v4296, %v4295
        %v4350 = vpack.c.bf16 %v4298, %v4297
        %v4351 = vpack.c.bf16 %v4300, %v4299
        %v4352 = vpack.c.bf16 %v4302, %v4301
        %v4353 = vpack.c.bf16 %v4304, %v4303
        %v4354 = vpack.c.bf16 %v4306, %v4305
        %v4355 = vpack.c.bf16 %v4308, %v4307
        %v4356 = vpack.c.bf16 %v4310, %v4309
        %v4357 = vpack.c.bf16 %v4312, %v4311
        %v4358 = vpack.c.bf16 %v4314, %v4313
        %v4359 = vpack.c.bf16 %v4316, %v4315
        %v4360 = vpack.c.bf16 %v4318, %v4317
        %v4361 = vpack.c.bf16 %v4320, %v4319
        %v4362 = vpack.c.bf16 %v4322, %v4321
        %v4363 = vpack.c.bf16 %v4324, %v4323
        %v4364 = vpack.c.bf16 %v4326, %v4325
        %v4365 = vpack.c.bf16 %v4328, %v4327
        %v4366 = vpack.c.bf16 %v4330, %v4329
        %v4367 = vpack.c.bf16 %v4332, %v4331
        %v4368 = vpack.c.bf16 %v4334, %v4333
        %v4369 = vpack.c.bf16 %v4336, %v4335
        %v4370 = vpack.c.bf16 %v4338, %v4337
        %v4371 = vpack.c.bf16 %v4339, %v4339
        %v4372 = vld [vmem:[%s10] sm:$0xf]
        %v4373 = vld [vmem:[%s10 + $0x4] sm:$0xf]
        %v4374 = vld [vmem:[%s10 + $0x8] sm:$0xf]
        %v4375 = vld [vmem:[%s10 + $0xc] sm:$0xf]
        %v4376 = vld [vmem:[%s10 + $0x10] sm:$0xf]
        %v4377 = vld [vmem:[%s10 + $0x14] sm:$0xf]
        %v4378 = vld [vmem:[%s10 + $0x18] sm:$0xf]
        %v4379 = vld [vmem:[%s10 + $0x1c] sm:$0xf]
        %v4380 = vld [vmem:[%s10 + $0x20] sm:$0xf]
        %v4381 = vld [vmem:[%s10 + $0x24] sm:$0xf]
        %v4382 = vld [vmem:[%s10 + $0x28] sm:$0xf]
        %v4383 = vld [vmem:[%s10 + $0x2c] sm:$0xf]
        %v4384 = vld [vmem:[%s10 + $0x30] sm:$0xf]
        %v4385 = vld [vmem:[%s10 + $0x34] sm:$0xf]
        %v4386 = vld [vmem:[%s10 + $0x38] sm:$0xf]
        %v4387 = vld [vmem:[%s10 + $0x3c] sm:$0xf]
        %v4388 = vld [vmem:[%s11] sm:$0x1]
        %v4390 = vlaneseq
        %v4391 = vshrl.u32 %v4390, 7
        %v4392 = vsub.s32 0, %v4391
        %v4393 = vrot.slane %v4388, %v4392
        %v4411 = vunpack.c.l.b16 %v4372
        %v4412 = vunpack.c.l.b16 %v4373
        %v4413 = vunpack.c.l.b16 %v4374
        %v4414 = vunpack.c.l.b16 %v4375
        %v4415 = vunpack.c.l.b16 %v4376
        %v4416 = vunpack.c.l.b16 %v4377
        %v4417 = vunpack.c.l.b16 %v4378
        %v4418 = vunpack.c.l.b16 %v4379
        %v4419 = vunpack.c.l.b16 %v4380
        %v4420 = vunpack.c.l.b16 %v4381
        %v4421 = vunpack.c.l.b16 %v4382
        %v4422 = vunpack.c.l.b16 %v4383
        %v4423 = vunpack.c.l.b16 %v4384
        %v4424 = vunpack.c.l.b16 %v4385
        %v4425 = vunpack.c.l.b16 %v4386
        %v4426 = vunpack.c.l.b16 %v4387
        %v4427 = vpack.c.b16 %v4412, %v4411
        %v4428 = vpack.c.b16 %v4414, %v4413
        %v4429 = vpack.c.b16 %v4416, %v4415
        %v4430 = vpack.c.b16 %v4418, %v4417
        %v4431 = vpack.c.b16 %v4420, %v4419
        %v4432 = vpack.c.b16 %v4422, %v4421
        %v4433 = vpack.c.b16 %v4424, %v4423
        %v4434 = vpack.c.b16 %v4426, %v4425
        %4443 = vmatprep.subr.bf16.mxu0 0
        %4444 = vmatpush1.bf16.msra.mxu0 %v4427
        %4445 = vmatprep.subr.bf16.mxu0 0
        %4446 = vmatpush1.bf16.msra.mxu0 %v4428
        %4447 = vmatprep.subr.bf16.mxu0 0
        %4448 = vmatpush1.bf16.msra.mxu0 %v4429
        %4449 = vmatprep.subr.bf16.mxu0 0
        %4450 = vmatpush1.bf16.msra.mxu0 %v4430
        %4451 = vmatprep.subr.bf16.mxu0 0
        %4452 = vmatpush1.bf16.msra.mxu0 %v4431
        %4453 = vmatprep.subr.bf16.mxu0 0
        %4454 = vmatpush1.bf16.msra.mxu0 %v4432
        %4455 = vmatprep.subr.bf16.mxu0 0
        %4456 = vmatpush1.bf16.msra.mxu0 %v4433
        %4457 = vmatprep.subr.bf16.mxu0 0
        %4458 = vmatpush1.bf16.msra.mxu0 %v4434
        %4459 = vmatprep.subr.bf16.mxu0 0
        %4460 = vmatpush1.bf16.msra.mxu0 0
        %4461 = vmatprep.subr.bf16.mxu0 0
        %4462 = vmatpush1.bf16.msra.mxu0 0
        %4463 = vmatprep.subr.bf16.mxu0 0
        %4464 = vmatpush1.bf16.msra.mxu0 0
        %4465 = vmatprep.subr.bf16.mxu0 0
        %4466 = vmatpush1.bf16.msra.mxu0 0
        %4467 = vmatprep.subr.bf16.mxu0 0
        %4468 = vmatpush1.bf16.msra.mxu0 0
        %4469 = vmatprep.subr.bf16.mxu0 0
        %4470 = vmatpush1.bf16.msra.mxu0 0
        %4471 = vmatprep.subr.bf16.mxu0 0
        %4472 = vmatpush1.bf16.msra.mxu0 0
        %4473 = vmatprep.subr.bf16.mxu0 0
        %4474 = vmatpush1.bf16.msra.mxu0 0
        %4475 = vmatprep.mubr.bf16.mxu0 0
        %4476 = vmatmul.mubr.bf16.gmra.mrb[0].mxu0 %v4340
        %v4477 = vpop.f32.mrb[0].mxu0
        %v4478 = vadd.f32 %v4393, %v4477
        %v4479 = vpop.f32.mrb[0].mxu0
        %v4480 = vpop.f32.mrb[0].mxu0
        %v4481 = vadd.f32 %v4393, %v4480
        %v4482 = vpop.f32.mrb[0].mxu0
        %4483 = vmatprep.mubr.bf16.mxu0 0
        %4484 = vmatmul.mubr.bf16.gmra.mrb[0].mxu0 %v4341
        %v4485 = vpop.f32.mrb[0].mxu0
        %v4486 = vadd.f32 %v4393, %v4485
        %v4487 = vpop.f32.mrb[0].mxu0
        %v4488 = vpop.f32.mrb[0].mxu0
        %v4489 = vadd.f32 %v4393, %v4488
        %v4490 = vpop.f32.mrb[0].mxu0
        %4491 = vmatprep.mubr.bf16.mxu0 0
        %4492 = vmatmul.mubr.bf16.gmra.mrb[0].mxu0 %v4342
        %v4493 = vpop.f32.mrb[0].mxu0
        %v4494 = vadd.f32 %v4393, %v4493
        %v4495 = vpop.f32.mrb[0].mxu0
        %v4496 = vpop.f32.mrb[0].mxu0
        %v4497 = vadd.f32 %v4393, %v4496
        %v4498 = vpop.f32.mrb[0].mxu0
        %4499 = vmatprep.mubr.bf16.mxu0 0
        %4500 = vmatmul.mubr.bf16.gmra.mrb[0].mxu0 %v4343
        %v4501 = vpop.f32.mrb[0].mxu0
        %v4502 = vadd.f32 %v4393, %v4501
        %v4503 = vpop.f32.mrb[0].mxu0
        %v4504 = vpop.f32.mrb[0].mxu0
        %v4505 = vadd.f32 %v4393, %v4504
        %v4506 = vpop.f32.mrb[0].mxu0
        %4507 = vmatprep.mubr.bf16.mxu0 0
        %4508 = vmatmul.mubr.bf16.gmra.mrb[0].mxu0 %v4344
        %v4509 = vpop.f32.mrb[0].mxu0
        %v4510 = vadd.f32 %v4393, %v4509
        %v4511 = vpop.f32.mrb[0].mxu0
        %v4512 = vpop.f32.mrb[0].mxu0
        %v4513 = vadd.f32 %v4393, %v4512
        %v4514 = vpop.f32.mrb[0].mxu0
        %4515 = vmatprep.mubr.bf16.mxu0 0
        %4516 = vmatmul.mubr.bf16.gmra.mrb[0].mxu0 %v4345
        %v4517 = vpop.f32.mrb[0].mxu0
        %v4518 = vadd.f32 %v4393, %v4517
        %v4519 = vpop.f32.mrb[0].mxu0
        %v4520 = vpop.f32.mrb[0].mxu0
        %v4521 = vadd.f32 %v4393, %v4520
        %v4522 = vpop.f32.mrb[0].mxu0
        %4523 = vmatprep.mubr.bf16.mxu0 0
        %4524 = vmatmul.mubr.bf16.gmra.mrb[0].mxu0 %v4346
        %v4525 = vpop.f32.mrb[0].mxu0
        %v4526 = vadd.f32 %v4393, %v4525
        %v4527 = vpop.f32.mrb[0].mxu0
        %v4528 = vpop.f32.mrb[0].mxu0
        %v4529 = vadd.f32 %v4393, %v4528
        %v4530 = vpop.f32.mrb[0].mxu0
        %4531 = vmatprep.mubr.bf16.mxu0 0
        %4532 = vmatmul.mubr.bf16.gmra.mrb[0].mxu0 %v4347
        %v4533 = vpop.f32.mrb[0].mxu0
        %v4534 = vadd.f32 %v4393, %v4533
        %v4535 = vpop.f32.mrb[0].mxu0
        %v4536 = vpop.f32.mrb[0].mxu0
        %v4537 = vadd.f32 %v4393, %v4536
        %v4538 = vpop.f32.mrb[0].mxu0
        %4539 = vmatprep.mubr.bf16.mxu0 0
        %4540 = vmatmul.mubr.bf16.gmra.mrb[0].mxu0 %v4348
        %v4541 = vpop.f32.mrb[0].mxu0
        %v4542 = vadd.f32 %v4393, %v4541
        %v4543 = vpop.f32.mrb[0].mxu0
        %v4544 = vpop.f32.mrb[0].mxu0
        %v4545 = vadd.f32 %v4393, %v4544
        %v4546 = vpop.f32.mrb[0].mxu0
        %4547 = vmatprep.mubr.bf16.mxu0 0
        %4548 = vmatmul.mubr.bf16.gmra.mrb[0].mxu0 %v4349
        %v4549 = vpop.f32.mrb[0].mxu0
        %v4550 = vadd.f32 %v4393, %v4549
        %v4551 = vpop.f32.mrb[0].mxu0
        %v4552 = vpop.f32.mrb[0].mxu0
        %v4553 = vadd.f32 %v4393, %v4552
        %v4554 = vpop.f32.mrb[0].mxu0
        %4555 = vmatprep.mubr.bf16.mxu0 0
        %4556 = vmatmul.mubr.bf16.gmra.mrb[0].mxu0 %v4350
        %v4557 = vpop.f32.mrb[0].mxu0
        %v4558 = vadd.f32 %v4393, %v4557
        %v4559 = vpop.f32.mrb[0].mxu0
        %v4560 = vpop.f32.mrb[0].mxu0
        %v4561 = vadd.f32 %v4393, %v4560
        %v4562 = vpop.f32.mrb[0].mxu0
        %4563 = vmatprep.mubr.bf16.mxu0 0
        %4564 = vmatmul.mubr.bf16.gmra.mrb[0].mxu0 %v4351
        %v4565 = vpop.f32.mrb[0].mxu0
        %v4566 = vadd.f32 %v4393, %v4565
        %v4567 = vpop.f32.mrb[0].mxu0
        %v4568 = vpop.f32.mrb[0].mxu0
        %v4569 = vadd.f32 %v4393, %v4568
        %v4570 = vpop.f32.mrb[0].mxu0
        %4571 = vmatprep.mubr.bf16.mxu0 0
        %4572 = vmatmul.mubr.bf16.gmra.mrb[0].mxu0 %v4352
        %v4573 = vpop.f32.mrb[0].mxu0
        %v4574 = vadd.f32 %v4393, %v4573
        %v4575 = vpop.f32.mrb[0].mxu0
        %v4576 = vpop.f32.mrb[0].mxu0
        %v4577 = vadd.f32 %v4393, %v4576
        %v4578 = vpop.f32.mrb[0].mxu0
        %4579 = vmatprep.mubr.bf16.mxu0 0
        %4580 = vmatmul.mubr.bf16.gmra.mrb[0].mxu0 %v4353
        %v4581 = vpop.f32.mrb[0].mxu0
        %v4582 = vadd.f32 %v4393, %v4581
        %v4583 = vpop.f32.mrb[0].mxu0
        %v4584 = vpop.f32.mrb[0].mxu0
        %v4585 = vadd.f32 %v4393, %v4584
        %v4586 = vpop.f32.mrb[0].mxu0
        %4587 = vmatprep.mubr.bf16.mxu0 0
        %4588 = vmatmul.mubr.bf16.gmra.mrb[0].mxu0 %v4354
        %v4589 = vpop.f32.mrb[0].mxu0
        %v4590 = vadd.f32 %v4393, %v4589
        %v4591 = vpop.f32.mrb[0].mxu0
        %v4592 = vpop.f32.mrb[0].mxu0
        %v4593 = vadd.f32 %v4393, %v4592
        %v4594 = vpop.f32.mrb[0].mxu0
        %4595 = vmatprep.mubr.bf16.mxu0 0
        %4596 = vmatmul.mubr.bf16.gmra.mrb[0].mxu0 %v4355
        %v4597 = vpop.f32.mrb[0].mxu0
        %v4598 = vadd.f32 %v4393, %v4597
        %v4599 = vpop.f32.mrb[0].mxu0
        %v4600 = vpop.f32.mrb[0].mxu0
        %v4601 = vadd.f32 %v4393, %v4600
        %v4602 = vpop.f32.mrb[0].mxu0
        %4603 = vmatprep.mubr.bf16.mxu0 0
        %4604 = vmatmul.mubr.bf16.gmra.mrb[0].mxu0 %v4356
        %v4605 = vpop.f32.mrb[0].mxu0
        %v4606 = vadd.f32 %v4393, %v4605
        %v4607 = vpop.f32.mrb[0].mxu0
        %v4608 = vpop.f32.mrb[0].mxu0
        %v4609 = vadd.f32 %v4393, %v4608
        %v4610 = vpop.f32.mrb[0].mxu0
        %4611 = vmatprep.mubr.bf16.mxu0 0
        %4612 = vmatmul.mubr.bf16.gmra.mrb[0].mxu0 %v4357
        %v4613 = vpop.f32.mrb[0].mxu0
        %v4614 = vadd.f32 %v4393, %v4613
        %v4615 = vpop.f32.mrb[0].mxu0
        %v4616 = vpop.f32.mrb[0].mxu0
        %v4617 = vadd.f32 %v4393, %v4616
        %v4618 = vpop.f32.mrb[0].mxu0
        %4619 = vmatprep.mubr.bf16.mxu0 0
        %4620 = vmatmul.mubr.bf16.gmra.mrb[0].mxu0 %v4358
        %v4621 = vpop.f32.mrb[0].mxu0
        %v4622 = vadd.f32 %v4393, %v4621
        %v4623 = vpop.f32.mrb[0].mxu0
        %v4624 = vpop.f32.mrb[0].mxu0
        %v4625 = vadd.f32 %v4393, %v4624
        %v4626 = vpop.f32.mrb[0].mxu0
        %4627 = vmatprep.mubr.bf16.mxu0 0
        %4628 = vmatmul.mubr.bf16.gmra.mrb[0].mxu0 %v4359
        %v4629 = vpop.f32.mrb[0].mxu0
        %v4630 = vadd.f32 %v4393, %v4629
        %v4631 = vpop.f32.mrb[0].mxu0
        %v4632 = vpop.f32.mrb[0].mxu0
        %v4633 = vadd.f32 %v4393, %v4632
        %v4634 = vpop.f32.mrb[0].mxu0
        %4635 = vmatprep.mubr.bf16.mxu0 0
        %4636 = vmatmul.mubr.bf16.gmra.mrb[0].mxu0 %v4360
        %v4637 = vpop.f32.mrb[0].mxu0
        %v4638 = vadd.f32 %v4393, %v4637
        %v4639 = vpop.f32.mrb[0].mxu0
        %v4640 = vpop.f32.mrb[0].mxu0
        %v4641 = vadd.f32 %v4393, %v4640
        %v4642 = vpop.f32.mrb[0].mxu0
        %4643 = vmatprep.mubr.bf16.mxu0 0
        %4644 = vmatmul.mubr.bf16.gmra.mrb[0].mxu0 %v4361
        %v4645 = vpop.f32.mrb[0].mxu0
        %v4646 = vadd.f32 %v4393, %v4645
        %v4647 = vpop.f32.mrb[0].mxu0
        %v4648 = vpop.f32.mrb[0].mxu0
        %v4649 = vadd.f32 %v4393, %v4648
        %v4650 = vpop.f32.mrb[0].mxu0
        %4651 = vmatprep.mubr.bf16.mxu0 0
        %4652 = vmatmul.mubr.bf16.gmra.mrb[0].mxu0 %v4362
        %v4653 = vpop.f32.mrb[0].mxu0
        %v4654 = vadd.f32 %v4393, %v4653
        %v4655 = vpop.f32.mrb[0].mxu0
        %v4656 = vpop.f32.mrb[0].mxu0
        %v4657 = vadd.f32 %v4393, %v4656
        %v4658 = vpop.f32.mrb[0].mxu0
        %4659 = vmatprep.mubr.bf16.mxu0 0
        %4660 = vmatmul.mubr.bf16.gmra.mrb[0].mxu0 %v4363
        %v4661 = vpop.f32.mrb[0].mxu0
        %v4662 = vadd.f32 %v4393, %v4661
        %v4663 = vpop.f32.mrb[0].mxu0
        %v4664 = vpop.f32.mrb[0].mxu0
        %v4665 = vadd.f32 %v4393, %v4664
        %v4666 = vpop.f32.mrb[0].mxu0
        %4667 = vmatprep.mubr.bf16.mxu0 0
        %4668 = vmatmul.mubr.bf16.gmra.mrb[0].mxu0 %v4364
        %v4669 = vpop.f32.mrb[0].mxu0
        %v4670 = vadd.f32 %v4393, %v4669
        %v4671 = vpop.f32.mrb[0].mxu0
        %v4672 = vpop.f32.mrb[0].mxu0
        %v4673 = vadd.f32 %v4393, %v4672
        %v4674 = vpop.f32.mrb[0].mxu0
        %4675 = vmatprep.mubr.bf16.mxu0 0
        %4676 = vmatmul.mubr.bf16.gmra.mrb[0].mxu0 %v4365
        %v4677 = vpop.f32.mrb[0].mxu0
        %v4678 = vadd.f32 %v4393, %v4677
        %v4679 = vpop.f32.mrb[0].mxu0
        %v4680 = vpop.f32.mrb[0].mxu0
        %v4681 = vadd.f32 %v4393, %v4680
        %v4682 = vpop.f32.mrb[0].mxu0
        %4683 = vmatprep.mubr.bf16.mxu0 0
        %4684 = vmatmul.mubr.bf16.gmra.mrb[0].mxu0 %v4366
        %v4685 = vpop.f32.mrb[0].mxu0
        %v4686 = vadd.f32 %v4393, %v4685
        %v4687 = vpop.f32.mrb[0].mxu0
        %v4688 = vpop.f32.mrb[0].mxu0
        %v4689 = vadd.f32 %v4393, %v4688
        %v4690 = vpop.f32.mrb[0].mxu0
        %4691 = vmatprep.mubr.bf16.mxu0 0
        %4692 = vmatmul.mubr.bf16.gmra.mrb[0].mxu0 %v4367
        %v4693 = vpop.f32.mrb[0].mxu0
        %v4694 = vadd.f32 %v4393, %v4693
        %v4695 = vpop.f32.mrb[0].mxu0
        %v4696 = vpop.f32.mrb[0].mxu0
        %v4697 = vadd.f32 %v4393, %v4696
        %v4698 = vpop.f32.mrb[0].mxu0
        %4699 = vmatprep.mubr.bf16.mxu0 0
        %4700 = vmatmul.mubr.bf16.gmra.mrb[0].mxu0 %v4368
        %v4701 = vpop.f32.mrb[0].mxu0
        %v4702 = vadd.f32 %v4393, %v4701
        %v4703 = vpop.f32.mrb[0].mxu0
        %v4704 = vpop.f32.mrb[0].mxu0
        %v4705 = vadd.f32 %v4393, %v4704
        %v4706 = vpop.f32.mrb[0].mxu0
        %4707 = vmatprep.mubr.bf16.mxu0 0
        %4708 = vmatmul.mubr.bf16.gmra.mrb[0].mxu0 %v4369
        %v4709 = vpop.f32.mrb[0].mxu0
        %v4710 = vadd.f32 %v4393, %v4709
        %v4711 = vpop.f32.mrb[0].mxu0
        %v4712 = vpop.f32.mrb[0].mxu0
        %v4713 = vadd.f32 %v4393, %v4712
        %v4714 = vpop.f32.mrb[0].mxu0
        %4715 = vmatprep.mubr.bf16.mxu0 0
        %4716 = vmatmul.mubr.bf16.gmra.mrb[0].mxu0 %v4370
        %v4717 = vpop.f32.mrb[0].mxu0
        %v4718 = vadd.f32 %v4393, %v4717
        %v4719 = vpop.f32.mrb[0].mxu0
        %v4720 = vpop.f32.mrb[0].mxu0
        %v4721 = vadd.f32 %v4393, %v4720
        %v4722 = vpop.f32.mrb[0].mxu0
        %4723 = vmatprep.mubr.bf16.mxu0 0
        %4724 = vmatmul.mubr.bf16.gmra.mrb[0].mxu0 %v4371
        %v4725 = vpop.f32.mrb[0].mxu0
        %v4726 = vadd.f32 %v4393, %v4725
        %v4727 = vpop.f32.mrb[0].mxu0
        %v4728 = vpop.f32.mrb[0].mxu0
        %v4729 = vpop.f32.mrb[0].mxu0
        %4730 = vdwg.mxu0
        %vm4731 = vcmp.gt.f32.partialorder %v4478, 0.0
        %vm4732 = vcmp.gt.f32.partialorder %v4481, 0.0
        %vm4733 = vcmp.gt.f32.partialorder %v4486, 0.0
        %vm4734 = vcmp.gt.f32.partialorder %v4489, 0.0
        %vm4735 = vcmp.gt.f32.partialorder %v4494, 0.0
        %vm4736 = vcmp.gt.f32.partialorder %v4497, 0.0
        %vm4737 = vcmp.gt.f32.partialorder %v4502, 0.0
        %vm4738 = vcmp.gt.f32.partialorder %v4505, 0.0
        %vm4739 = vcmp.gt.f32.partialorder %v4510, 0.0
        %vm4740 = vcmp.gt.f32.partialorder %v4513, 0.0
        %vm4741 = vcmp.gt.f32.partialorder %v4518, 0.0
        %vm4742 = vcmp.gt.f32.partialorder %v4521, 0.0
        %vm4743 = vcmp.gt.f32.partialorder %v4526, 0.0
        %vm4744 = vcmp.gt.f32.partialorder %v4529, 0.0
        %vm4745 = vcmp.gt.f32.partialorder %v4534, 0.0
        %vm4746 = vcmp.gt.f32.partialorder %v4537, 0.0
        %vm4747 = vcmp.gt.f32.partialorder %v4542, 0.0
        %vm4748 = vcmp.gt.f32.partialorder %v4545, 0.0
        %vm4749 = vcmp.gt.f32.partialorder %v4550, 0.0
        %vm4750 = vcmp.gt.f32.partialorder %v4553, 0.0
        %vm4751 = vcmp.gt.f32.partialorder %v4558, 0.0
        %vm4752 = vcmp.gt.f32.partialorder %v4561, 0.0
        %vm4753 = vcmp.gt.f32.partialorder %v4566, 0.0
        %vm4754 = vcmp.gt.f32.partialorder %v4569, 0.0
        %vm4755 = vcmp.gt.f32.partialorder %v4574, 0.0
        %vm4756 = vcmp.gt.f32.partialorder %v4577, 0.0
        %vm4757 = vcmp.gt.f32.partialorder %v4582, 0.0
        %vm4758 = vcmp.gt.f32.partialorder %v4585, 0.0
        %vm4759 = vcmp.gt.f32.partialorder %v4590, 0.0
        %vm4760 = vcmp.gt.f32.partialorder %v4593, 0.0
        %vm4761 = vcmp.gt.f32.partialorder %v4598, 0.0
        %vm4762 = vcmp.gt.f32.partialorder %v4601, 0.0
        %vm4763 = vcmp.gt.f32.partialorder %v4606, 0.0
        %vm4764 = vcmp.gt.f32.partialorder %v4609, 0.0
        %vm4765 = vcmp.gt.f32.partialorder %v4614, 0.0
        %vm4766 = vcmp.gt.f32.partialorder %v4617, 0.0
        %vm4767 = vcmp.gt.f32.partialorder %v4622, 0.0
        %vm4768 = vcmp.gt.f32.partialorder %v4625, 0.0
        %vm4769 = vcmp.gt.f32.partialorder %v4630, 0.0
        %vm4770 = vcmp.gt.f32.partialorder %v4633, 0.0
        %vm4771 = vcmp.gt.f32.partialorder %v4638, 0.0
        %vm4772 = vcmp.gt.f32.partialorder %v4641, 0.0
        %vm4773 = vcmp.gt.f32.partialorder %v4646, 0.0
        %vm4774 = vcmp.gt.f32.partialorder %v4649, 0.0
        %vm4775 = vcmp.gt.f32.partialorder %v4654, 0.0
        %vm4776 = vcmp.gt.f32.partialorder %v4657, 0.0
        %vm4777 = vcmp.gt.f32.partialorder %v4662, 0.0
        %vm4778 = vcmp.gt.f32.partialorder %v4665, 0.0
        %vm4779 = vcmp.gt.f32.partialorder %v4670, 0.0
        %vm4780 = vcmp.gt.f32.partialorder %v4673, 0.0
        %vm4781 = vcmp.gt.f32.partialorder %v4678, 0.0
        %vm4782 = vcmp.gt.f32.partialorder %v4681, 0.0
        %vm4783 = vcmp.gt.f32.partialorder %v4686, 0.0
        %vm4784 = vcmp.gt.f32.partialorder %v4689, 0.0
        %vm4785 = vcmp.gt.f32.partialorder %v4694, 0.0
        %vm4786 = vcmp.gt.f32.partialorder %v4697, 0.0
        %vm4787 = vcmp.gt.f32.partialorder %v4702, 0.0
        %vm4788 = vcmp.gt.f32.partialorder %v4705, 0.0
        %vm4789 = vcmp.gt.f32.partialorder %v4710, 0.0
        %vm4790 = vcmp.gt.f32.partialorder %v4713, 0.0
        %vm4791 = vcmp.gt.f32.partialorder %v4718, 0.0
        %vm4792 = vcmp.gt.f32.partialorder %v4721, 0.0
        %vm4793 = vcmp.gt.f32.partialorder %v4726, 0.0
        %v4794 = vmul.f32 %v4478, 1.442695
        %v4795 = vpow.pop %v4794
        %v4796 = vmul.f32 %v4481, 1.442695
        %v4797 = vpow.pop %v4796
        %v4798 = vmul.f32 %v4486, 1.442695
        %v4799 = vpow.pop %v4798
        %v4800 = vmul.f32 %v4489, 1.442695
        %v4801 = vpow.pop %v4800
        %v4802 = vmul.f32 %v4494, 1.442695
        %v4803 = vpow.pop %v4802
        %v4804 = vmul.f32 %v4497, 1.442695
        %v4805 = vpow.pop %v4804
        %v4806 = vmul.f32 %v4502, 1.442695
        %v4807 = vpow.pop %v4806
        %v4808 = vmul.f32 %v4505, 1.442695
        %v4809 = vpow.pop %v4808
        %v4810 = vmul.f32 %v4510, 1.442695
        %v4811 = vpow.pop %v4810
        %v4812 = vmul.f32 %v4513, 1.442695
        %v4813 = vpow.pop %v4812
        %v4814 = vmul.f32 %v4518, 1.442695
        %v4815 = vpow.pop %v4814
        %v4816 = vmul.f32 %v4521, 1.442695
        %v4817 = vpow.pop %v4816
        %v4818 = vmul.f32 %v4526, 1.442695
        %v4819 = vpow.pop %v4818
        %v4820 = vmul.f32 %v4529, 1.442695
        %v4821 = vpow.pop %v4820
        %v4822 = vmul.f32 %v4534, 1.442695
        %v4823 = vpow.pop %v4822
        %v4824 = vmul.f32 %v4537, 1.442695
        %v4825 = vpow.pop %v4824
        %v4826 = vmul.f32 %v4542, 1.442695
        %v4827 = vpow.pop %v4826
        %v4828 = vmul.f32 %v4545, 1.442695
        %v4829 = vpow.pop %v4828
        %v4830 = vmul.f32 %v4550, 1.442695
        %v4831 = vpow.pop %v4830
        %v4832 = vmul.f32 %v4553, 1.442695
        %v4833 = vpow.pop %v4832
        %v4834 = vmul.f32 %v4558, 1.442695
        %v4835 = vpow.pop %v4834
        %v4836 = vmul.f32 %v4561, 1.442695
        %v4837 = vpow.pop %v4836
        %v4838 = vmul.f32 %v4566, 1.442695
        %v4839 = vpow.pop %v4838
        %v4840 = vmul.f32 %v4569, 1.442695
        %v4841 = vpow.pop %v4840
        %v4842 = vmul.f32 %v4574, 1.442695
        %v4843 = vpow.pop %v4842
        %v4844 = vmul.f32 %v4577, 1.442695
        %v4845 = vpow.pop %v4844
        %v4846 = vmul.f32 %v4582, 1.442695
        %v4847 = vpow.pop %v4846
        %v4848 = vmul.f32 %v4585, 1.442695
        %v4849 = vpow.pop %v4848
        %v4850 = vmul.f32 %v4590, 1.442695
        %v4851 = vpow.pop %v4850
        %v4852 = vmul.f32 %v4593, 1.442695
        %v4853 = vpow.pop %v4852
        %v4854 = vmul.f32 %v4598, 1.442695
        %v4855 = vpow.pop %v4854
        %v4856 = vmul.f32 %v4601, 1.442695
        %v4857 = vpow.pop %v4856
        %v4858 = vmul.f32 %v4606, 1.442695
        %v4859 = vpow.pop %v4858
        %v4860 = vmul.f32 %v4609, 1.442695
        %v4861 = vpow.pop %v4860
        %v4862 = vmul.f32 %v4614, 1.442695
        %v4863 = vpow.pop %v4862
        %v4864 = vmul.f32 %v4617, 1.442695
        %v4865 = vpow.pop %v4864
        %v4866 = vmul.f32 %v4622, 1.442695
        %v4867 = vpow.pop %v4866
        %v4868 = vmul.f32 %v4625, 1.442695
        %v4869 = vpow.pop %v4868
        %v4870 = vmul.f32 %v4630, 1.442695
        %v4871 = vpow.pop %v4870
        %v4872 = vmul.f32 %v4633, 1.442695
        %v4873 = vpow.pop %v4872
        %v4874 = vmul.f32 %v4638, 1.442695
        %v4875 = vpow.pop %v4874
        %v4876 = vmul.f32 %v4641, 1.442695
        %v4877 = vpow.pop %v4876
        %v4878 = vmul.f32 %v4646, 1.442695
        %v4879 = vpow.pop %v4878
        %v4880 = vmul.f32 %v4649, 1.442695
        %v4881 = vpow.pop %v4880
        %v4882 = vmul.f32 %v4654, 1.442695
        %v4883 = vpow.pop %v4882
        %v4884 = vmul.f32 %v4657, 1.442695
        %v4885 = vpow.pop %v4884
        %v4886 = vmul.f32 %v4662, 1.442695
        %v4887 = vpow.pop %v4886
        %v4888 = vmul.f32 %v4665, 1.442695
        %v4889 = vpow.pop %v4888
        %v4890 = vmul.f32 %v4670, 1.442695
        %v4891 = vpow.pop %v4890
        %v4892 = vmul.f32 %v4673, 1.442695
        %v4893 = vpow.pop %v4892
        %v4894 = vmul.f32 %v4678, 1.442695
        %v4895 = vpow.pop %v4894
        %v4896 = vmul.f32 %v4681, 1.442695
        %v4897 = vpow.pop %v4896
        %v4898 = vmul.f32 %v4686, 1.442695
        %v4899 = vpow.pop %v4898
        %v4900 = vmul.f32 %v4689, 1.442695
        %v4901 = vpow.pop %v4900
        %v4902 = vmul.f32 %v4694, 1.442695
        %v4903 = vpow.pop %v4902
        %v4904 = vmul.f32 %v4697, 1.442695
        %v4905 = vpow.pop %v4904
        %v4906 = vmul.f32 %v4702, 1.442695
        %v4907 = vpow.pop %v4906
        %v4908 = vmul.f32 %v4705, 1.442695
        %v4909 = vpow.pop %v4908
        %v4910 = vmul.f32 %v4710, 1.442695
        %v4911 = vpow.pop %v4910
        %v4912 = vmul.f32 %v4713, 1.442695
        %v4913 = vpow.pop %v4912
        %v4914 = vmul.f32 %v4718, 1.442695
        %v4915 = vpow.pop %v4914
        %v4916 = vmul.f32 %v4721, 1.442695
        %v4917 = vpow.pop %v4916
        %v4918 = vmul.f32 %v4726, 1.442695
        %v4919 = vpow.pop %v4918
        %v4920 = vsub.f32 %v4795, 1.0
        %v4921 = vsub.f32 %v4797, 1.0
        %v4922 = vsub.f32 %v4799, 1.0
        %v4923 = vsub.f32 %v4801, 1.0
        %v4924 = vsub.f32 %v4803, 1.0
        %v4925 = vsub.f32 %v4805, 1.0
        %v4926 = vsub.f32 %v4807, 1.0
        %v4927 = vsub.f32 %v4809, 1.0
        %v4928 = vsub.f32 %v4811, 1.0
        %v4929 = vsub.f32 %v4813, 1.0
        %v4930 = vsub.f32 %v4815, 1.0
        %v4931 = vsub.f32 %v4817, 1.0
        %v4932 = vsub.f32 %v4819, 1.0
        %v4933 = vsub.f32 %v4821, 1.0
        %v4934 = vsub.f32 %v4823, 1.0
        %v4935 = vsub.f32 %v4825, 1.0
        %v4936 = vsub.f32 %v4827, 1.0
        %v4937 = vsub.f32 %v4829, 1.0
        %v4938 = vsub.f32 %v4831, 1.0
        %v4939 = vsub.f32 %v4833, 1.0
        %v4940 = vsub.f32 %v4835, 1.0
        %v4941 = vsub.f32 %v4837, 1.0
        %v4942 = vsub.f32 %v4839, 1.0
        %v4943 = vsub.f32 %v4841, 1.0
        %v4944 = vsub.f32 %v4843, 1.0
        %v4945 = vsub.f32 %v4845, 1.0
        %v4946 = vsub.f32 %v4847, 1.0
        %v4947 = vsub.f32 %v4849, 1.0
        %v4948 = vsub.f32 %v4851, 1.0
        %v4949 = vsub.f32 %v4853, 1.0
        %v4950 = vsub.f32 %v4855, 1.0
        %v4951 = vsub.f32 %v4857, 1.0
        %v4952 = vsub.f32 %v4859, 1.0
        %v4953 = vsub.f32 %v4861, 1.0
        %v4954 = vsub.f32 %v4863, 1.0
        %v4955 = vsub.f32 %v4865, 1.0
        %v4956 = vsub.f32 %v4867, 1.0
        %v4957 = vsub.f32 %v4869, 1.0
        %v4958 = vsub.f32 %v4871, 1.0
        %v4959 = vsub.f32 %v4873, 1.0
        %v4960 = vsub.f32 %v4875, 1.0
        %v4961 = vsub.f32 %v4877, 1.0
        %v4962 = vsub.f32 %v4879, 1.0
        %v4963 = vsub.f32 %v4881, 1.0
        %v4964 = vsub.f32 %v4883, 1.0
        %v4965 = vsub.f32 %v4885, 1.0
        %v4966 = vsub.f32 %v4887, 1.0
        %v4967 = vsub.f32 %v4889, 1.0
        %v4968 = vsub.f32 %v4891, 1.0
        %v4969 = vsub.f32 %v4893, 1.0
        %v4970 = vsub.f32 %v4895, 1.0
        %v4971 = vsub.f32 %v4897, 1.0
        %v4972 = vsub.f32 %v4899, 1.0
        %v4973 = vsub.f32 %v4901, 1.0
        %v4974 = vsub.f32 %v4903, 1.0
        %v4975 = vsub.f32 %v4905, 1.0
        %v4976 = vsub.f32 %v4907, 1.0
        %v4977 = vsub.f32 %v4909, 1.0
        %v4978 = vsub.f32 %v4911, 1.0
        %v4979 = vsub.f32 %v4913, 1.0
        %v4980 = vsub.f32 %v4915, 1.0
        %v4981 = vsub.f32 %v4917, 1.0
        %v4982 = vsub.f32 %v4919, 1.0
        %v4983 = vsel %vm4731, %v4478, %v4920
        %v4984 = vsel %vm4732, %v4481, %v4921
        %v4985 = vsel %vm4733, %v4486, %v4922
        %v4986 = vsel %vm4734, %v4489, %v4923
        %v4987 = vsel %vm4735, %v4494, %v4924
        %v4988 = vsel %vm4736, %v4497, %v4925
        %v4989 = vsel %vm4737, %v4502, %v4926
        %v4990 = vsel %vm4738, %v4505, %v4927
        %v4991 = vsel %vm4739, %v4510, %v4928
        %v4992 = vsel %vm4740, %v4513, %v4929
        %v4993 = vsel %vm4741, %v4518, %v4930
        %v4994 = vsel %vm4742, %v4521, %v4931
        %v4995 = vsel %vm4743, %v4526, %v4932
        %v4996 = vsel %vm4744, %v4529, %v4933
        %v4997 = vsel %vm4745, %v4534, %v4934
        %v4998 = vsel %vm4746, %v4537, %v4935
        %v4999 = vsel %vm4747, %v4542, %v4936
        %v5000 = vsel %vm4748, %v4545, %v4937
        %v5001 = vsel %vm4749, %v4550, %v4938
        %v5002 = vsel %vm4750, %v4553, %v4939
        %v5003 = vsel %vm4751, %v4558, %v4940
        %v5004 = vsel %vm4752, %v4561, %v4941
        %v5005 = vsel %vm4753, %v4566, %v4942
        %v5006 = vsel %vm4754, %v4569, %v4943
        %v5007 = vsel %vm4755, %v4574, %v4944
        %v5008 = vsel %vm4756, %v4577, %v4945
        %v5009 = vsel %vm4757, %v4582, %v4946
        %v5010 = vsel %vm4758, %v4585, %v4947
        %v5011 = vsel %vm4759, %v4590, %v4948
        %v5012 = vsel %vm4760, %v4593, %v4949
        %v5013 = vsel %vm4761, %v4598, %v4950
        %v5014 = vsel %vm4762, %v4601, %v4951
        %v5015 = vsel %vm4763, %v4606, %v4952
        %v5016 = vsel %vm4764, %v4609, %v4953
        %v5017 = vsel %vm4765, %v4614, %v4954
        %v5018 = vsel %vm4766, %v4617, %v4955
        %v5019 = vsel %vm4767, %v4622, %v4956
        %v5020 = vsel %vm4768, %v4625, %v4957
        %v5021 = vsel %vm4769, %v4630, %v4958
        %v5022 = vsel %vm4770, %v4633, %v4959
        %v5023 = vsel %vm4771, %v4638, %v4960
        %v5024 = vsel %vm4772, %v4641, %v4961
        %v5025 = vsel %vm4773, %v4646, %v4962
        %v5026 = vsel %vm4774, %v4649, %v4963
        %v5027 = vsel %vm4775, %v4654, %v4964
        %v5028 = vsel %vm4776, %v4657, %v4965
        %v5029 = vsel %vm4777, %v4662, %v4966
        %v5030 = vsel %vm4778, %v4665, %v4967
        %v5031 = vsel %vm4779, %v4670, %v4968
        %v5032 = vsel %vm4780, %v4673, %v4969
        %v5033 = vsel %vm4781, %v4678, %v4970
        %v5034 = vsel %vm4782, %v4681, %v4971
        %v5035 = vsel %vm4783, %v4686, %v4972
        %v5036 = vsel %vm4784, %v4689, %v4973
        %v5037 = vsel %vm4785, %v4694, %v4974
        %v5038 = vsel %vm4786, %v4697, %v4975
        %v5039 = vsel %vm4787, %v4702, %v4976
        %v5040 = vsel %vm4788, %v4705, %v4977
        %v5041 = vsel %vm4789, %v4710, %v4978
        %v5042 = vsel %vm4790, %v4713, %v4979
        %v5043 = vsel %vm4791, %v4718, %v4980
        %v5044 = vsel %vm4792, %v4721, %v4981
        %v5045 = vsel %vm4793, %v4726, %v4982
        %v5046 = vpack.c.bf16 %v4984, %v4983
        %v5047 = vpack.c.bf16 %v4986, %v4985
        %v5048 = vpack.c.bf16 %v4988, %v4987
        %v5049 = vpack.c.bf16 %v4990, %v4989
        %v5050 = vpack.c.bf16 %v4992, %v4991
        %v5051 = vpack.c.bf16 %v4994, %v4993
        %v5052 = vpack.c.bf16 %v4996, %v4995
        %v5053 = vpack.c.bf16 %v4998, %v4997
        %v5054 = vpack.c.bf16 %v5000, %v4999
        %v5055 = vpack.c.bf16 %v5002, %v5001
        %v5056 = vpack.c.bf16 %v5004, %v5003
        %v5057 = vpack.c.bf16 %v5006, %v5005
        %v5058 = vpack.c.bf16 %v5008, %v5007
        %v5059 = vpack.c.bf16 %v5010, %v5009
        %v5060 = vpack.c.bf16 %v5012, %v5011
        %v5061 = vpack.c.bf16 %v5014, %v5013
        %v5062 = vpack.c.bf16 %v5016, %v5015
        %v5063 = vpack.c.bf16 %v5018, %v5017
        %v5064 = vpack.c.bf16 %v5020, %v5019
        %v5065 = vpack.c.bf16 %v5022, %v5021
        %v5066 = vpack.c.bf16 %v5024, %v5023
        %v5067 = vpack.c.bf16 %v5026, %v5025
        %v5068 = vpack.c.bf16 %v5028, %v5027
        %v5069 = vpack.c.bf16 %v5030, %v5029
        %v5070 = vpack.c.bf16 %v5032, %v5031
        %v5071 = vpack.c.bf16 %v5034, %v5033
        %v5072 = vpack.c.bf16 %v5036, %v5035
        %v5073 = vpack.c.bf16 %v5038, %v5037
        %v5074 = vpack.c.bf16 %v5040, %v5039
        %v5075 = vpack.c.bf16 %v5042, %v5041
        %v5076 = vpack.c.bf16 %v5044, %v5043
        %v5077 = vpack.c.bf16 %v5045, %v5045
        %v5078 = vld [vmem:[%s12] sm:$0xf]
        %v5079 = vld [vmem:[%s12 + $0x4] sm:$0xf]
        %v5080 = vld [vmem:[%s12 + $0x8] sm:$0xf]
        %v5081 = vld [vmem:[%s12 + $0xc] sm:$0xf]
        %v5082 = vld [vmem:[%s12 + $0x10] sm:$0xf]
        %v5083 = vld [vmem:[%s12 + $0x14] sm:$0xf]
        %v5084 = vld [vmem:[%s12 + $0x18] sm:$0xf]
        %v5085 = vld [vmem:[%s12 + $0x1c] sm:$0xf]
        %v5086 = vld [vmem:[%s12 + $0x20] sm:$0xf]
        %v5087 = vld [vmem:[%s12 + $0x24] sm:$0xf]
        %v5088 = vld [vmem:[%s12 + $0x28] sm:$0xf]
        %v5089 = vld [vmem:[%s12 + $0x2c] sm:$0xf]
        %v5090 = vld [vmem:[%s12 + $0x30] sm:$0xf]
        %v5091 = vld [vmem:[%s12 + $0x34] sm:$0xf]
        %v5092 = vld [vmem:[%s12 + $0x38] sm:$0xf]
        %v5093 = vld [vmem:[%s12 + $0x3c] sm:$0xf]
        %v5094 = vld [vmem:[%s13] sm:$0x1]
        %v5096 = vlaneseq
        %v5097 = vshrl.u32 %v5096, 7
        %v5098 = vsub.s32 0, %v5097
        %v5099 = vrot.slane %v5094, %v5098
        %v5117 = vunpack.c.l.b16 %v5078
        %v5118 = vunpack.c.l.b16 %v5079
        %v5119 = vunpack.c.l.b16 %v5080
        %v5120 = vunpack.c.l.b16 %v5081
        %v5121 = vunpack.c.l.b16 %v5082
        %v5122 = vunpack.c.l.b16 %v5083
        %v5123 = vunpack.c.l.b16 %v5084
        %v5124 = vunpack.c.l.b16 %v5085
        %v5125 = vunpack.c.l.b16 %v5086
        %v5126 = vunpack.c.l.b16 %v5087
        %v5127 = vunpack.c.l.b16 %v5088
        %v5128 = vunpack.c.l.b16 %v5089
        %v5129 = vunpack.c.l.b16 %v5090
        %v5130 = vunpack.c.l.b16 %v5091
        %v5131 = vunpack.c.l.b16 %v5092
        %v5132 = vunpack.c.l.b16 %v5093
        %v5133 = vpack.c.b16 %v5118, %v5117
        %v5134 = vpack.c.b16 %v5120, %v5119
        %v5135 = vpack.c.b16 %v5122, %v5121
        %v5136 = vpack.c.b16 %v5124, %v5123
        %v5137 = vpack.c.b16 %v5126, %v5125
        %v5138 = vpack.c.b16 %v5128, %v5127
        %v5139 = vpack.c.b16 %v5130, %v5129
        %v5140 = vpack.c.b16 %v5132, %v5131
        %5149 = vmatprep.subr.bf16.mxu0 0
        %5150 = vmatpush1.bf16.msra.mxu0 %v5133
        %5151 = vmatprep.subr.bf16.mxu0 0
        %5152 = vmatpush1.bf16.msra.mxu0 %v5134
        %5153 = vmatprep.subr.bf16.mxu0 0
        %5154 = vmatpush1.bf16.msra.mxu0 %v5135
        %5155 = vmatprep.subr.bf16.mxu0 0
        %5156 = vmatpush1.bf16.msra.mxu0 %v5136
        %5157 = vmatprep.subr.bf16.mxu0 0
        %5158 = vmatpush1.bf16.msra.mxu0 %v5137
        %5159 = vmatprep.subr.bf16.mxu0 0
        %5160 = vmatpush1.bf16.msra.mxu0 %v5138
        %5161 = vmatprep.subr.bf16.mxu0 0
        %5162 = vmatpush1.bf16.msra.mxu0 %v5139
        %5163 = vmatprep.subr.bf16.mxu0 0
        %5164 = vmatpush1.bf16.msra.mxu0 %v5140
        %5165 = vmatprep.subr.bf16.mxu0 0
        %5166 = vmatpush1.bf16.msra.mxu0 0
        %5167 = vmatprep.subr.bf16.mxu0 0
        %5168 = vmatpush1.bf16.msra.mxu0 0
        %5169 = vmatprep.subr.bf16.mxu0 0
        %5170 = vmatpush1.bf16.msra.mxu0 0
        %5171 = vmatprep.subr.bf16.mxu0 0
        %5172 = vmatpush1.bf16.msra.mxu0 0
        %5173 = vmatprep.subr.bf16.mxu0 0
        %5174 = vmatpush1.bf16.msra.mxu0 0
        %5175 = vmatprep.subr.bf16.mxu0 0
        %5176 = vmatpush1.bf16.msra.mxu0 0
        %5177 = vmatprep.subr.bf16.mxu0 0
        %5178 = vmatpush1.bf16.msra.mxu0 0
        %5179 = vmatprep.subr.bf16.mxu0 0
        %5180 = vmatpush1.bf16.msra.mxu0 0
        %5181 = vmatprep.mubr.bf16.mxu0 0
        %5182 = vmatmul.mubr.bf16.gmra.mrb[0].mxu0 %v5046
        %v5183 = vpop.f32.mrb[0].mxu0
        %v5184 = vadd.f32 %v5099, %v5183
        %v5185 = vpop.f32.mrb[0].mxu0
        %v5186 = vpop.f32.mrb[0].mxu0
        %v5187 = vadd.f32 %v5099, %v5186
        %v5188 = vpop.f32.mrb[0].mxu0
        %5189 = vmatprep.mubr.bf16.mxu0 0
        %5190 = vmatmul.mubr.bf16.gmra.mrb[0].mxu0 %v5047
        %v5191 = vpop.f32.mrb[0].mxu0
        %v5192 = vadd.f32 %v5099, %v5191
        %v5193 = vpop.f32.mrb[0].mxu0
        %v5194 = vpop.f32.mrb[0].mxu0
        %v5195 = vadd.f32 %v5099, %v5194
        %v5196 = vpop.f32.mrb[0].mxu0
        %5197 = vmatprep.mubr.bf16.mxu0 0
        %5198 = vmatmul.mubr.bf16.gmra.mrb[0].mxu0 %v5048
        %v5199 = vpop.f32.mrb[0].mxu0
        %v5200 = vadd.f32 %v5099, %v5199
        %v5201 = vpop.f32.mrb[0].mxu0
        %v5202 = vpop.f32.mrb[0].mxu0
        %v5203 = vadd.f32 %v5099, %v5202
        %v5204 = vpop.f32.mrb[0].mxu0
        %5205 = vmatprep.mubr.bf16.mxu0 0
        %5206 = vmatmul.mubr.bf16.gmra.mrb[0].mxu0 %v5049
        %v5207 = vpop.f32.mrb[0].mxu0
        %v5208 = vadd.f32 %v5099, %v5207
        %v5209 = vpop.f32.mrb[0].mxu0
        %v5210 = vpop.f32.mrb[0].mxu0
        %v5211 = vadd.f32 %v5099, %v5210
        %v5212 = vpop.f32.mrb[0].mxu0
        %5213 = vmatprep.mubr.bf16.mxu0 0
        %5214 = vmatmul.mubr.bf16.gmra.mrb[0].mxu0 %v5050
        %v5215 = vpop.f32.mrb[0].mxu0
        %v5216 = vadd.f32 %v5099, %v5215
        %v5217 = vpop.f32.mrb[0].mxu0
        %v5218 = vpop.f32.mrb[0].mxu0
        %v5219 = vadd.f32 %v5099, %v5218
        %v5220 = vpop.f32.mrb[0].mxu0
        %5221 = vmatprep.mubr.bf16.mxu0 0
        %5222 = vmatmul.mubr.bf16.gmra.mrb[0].mxu0 %v5051
        %v5223 = vpop.f32.mrb[0].mxu0
        %v5224 = vadd.f32 %v5099, %v5223
        %v5225 = vpop.f32.mrb[0].mxu0
        %v5226 = vpop.f32.mrb[0].mxu0
        %v5227 = vadd.f32 %v5099, %v5226
        %v5228 = vpop.f32.mrb[0].mxu0
        %5229 = vmatprep.mubr.bf16.mxu0 0
        %5230 = vmatmul.mubr.bf16.gmra.mrb[0].mxu0 %v5052
        %v5231 = vpop.f32.mrb[0].mxu0
        %v5232 = vadd.f32 %v5099, %v5231
        %v5233 = vpop.f32.mrb[0].mxu0
        %v5234 = vpop.f32.mrb[0].mxu0
        %v5235 = vadd.f32 %v5099, %v5234
        %v5236 = vpop.f32.mrb[0].mxu0
        %5237 = vmatprep.mubr.bf16.mxu0 0
        %5238 = vmatmul.mubr.bf16.gmra.mrb[0].mxu0 %v5053
        %v5239 = vpop.f32.mrb[0].mxu0
        %v5240 = vadd.f32 %v5099, %v5239
        %v5241 = vpop.f32.mrb[0].mxu0
        %v5242 = vpop.f32.mrb[0].mxu0
        %v5243 = vadd.f32 %v5099, %v5242
        %v5244 = vpop.f32.mrb[0].mxu0
        %5245 = vmatprep.mubr.bf16.mxu0 0
        %5246 = vmatmul.mubr.bf16.gmra.mrb[0].mxu0 %v5054
        %v5247 = vpop.f32.mrb[0].mxu0
        %v5248 = vadd.f32 %v5099, %v5247
        %v5249 = vpop.f32.mrb[0].mxu0
        %v5250 = vpop.f32.mrb[0].mxu0
        %v5251 = vadd.f32 %v5099, %v5250
        %v5252 = vpop.f32.mrb[0].mxu0
        %5253 = vmatprep.mubr.bf16.mxu0 0
        %5254 = vmatmul.mubr.bf16.gmra.mrb[0].mxu0 %v5055
        %v5255 = vpop.f32.mrb[0].mxu0
        %v5256 = vadd.f32 %v5099, %v5255
        %v5257 = vpop.f32.mrb[0].mxu0
        %v5258 = vpop.f32.mrb[0].mxu0
        %v5259 = vadd.f32 %v5099, %v5258
        %v5260 = vpop.f32.mrb[0].mxu0
        %5261 = vmatprep.mubr.bf16.mxu0 0
        %5262 = vmatmul.mubr.bf16.gmra.mrb[0].mxu0 %v5056
        %v5263 = vpop.f32.mrb[0].mxu0
        %v5264 = vadd.f32 %v5099, %v5263
        %v5265 = vpop.f32.mrb[0].mxu0
        %v5266 = vpop.f32.mrb[0].mxu0
        %v5267 = vadd.f32 %v5099, %v5266
        %v5268 = vpop.f32.mrb[0].mxu0
        %5269 = vmatprep.mubr.bf16.mxu0 0
        %5270 = vmatmul.mubr.bf16.gmra.mrb[0].mxu0 %v5057
        %v5271 = vpop.f32.mrb[0].mxu0
        %v5272 = vadd.f32 %v5099, %v5271
        %v5273 = vpop.f32.mrb[0].mxu0
        %v5274 = vpop.f32.mrb[0].mxu0
        %v5275 = vadd.f32 %v5099, %v5274
        %v5276 = vpop.f32.mrb[0].mxu0
        %5277 = vmatprep.mubr.bf16.mxu0 0
        %5278 = vmatmul.mubr.bf16.gmra.mrb[0].mxu0 %v5058
        %v5279 = vpop.f32.mrb[0].mxu0
        %v5280 = vadd.f32 %v5099, %v5279
        %v5281 = vpop.f32.mrb[0].mxu0
        %v5282 = vpop.f32.mrb[0].mxu0
        %v5283 = vadd.f32 %v5099, %v5282
        %v5284 = vpop.f32.mrb[0].mxu0
        %5285 = vmatprep.mubr.bf16.mxu0 0
        %5286 = vmatmul.mubr.bf16.gmra.mrb[0].mxu0 %v5059
        %v5287 = vpop.f32.mrb[0].mxu0
        %v5288 = vadd.f32 %v5099, %v5287
        %v5289 = vpop.f32.mrb[0].mxu0
        %v5290 = vpop.f32.mrb[0].mxu0
        %v5291 = vadd.f32 %v5099, %v5290
        %v5292 = vpop.f32.mrb[0].mxu0
        %5293 = vmatprep.mubr.bf16.mxu0 0
        %5294 = vmatmul.mubr.bf16.gmra.mrb[0].mxu0 %v5060
        %v5295 = vpop.f32.mrb[0].mxu0
        %v5296 = vadd.f32 %v5099, %v5295
        %v5297 = vpop.f32.mrb[0].mxu0
        %v5298 = vpop.f32.mrb[0].mxu0
        %v5299 = vadd.f32 %v5099, %v5298
        %v5300 = vpop.f32.mrb[0].mxu0
        %5301 = vmatprep.mubr.bf16.mxu0 0
        %5302 = vmatmul.mubr.bf16.gmra.mrb[0].mxu0 %v5061
        %v5303 = vpop.f32.mrb[0].mxu0
        %v5304 = vadd.f32 %v5099, %v5303
        %v5305 = vpop.f32.mrb[0].mxu0
        %v5306 = vpop.f32.mrb[0].mxu0
        %v5307 = vadd.f32 %v5099, %v5306
        %v5308 = vpop.f32.mrb[0].mxu0
        %5309 = vmatprep.mubr.bf16.mxu0 0
        %5310 = vmatmul.mubr.bf16.gmra.mrb[0].mxu0 %v5062
        %v5311 = vpop.f32.mrb[0].mxu0
        %v5312 = vadd.f32 %v5099, %v5311
        %v5313 = vpop.f32.mrb[0].mxu0
        %v5314 = vpop.f32.mrb[0].mxu0
        %v5315 = vadd.f32 %v5099, %v5314
        %v5316 = vpop.f32.mrb[0].mxu0
        %5317 = vmatprep.mubr.bf16.mxu0 0
        %5318 = vmatmul.mubr.bf16.gmra.mrb[0].mxu0 %v5063
        %v5319 = vpop.f32.mrb[0].mxu0
        %v5320 = vadd.f32 %v5099, %v5319
        %v5321 = vpop.f32.mrb[0].mxu0
        %v5322 = vpop.f32.mrb[0].mxu0
        %v5323 = vadd.f32 %v5099, %v5322
        %v5324 = vpop.f32.mrb[0].mxu0
        %5325 = vmatprep.mubr.bf16.mxu0 0
        %5326 = vmatmul.mubr.bf16.gmra.mrb[0].mxu0 %v5064
        %v5327 = vpop.f32.mrb[0].mxu0
        %v5328 = vadd.f32 %v5099, %v5327
        %v5329 = vpop.f32.mrb[0].mxu0
        %v5330 = vpop.f32.mrb[0].mxu0
        %v5331 = vadd.f32 %v5099, %v5330
        %v5332 = vpop.f32.mrb[0].mxu0
        %5333 = vmatprep.mubr.bf16.mxu0 0
        %5334 = vmatmul.mubr.bf16.gmra.mrb[0].mxu0 %v5065
        %v5335 = vpop.f32.mrb[0].mxu0
        %v5336 = vadd.f32 %v5099, %v5335
        %v5337 = vpop.f32.mrb[0].mxu0
        %v5338 = vpop.f32.mrb[0].mxu0
        %v5339 = vadd.f32 %v5099, %v5338
        %v5340 = vpop.f32.mrb[0].mxu0
        %5341 = vmatprep.mubr.bf16.mxu0 0
        %5342 = vmatmul.mubr.bf16.gmra.mrb[0].mxu0 %v5066
        %v5343 = vpop.f32.mrb[0].mxu0
        %v5344 = vadd.f32 %v5099, %v5343
        %v5345 = vpop.f32.mrb[0].mxu0
        %v5346 = vpop.f32.mrb[0].mxu0
        %v5347 = vadd.f32 %v5099, %v5346
        %v5348 = vpop.f32.mrb[0].mxu0
        %5349 = vmatprep.mubr.bf16.mxu0 0
        %5350 = vmatmul.mubr.bf16.gmra.mrb[0].mxu0 %v5067
        %v5351 = vpop.f32.mrb[0].mxu0
        %v5352 = vadd.f32 %v5099, %v5351
        %v5353 = vpop.f32.mrb[0].mxu0
        %v5354 = vpop.f32.mrb[0].mxu0
        %v5355 = vadd.f32 %v5099, %v5354
        %v5356 = vpop.f32.mrb[0].mxu0
        %5357 = vmatprep.mubr.bf16.mxu0 0
        %5358 = vmatmul.mubr.bf16.gmra.mrb[0].mxu0 %v5068
        %v5359 = vpop.f32.mrb[0].mxu0
        %v5360 = vadd.f32 %v5099, %v5359
        %v5361 = vpop.f32.mrb[0].mxu0
        %v5362 = vpop.f32.mrb[0].mxu0
        %v5363 = vadd.f32 %v5099, %v5362
        %v5364 = vpop.f32.mrb[0].mxu0
        %5365 = vmatprep.mubr.bf16.mxu0 0
        %5366 = vmatmul.mubr.bf16.gmra.mrb[0].mxu0 %v5069
        %v5367 = vpop.f32.mrb[0].mxu0
        %v5368 = vadd.f32 %v5099, %v5367
        %v5369 = vpop.f32.mrb[0].mxu0
        %v5370 = vpop.f32.mrb[0].mxu0
        %v5371 = vadd.f32 %v5099, %v5370
        %v5372 = vpop.f32.mrb[0].mxu0
        %5373 = vmatprep.mubr.bf16.mxu0 0
        %5374 = vmatmul.mubr.bf16.gmra.mrb[0].mxu0 %v5070
        %v5375 = vpop.f32.mrb[0].mxu0
        %v5376 = vadd.f32 %v5099, %v5375
        %v5377 = vpop.f32.mrb[0].mxu0
        %v5378 = vpop.f32.mrb[0].mxu0
        %v5379 = vadd.f32 %v5099, %v5378
        %v5380 = vpop.f32.mrb[0].mxu0
        %5381 = vmatprep.mubr.bf16.mxu0 0
        %5382 = vmatmul.mubr.bf16.gmra.mrb[0].mxu0 %v5071
        %v5383 = vpop.f32.mrb[0].mxu0
        %v5384 = vadd.f32 %v5099, %v5383
        %v5385 = vpop.f32.mrb[0].mxu0
        %v5386 = vpop.f32.mrb[0].mxu0
        %v5387 = vadd.f32 %v5099, %v5386
        %v5388 = vpop.f32.mrb[0].mxu0
        %5389 = vmatprep.mubr.bf16.mxu0 0
        %5390 = vmatmul.mubr.bf16.gmra.mrb[0].mxu0 %v5072
        %v5391 = vpop.f32.mrb[0].mxu0
        %v5392 = vadd.f32 %v5099, %v5391
        %v5393 = vpop.f32.mrb[0].mxu0
        %v5394 = vpop.f32.mrb[0].mxu0
        %v5395 = vadd.f32 %v5099, %v5394
        %v5396 = vpop.f32.mrb[0].mxu0
        %5397 = vmatprep.mubr.bf16.mxu0 0
        %5398 = vmatmul.mubr.bf16.gmra.mrb[0].mxu0 %v5073
        %v5399 = vpop.f32.mrb[0].mxu0
        %v5400 = vadd.f32 %v5099, %v5399
        %v5401 = vpop.f32.mrb[0].mxu0
        %v5402 = vpop.f32.mrb[0].mxu0
        %v5403 = vadd.f32 %v5099, %v5402
        %v5404 = vpop.f32.mrb[0].mxu0
        %5405 = vmatprep.mubr.bf16.mxu0 0
        %5406 = vmatmul.mubr.bf16.gmra.mrb[0].mxu0 %v5074
        %v5407 = vpop.f32.mrb[0].mxu0
        %v5408 = vadd.f32 %v5099, %v5407
        %v5409 = vpop.f32.mrb[0].mxu0
        %v5410 = vpop.f32.mrb[0].mxu0
        %v5411 = vadd.f32 %v5099, %v5410
        %v5412 = vpop.f32.mrb[0].mxu0
        %5413 = vmatprep.mubr.bf16.mxu0 0
        %5414 = vmatmul.mubr.bf16.gmra.mrb[0].mxu0 %v5075
        %v5415 = vpop.f32.mrb[0].mxu0
        %v5416 = vadd.f32 %v5099, %v5415
        %v5417 = vpop.f32.mrb[0].mxu0
        %v5418 = vpop.f32.mrb[0].mxu0
        %v5419 = vadd.f32 %v5099, %v5418
        %v5420 = vpop.f32.mrb[0].mxu0
        %5421 = vmatprep.mubr.bf16.mxu0 0
        %5422 = vmatmul.mubr.bf16.gmra.mrb[0].mxu0 %v5076
        %v5423 = vpop.f32.mrb[0].mxu0
        %v5424 = vadd.f32 %v5099, %v5423
        %v5425 = vpop.f32.mrb[0].mxu0
        %v5426 = vpop.f32.mrb[0].mxu0
        %v5427 = vadd.f32 %v5099, %v5426
        %v5428 = vpop.f32.mrb[0].mxu0
        %5429 = vmatprep.mubr.bf16.mxu0 0
        %5430 = vmatmul.mubr.bf16.gmra.mrb[0].mxu0 %v5077
        %v5431 = vpop.f32.mrb[0].mxu0
        %v5432 = vadd.f32 %v5099, %v5431
        %v5433 = vpop.f32.mrb[0].mxu0
        %v5434 = vpop.f32.mrb[0].mxu0
        %v5435 = vpop.f32.mrb[0].mxu0
        %5436 = vdwg.mxu0
        %v5437 = vpack.c.bf16 %v5187, %v5184
        %v5438 = vpack.c.bf16 %v5195, %v5192
        %v5439 = vpack.c.bf16 %v5203, %v5200
        %v5440 = vpack.c.bf16 %v5211, %v5208
        %v5441 = vpack.c.bf16 %v5219, %v5216
        %v5442 = vpack.c.bf16 %v5227, %v5224
        %v5443 = vpack.c.bf16 %v5235, %v5232
        %v5444 = vpack.c.bf16 %v5243, %v5240
        %v5445 = vpack.c.bf16 %v5251, %v5248
        %v5446 = vpack.c.bf16 %v5259, %v5256
        %v5447 = vpack.c.bf16 %v5267, %v5264
        %v5448 = vpack.c.bf16 %v5275, %v5272
        %v5449 = vpack.c.bf16 %v5283, %v5280
        %v5450 = vpack.c.bf16 %v5291, %v5288
        %v5451 = vpack.c.bf16 %v5299, %v5296
        %v5452 = vpack.c.bf16 %v5307, %v5304
        %v5453 = vpack.c.bf16 %v5315, %v5312
        %v5454 = vpack.c.bf16 %v5323, %v5320
        %v5455 = vpack.c.bf16 %v5331, %v5328
        %v5456 = vpack.c.bf16 %v5339, %v5336
        %v5457 = vpack.c.bf16 %v5347, %v5344
        %v5458 = vpack.c.bf16 %v5355, %v5352
        %v5459 = vpack.c.bf16 %v5363, %v5360
        %v5460 = vpack.c.bf16 %v5371, %v5368
        %v5461 = vpack.c.bf16 %v5379, %v5376
        %v5462 = vpack.c.bf16 %v5387, %v5384
        %v5463 = vpack.c.bf16 %v5395, %v5392
        %v5464 = vpack.c.bf16 %v5403, %v5400
        %v5465 = vpack.c.bf16 %v5411, %v5408
        %v5466 = vpack.c.bf16 %v5419, %v5416
        %v5467 = vpack.c.bf16 %v5427, %v5424
        %v5468 = vpack.c.bf16 %v5432, %v5432
        %v5501 = vunpack.c.l.b16 %v5437
        %v5502 = vunpack.c.h.b16 %v5437
        %v5503 = vunpack.c.l.b16 %v5438
        %v5504 = vunpack.c.h.b16 %v5438
        %v5505 = vunpack.c.l.b16 %v5439
        %v5506 = vunpack.c.h.b16 %v5439
        %v5507 = vunpack.c.l.b16 %v5440
        %v5508 = vunpack.c.h.b16 %v5440
        %v5509 = vunpack.c.l.b16 %v5441
        %v5510 = vunpack.c.h.b16 %v5441
        %v5511 = vunpack.c.l.b16 %v5442
        %v5512 = vunpack.c.h.b16 %v5442
        %v5513 = vunpack.c.l.b16 %v5443
        %v5514 = vunpack.c.h.b16 %v5443
        %v5515 = vunpack.c.l.b16 %v5444
        %v5516 = vunpack.c.h.b16 %v5444
        %v5517 = vunpack.c.l.b16 %v5445
        %v5518 = vunpack.c.h.b16 %v5445
        %v5519 = vunpack.c.l.b16 %v5446
        %v5520 = vunpack.c.h.b16 %v5446
        %v5521 = vunpack.c.l.b16 %v5447
        %v5522 = vunpack.c.h.b16 %v5447
        %v5523 = vunpack.c.l.b16 %v5448
        %v5524 = vunpack.c.h.b16 %v5448
        %v5525 = vunpack.c.l.b16 %v5449
        %v5526 = vunpack.c.h.b16 %v5449
        %v5527 = vunpack.c.l.b16 %v5450
        %v5528 = vunpack.c.h.b16 %v5450
        %v5529 = vunpack.c.l.b16 %v5451
        %v5530 = vunpack.c.h.b16 %v5451
        %v5531 = vunpack.c.l.b16 %v5452
        %v5532 = vunpack.c.h.b16 %v5452
        %v5533 = vunpack.c.l.b16 %v5453
        %v5534 = vunpack.c.h.b16 %v5453
        %v5535 = vunpack.c.l.b16 %v5454
        %v5536 = vunpack.c.h.b16 %v5454
        %v5537 = vunpack.c.l.b16 %v5455
        %v5538 = vunpack.c.h.b16 %v5455
        %v5539 = vunpack.c.l.b16 %v5456
        %v5540 = vunpack.c.h.b16 %v5456
        %v5541 = vunpack.c.l.b16 %v5457
        %v5542 = vunpack.c.h.b16 %v5457
        %v5543 = vunpack.c.l.b16 %v5458
        %v5544 = vunpack.c.h.b16 %v5458
        %v5545 = vunpack.c.l.b16 %v5459
        %v5546 = vunpack.c.h.b16 %v5459
        %v5547 = vunpack.c.l.b16 %v5460
        %v5548 = vunpack.c.h.b16 %v5460
        %v5549 = vunpack.c.l.b16 %v5461
        %v5550 = vunpack.c.h.b16 %v5461
        %v5551 = vunpack.c.l.b16 %v5462
        %v5552 = vunpack.c.h.b16 %v5462
        %v5553 = vunpack.c.l.b16 %v5463
        %v5554 = vunpack.c.h.b16 %v5463
        %v5555 = vunpack.c.l.b16 %v5464
        %v5556 = vunpack.c.h.b16 %v5464
        %v5557 = vunpack.c.l.b16 %v5465
        %v5558 = vunpack.c.h.b16 %v5465
        %v5559 = vunpack.c.l.b16 %v5466
        %v5560 = vunpack.c.h.b16 %v5466
        %v5561 = vunpack.c.l.b16 %v5467
        %v5562 = vunpack.c.h.b16 %v5467
        %v5563 = vunpack.c.l.b16 %v5468
        %v5564 = vpack.c.b16 %v5501, %v5501
        %v5565 = vpack.c.b16 %v5502, %v5502
        %v5566 = vpack.c.b16 %v5503, %v5503
        %v5567 = vpack.c.b16 %v5504, %v5504
        %v5568 = vpack.c.b16 %v5505, %v5505
        %v5569 = vpack.c.b16 %v5506, %v5506
        %v5570 = vpack.c.b16 %v5507, %v5507
        %v5571 = vpack.c.b16 %v5508, %v5508
        %v5572 = vpack.c.b16 %v5509, %v5509
        %v5573 = vpack.c.b16 %v5510, %v5510
        %v5574 = vpack.c.b16 %v5511, %v5511
        %v5575 = vpack.c.b16 %v5512, %v5512
        %v5576 = vpack.c.b16 %v5513, %v5513
        %v5577 = vpack.c.b16 %v5514, %v5514
        %v5578 = vpack.c.b16 %v5515, %v5515
        %v5579 = vpack.c.b16 %v5516, %v5516
        %v5580 = vpack.c.b16 %v5517, %v5517
        %v5581 = vpack.c.b16 %v5518, %v5518
        %v5582 = vpack.c.b16 %v5519, %v5519
        %v5583 = vpack.c.b16 %v5520, %v5520
        %v5584 = vpack.c.b16 %v5521, %v5521
        %v5585 = vpack.c.b16 %v5522, %v5522
        %v5586 = vpack.c.b16 %v5523, %v5523
        %v5587 = vpack.c.b16 %v5524, %v5524
        %v5588 = vpack.c.b16 %v5525, %v5525
        %v5589 = vpack.c.b16 %v5526, %v5526
        %v5590 = vpack.c.b16 %v5527, %v5527
        %v5591 = vpack.c.b16 %v5528, %v5528
        %v5592 = vpack.c.b16 %v5529, %v5529
        %v5593 = vpack.c.b16 %v5530, %v5530
        %v5594 = vpack.c.b16 %v5531, %v5531
        %v5595 = vpack.c.b16 %v5532, %v5532
        %v5596 = vpack.c.b16 %v5533, %v5533
        %v5597 = vpack.c.b16 %v5534, %v5534
        %v5598 = vpack.c.b16 %v5535, %v5535
        %v5599 = vpack.c.b16 %v5536, %v5536
        %v5600 = vpack.c.b16 %v5537, %v5537
        %v5601 = vpack.c.b16 %v5538, %v5538
        %v5602 = vpack.c.b16 %v5539, %v5539
        %v5603 = vpack.c.b16 %v5540, %v5540
        %v5604 = vpack.c.b16 %v5541, %v5541
        %v5605 = vpack.c.b16 %v5542, %v5542
        %v5606 = vpack.c.b16 %v5543, %v5543
        %v5607 = vpack.c.b16 %v5544, %v5544
        %v5608 = vpack.c.b16 %v5545, %v5545
        %v5609 = vpack.c.b16 %v5546, %v5546
        %v5610 = vpack.c.b16 %v5547, %v5547
        %v5611 = vpack.c.b16 %v5548, %v5548
        %v5612 = vpack.c.b16 %v5549, %v5549
        %v5613 = vpack.c.b16 %v5550, %v5550
        %v5614 = vpack.c.b16 %v5551, %v5551
        %v5615 = vpack.c.b16 %v5552, %v5552
        %v5616 = vpack.c.b16 %v5553, %v5553
        %v5617 = vpack.c.b16 %v5554, %v5554
        %v5618 = vpack.c.b16 %v5555, %v5555
        %v5619 = vpack.c.b16 %v5556, %v5556
        %v5620 = vpack.c.b16 %v5557, %v5557
        %v5621 = vpack.c.b16 %v5558, %v5558
        %v5622 = vpack.c.b16 %v5559, %v5559
        %v5623 = vpack.c.b16 %v5560, %v5560
        %v5624 = vpack.c.b16 %v5561, %v5561
        %v5625 = vpack.c.b16 %v5562, %v5562
        %v5626 = vpack.c.b16 %v5563, %v5563
        %5690 = vst [vmem:[%s461] sm:$0xf] %v5564
        %5691 = vst [vmem:[%s461 + $0x4] sm:$0xf] %v5565
        %5692 = vst [vmem:[%s461 + $0x8] sm:$0xf] %v5566
        %5693 = vst [vmem:[%s461 + $0xc] sm:$0xf] %v5567
        %5694 = vst [vmem:[%s461 + $0x10] sm:$0xf] %v5568
        %5695 = vst [vmem:[%s461 + $0x14] sm:$0xf] %v5569
        %5696 = vst [vmem:[%s461 + $0x18] sm:$0xf] %v5570
        %5697 = vst [vmem:[%s461 + $0x1c] sm:$0xf] %v5571
        %5698 = vst [vmem:[%s461 + $0x20] sm:$0xf] %v5572
        %5699 = vst [vmem:[%s461 + $0x24] sm:$0xf] %v5573
        %5700 = vst [vmem:[%s461 + $0x28] sm:$0xf] %v5574
        %5701 = vst [vmem:[%s461 + $0x2c] sm:$0xf] %v5575
        %5702 = vst [vmem:[%s461 + $0x30] sm:$0xf] %v5576
        %5703 = vst [vmem:[%s461 + $0x34] sm:$0xf] %v5577
        %5704 = vst [vmem:[%s461 + $0x38] sm:$0xf] %v5578
        %5705 = vst [vmem:[%s461 + $0x3c] sm:$0xf] %v5579
        %5706 = vst [vmem:[%s461 + $0x40] sm:$0xf] %v5580
        %5707 = vst [vmem:[%s461 + $0x44] sm:$0xf] %v5581
        %5708 = vst [vmem:[%s461 + $0x48] sm:$0xf] %v5582
        %5709 = vst [vmem:[%s461 + $0x4c] sm:$0xf] %v5583
        %5710 = vst [vmem:[%s461 + $0x50] sm:$0xf] %v5584
        %5711 = vst [vmem:[%s461 + $0x54] sm:$0xf] %v5585
        %5712 = vst [vmem:[%s461 + $0x58] sm:$0xf] %v5586
        %5713 = vst [vmem:[%s461 + $0x5c] sm:$0xf] %v5587
        %5714 = vst [vmem:[%s461 + $0x60] sm:$0xf] %v5588
        %5715 = vst [vmem:[%s461 + $0x64] sm:$0xf] %v5589
        %5716 = vst [vmem:[%s461 + $0x68] sm:$0xf] %v5590
        %5717 = vst [vmem:[%s461 + $0x6c] sm:$0xf] %v5591
        %5718 = vst [vmem:[%s461 + $0x70] sm:$0xf] %v5592
        %5719 = vst [vmem:[%s461 + $0x74] sm:$0xf] %v5593
        %5720 = vst [vmem:[%s461 + $0x78] sm:$0xf] %v5594
        %5721 = vst [vmem:[%s461 + $0x7c] sm:$0xf] %v5595
        %5722 = vst [vmem:[%s461 + $0x80] sm:$0xf] %v5596
        %5723 = vst [vmem:[%s461 + $0x84] sm:$0xf] %v5597
        %5724 = vst [vmem:[%s461 + $0x88] sm:$0xf] %v5598
        %5725 = vst [vmem:[%s461 + $0x8c] sm:$0xf] %v5599
        %5726 = vst [vmem:[%s461 + $0x90] sm:$0xf] %v5600
        %5727 = vst [vmem:[%s461 + $0x94] sm:$0xf] %v5601
        %5728 = vst [vmem:[%s461 + $0x98] sm:$0xf] %v5602
        %5729 = vst [vmem:[%s461 + $0x9c] sm:$0xf] %v5603
        %5730 = vst [vmem:[%s461 + $0xa0] sm:$0xf] %v5604
        %5731 = vst [vmem:[%s461 + $0xa4] sm:$0xf] %v5605
        %5732 = vst [vmem:[%s461 + $0xa8] sm:$0xf] %v5606
        %5733 = vst [vmem:[%s461 + $0xac] sm:$0xf] %v5607
        %5734 = vst [vmem:[%s461 + $0xb0] sm:$0xf] %v5608
        %5735 = vst [vmem:[%s461 + $0xb4] sm:$0xf] %v5609
        %5736 = vst [vmem:[%s461 + $0xb8] sm:$0xf] %v5610
        %5737 = vst [vmem:[%s461 + $0xbc] sm:$0xf] %v5611
        %5738 = vst [vmem:[%s461 + $0xc0] sm:$0xf] %v5612
        %5739 = vst [vmem:[%s461 + $0xc4] sm:$0xf] %v5613
        %5740 = vst [vmem:[%s461 + $0xc8] sm:$0xf] %v5614
        %5741 = vst [vmem:[%s461 + $0xcc] sm:$0xf] %v5615
        %5742 = vst [vmem:[%s461 + $0xd0] sm:$0xf] %v5616
        %5743 = vst [vmem:[%s461 + $0xd4] sm:$0xf] %v5617
        %5744 = vst [vmem:[%s461 + $0xd8] sm:$0xf] %v5618
        %5745 = vst [vmem:[%s461 + $0xdc] sm:$0xf] %v5619
        %5746 = vst [vmem:[%s461 + $0xe0] sm:$0xf] %v5620
        %5747 = vst [vmem:[%s461 + $0xe4] sm:$0xf] %v5621
        %5748 = vst [vmem:[%s461 + $0xe8] sm:$0xf] %v5622
        %5749 = vst [vmem:[%s461 + $0xec] sm:$0xf] %v5623
        %5750 = vst [vmem:[%s461 + $0xf0] sm:$0xf] %v5624
        %5751 = vst [vmem:[%s461 + $0xf4] sm:$0xf] %v5625
        %5752 = vst [vmem:[%s461 + $0xf8] sm:$0xf] %v5626
        %s5753 = sand.u32 %s335, 1
        %s5754 = scalar_lea.sflag [#allocation3], %s5753
        %s5755 = sand.u32 %s335, 1
        %s5756 = smul.addr %s5755, 252
        %s5757 = scalar_lea.vmem [#allocation2], %s5756
        // Predicated region
        $region77: #{tpu_custom_call.1} parent=75 // pred_check
          %p5758 = pneg %p345
        $region78: #{tpu_custom_call.1} parent=75 // pred_check_branch
          %5760 = sbr.rel (%p5758) target = $region80
        $region79: #{tpu_custom_call.1} parent=75 // pred_region
          %s5761 = smul.u32 63, %s28
          %s5763 = ssub.s32 4032, 4032
          %5764 = vsyncadd %s5754, %s5763
          %s5765 = smul.addr %s5761, 64
          %s5766 = scalar_lea.hbm %s14, %s5765
          %s5767 = sshll.u32 %s5757, 4
          %s5768 = int_to_ptr.vmem [resolvable:$true] %s5767
          %5773 = dma.vmem_to_hbm [thread:$0]  %s5768, 4032, %s5766, %s5754, 64, 64, 4
        $region80: #{tpu_custom_call.1} parent=75 // pred_fallthru
          _
      $region76: #{tpu_custom_call.1} parent=5 // pred_fallthru
        _
      %p5774 = scmp.le.s32.totalorder 2, %s23
      // Predicated region
      $region81: #{tpu_custom_call.1} parent=5 // pred_check
        %p5775 = pneg %p5774
      $region82: #{tpu_custom_call.1} parent=5 // pred_check_branch
        %5777 = sbr.rel (%p5775) target = $region84
      $region83: #{tpu_custom_call.1} parent=5 // pred_region
        %s5778 = ssub.s32 %s23, 2
        // Predicated region
        $region85: #{tpu_custom_call.1} parent=83 // pred_check
          %p5779 = pneg %p351
        $region86: #{tpu_custom_call.1} parent=83 // pred_check_branch
          %5781 = sbr.rel (%p5779) target = $region88
        $region87: #{tpu_custom_call.1} parent=83 // pred_region
          %s5782 = sand.u32 %s336, 1
          %s5783 = scalar_lea.sflag [#allocation3], %s5782
          %s5784 = sand.u32 %s336, 1
          %s5785 = smul.addr %s5784, 252
          %s5786 = scalar_lea.vmem [#allocation2], %s5785
          %5787 = dma.done %s5783, 4032
        $region88: #{tpu_custom_call.1} parent=83 // pred_fallthru
          _
      $region84: #{tpu_custom_call.1} parent=5 // pred_fallthru
        _
    $region6: #{tpu_custom_call.1} parent=1 // loop_footer
      %s27 = sadd.s32 1, %s23
    $region7: #{tpu_custom_call.1} parent=1 // loop_footer_branch
      %22 = sbr.rel target = $region3
    $region8: #{tpu_custom_call.1} parent=1 // loop_exit
      _
    %5788 = vsyncpa [#allocation3], 1
    %s5789 = scalar_lea.sflag [#allocation3], 1
    %5790 = vsyncpa %s5789, 1

</llo_original>
